<compile_context>
chip_gen: v7x
topology: tpu7x:2x2x1
jax: 0.10.0
libtpu: 0.0.40
codegen_flags: <defaults>
</compile_context>

<pallas_src>
import jax
import jax.numpy as jnp
import numpy as np
from jax.experimental import pallas as pl
from jax.experimental.pallas import tpu as pltpu

H = W = 28          # spatial size fixed by Linear(784, 64): 784 = 28 * 28
C1 = 32             # conv1 output channels
WC = W * C1         # 896: lane width of the (w*32 + c) conv1 activation layout
W3 = 3 * W          # 84: 3 kh taps folded along lanes


def cnn2_fused_kernel(xw_ref, w1s_ref, b1_ref, w2c_ref, b2_ref,
                      wf1_ref, bf1_ref, wf2_ref, bf2_ref, o_ref):
    BB = xw_ref.shape[0]            # samples in this grid step
    M = 32 * BB                     # stacked rows: sample s, image row h -> 32*s + h

    # ---- conv1 + bias + ReLU: one MXU matmul (taps pre-folded into 84 lanes,
    #      H halo rows are zero by host construction).
    lhs1 = xw_ref[...].reshape(M, W3)                              # bf16 (M, 84)
    acc1 = jnp.dot(lhs1, w1s_ref[...],
                   preferred_element_type=jnp.float32)             # f32 (M, 896)

    # Rows h in [28, 32) of every 32-row sample slab are padding; force them to
    # zero so they double as the H halo for conv2.
    row = jax.lax.broadcasted_iota(jnp.int32, (M, 1), 0)
    data_row = jnp.bitwise_and(row, 31) < H                        # (M, 1) bool
    h1 = jnp.where(data_row, jnp.maximum(acc1 + b1_ref[...], 0.0), 0.0)
    h1 = h1.astype(jnp.bfloat16)                                   # (M, 896)

    # ---- conv2 + bias, then the post-flatten ReLU: one MXU matmul producing
    #      all 3 kh taps side by side (N = 84); +/-1-row taps realigned with
    #      cheap 1-row sublane shifts (zero fill at the block edges).
    p = jnp.dot(h1, w2c_ref[...], preferred_element_type=jnp.float32)  # (M, 84)
    zr = jnp.zeros((1, W), jnp.float32)
    top = jnp.concatenate([zr, p[:M - 1, 0:W]], axis=0)            # kh=0, shifted down
    mid = p[:, W:2 * W]                                            # kh=1
    bot = jnp.concatenate([p[1:, 2 * W:W3], zr], axis=0)           # kh=2, shifted up
    relu2 = jnp.maximum(top + mid + bot + b2_ref[0, 0], 0.0)       # f32 (M, 28)

    # ---- FC head, batched over the BB samples of this grid step.
    #      Row-major flatten order (h*28 + w) is preserved by contracting row
    #      blocks against the (28, 28, 64)-reshaped fc1 weight; padding rows
    #      28..31 of each slab are never read.
    r3 = relu2.reshape(BB, 32, W)
    hs = jnp.dot(r3[:, 0, :].astype(jnp.bfloat16), wf1_ref[0],
                 preferred_element_type=jnp.float32)               # (BB, 64)
    for r in range(1, H):
        hs = hs + jnp.dot(r3[:, r, :].astype(jnp.bfloat16), wf1_ref[r],
                          preferred_element_type=jnp.float32)
    hs = jnp.maximum(hs + bf1_ref[...], 0.0)                       # f32 (BB, 64)
    logits = jnp.dot(hs.astype(jnp.bfloat16), wf2_ref[...],
                     preferred_element_type=jnp.float32) + bf2_ref[...]
    o_ref[...] = logits.reshape(1, BB, 10)


def _pick_bb(B):
    # >= 2 grid steps whenever B >= 2 so v7x's two TensorCores both get work;
    # cap the per-step block so compiler-managed VMEM temporaries stay small.
    if B <= 1:
        return 1
    return max(1, min(16, B // 2))


def cnn2_forward(x_nchw, params):
    """x_nchw: (B, 1, 28, 28) float32 -> (B, 10) float32."""
    w1c, b1c, w2c, b2c, wf1, bf1, wf2, bf2 = params
    B = x_nchw.shape[0]
    x = x_nchw.reshape(B, H, W).astype(jnp.float32)    # in_channels == 1

    BB = _pick_bb(B)
    G = -(-B // BB)
    Bp = G * BB
    if Bp != B:
        x = jnp.concatenate([x, jnp.zeros((Bp - B, H, W), x.dtype)], axis=0)

    # Fold the 3 kh taps of conv1 into the lane dimension on the host:
    # xw[s, h, 28*t + w] = x[s, h + t - 1, w] (zero outside the image), and pad
    # each sample to 32 rows (rows 28..31 zero).
    zrow = jnp.zeros((Bp, 1, W), jnp.float32)
    blk0 = jnp.concatenate([zrow, x[:, :-1, :]], axis=1)          # row h-1
    blk2 = jnp.concatenate([x[:, 1:, :], zrow], axis=1)           # row h+1
    xw = jnp.concatenate([blk0, x, blk2], axis=2)                 # (Bp, 28, 84)
    xw = jnp.pad(xw, ((0, 0), (0, 4), (0, 0))).astype(jnp.bfloat16)  # (Bp, 32, 84)

    # Banded weight matrices: fold the 3 kw taps (and the W zero-padding) into
    # matmul operands with a fixed (sublane = h-row, lane = (w, c)) layout.
    w_idx = jnp.arange(W)
    kw_idx = w_idx[:, None] - w_idx[None, :] + 1                  # [w_in, w_out]
    valid = (kw_idx >= 0) & (kw_idx <= 2)
    kwc = jnp.clip(kw_idx, 0, 2)
    # conv1: (84, 896); row = 28*kh + w_in, col = 32*w_out + c_out
    w1m = jnp.where(valid[None, :, :, None], w1c[:, kwc, :], 0.0)   # (3,28,28,32)
    w1s = w1m.reshape(W3, WC).astype(jnp.bfloat16)
    b1row = jnp.tile(b1c.reshape(C1), W).reshape(1, WC)             # f32 (1, 896)
    # conv2: (896, 84); row = 32*w_in + c_in, col = 28*kh + w_out
    w2m = jnp.where(valid[None, :, :, None], w2c[:, kwc, :], 0.0)   # (3,28,28,32)
    w2cat = jnp.transpose(w2m, (1, 3, 0, 2)).reshape(WC, W3).astype(jnp.bfloat16)
    wf1_3d = wf1.reshape(H, W, 64).astype(jnp.bfloat16)             # row-blocked fc1
    wf2b = wf2.astype(jnp.bfloat16)

    out = pl.pallas_call(
        cnn2_fused_kernel,
        out_shape=jax.ShapeDtypeStruct((G, BB, 10), jnp.float32),
        grid=(G,),
        in_specs=[
            pl.BlockSpec((BB, 32, W3), lambda i: (i, 0, 0)),      # folded input block
            pl.BlockSpec((W3, WC), lambda i: (0, 0)),             # conv1 banded weights
            pl.BlockSpec((1, WC), lambda i: (0, 0)),              # conv1 bias row (f32)
            pl.BlockSpec((WC, W3), lambda i: (0, 0)),             # conv2 banded weights
            pl.BlockSpec(memory_space=pltpu.SMEM),                # conv2 scalar bias
            pl.BlockSpec((H, W, 64), lambda i: (0, 0, 0)),        # fc1 weight (28,28,64)
            pl.BlockSpec((1, 64), lambda i: (0, 0)),              # fc1 bias (f32)
            pl.BlockSpec((64, 10), lambda i: (0, 0)),             # fc2 weight
            pl.BlockSpec((1, 10), lambda i: (0, 0)),              # fc2 bias (f32)
        ],
        out_specs=pl.BlockSpec((1, BB, 10), lambda i: (i, 0, 0)),
        compiler_params=pltpu.CompilerParams(dimension_semantics=("parallel",)),
    )(xw, w1s, b1row, w2cat, b2c, wf1_3d, bf1, wf2b, bf2)
    return out.reshape(Bp, 10)[:B]


def reference_forward(x_nchw, params):
    """Pure-JAX (f32) reference for sanity checking."""
    w1c, b1c, w2c, b2c, wf1, bf1, wf2, bf2 = params
    B = x_nchw.shape[0]
    x = x_nchw.transpose(0, 2, 3, 1)                              # NHWC (B,28,28,1)
    dn = ("NHWC", "HWIO", "NHWC")
    y1 = jax.lax.conv_general_dilated(
        x, w1c[:, :, None, :], (1, 1), "SAME", dimension_numbers=dn) + b1c[0]
    y1 = jnp.maximum(y1, 0.0)
    y2 = jax.lax.conv_general_dilated(
        y1, w2c[:, :, :, None], (1, 1), "SAME", dimension_numbers=dn) + b2c[0, 0]
    flat = jnp.maximum(y2[..., 0].reshape(B, H * W), 0.0)
    h = jnp.maximum(flat @ wf1 + bf1, 0.0)
    return h @ wf2 + bf2


def init_params(key):
    ks = jax.random.split(key, 8)
    w1c = jax.random.normal(ks[0], (3, 3, 32), jnp.float32) * 0.1   # conv1 weight (in=1)
    b1c = jax.random.normal(ks[1], (1, 32), jnp.float32) * 0.1      # conv1 bias
    w2c = jax.random.normal(ks[2], (3, 3, 32), jnp.float32) * 0.1   # conv2 weight (out=1)
    b2c = jax.random.normal(ks[3], (1, 1), jnp.float32) * 0.1       # conv2 bias
    wf1 = jax.random.normal(ks[4], (784, 64), jnp.float32) * 0.05   # fc1
    bf1 = jax.random.normal(ks[5], (1, 64), jnp.float32) * 0.05
    wf2 = jax.random.normal(ks[6], (64, 10), jnp.float32) * 0.05    # fc2
    bf2 = jax.random.normal(ks[7], (1, 10), jnp.float32) * 0.05
    return (w1c, b1c, w2c, b2c, wf1, bf1, wf2, bf2)


if __name__ == "__main__":
    key = jax.random.PRNGKey(0)
    pkey, xkey = jax.random.split(key)
    params = init_params(pkey)
    # Linear(784,64) fixes the spatial size: 784 = 1 * 28 * 28 -> B=2, C=1, H=W=28.
    x = jax.random.normal(xkey, (2, 1, 28, 28), jnp.float32)

    fwd = jax.jit(cnn2_forward)
    out = jax.block_until_ready(fwd(x, params))
    ref = jax.block_until_ready(reference_forward(x, params))
    assert out.shape == (2, 10) and out.dtype == jnp.float32
    # bf16 MXU operands with f32 accumulation vs. an all-f32 reference.
    np.testing.assert_allclose(np.asarray(out), np.asarray(ref), rtol=2e-2, atol=2e-2)
    print("KERNEL_OK")
</pallas_src>

<mosaic_0001>
module attributes {stable_mosaic.version = 11 : i64} {
  func.func @cnn2_fused_kernel(%arg0: i32, %arg1: memref<1x32x84xbf16, #tpu.memory_space<vmem>>, %arg2: memref<84x896xbf16, #tpu.memory_space<vmem>>, %arg3: memref<1x896xf32, #tpu.memory_space<vmem>>, %arg4: memref<896x84xbf16, #tpu.memory_space<vmem>>, %arg5: memref<1x1xf32, #tpu.memory_space<smem>>, %arg6: memref<28x28x64xbf16, #tpu.memory_space<vmem>>, %arg7: memref<1x64xf32, #tpu.memory_space<vmem>>, %arg8: memref<64x10xbf16, #tpu.memory_space<vmem>>, %arg9: memref<1x10xf32, #tpu.memory_space<vmem>>, %arg10: memref<1x1x10xf32, #tpu.memory_space<vmem>>) attributes {dimension_semantics = [#tpu.dimension_semantics<parallel>], iteration_bounds = array<i64: 2>, scalar_prefetch = 0 : i64, scratch_operands = 0 : i64, tpu.core_type = #tpu.core_type<tc>, window_params = [{transform_indices = @transform_0, window_bounds = array<i64: 1, 32, 84>}, {pipeline_mode = #tpu.pipeline_mode<synchronous>, transform_indices = @transform_1, window_bounds = array<i64: 84, 896>}, {pipeline_mode = #tpu.pipeline_mode<synchronous>, transform_indices = @transform_2, window_bounds = array<i64: 1, 896>}, {pipeline_mode = #tpu.pipeline_mode<synchronous>, transform_indices = @transform_3, window_bounds = array<i64: 896, 84>}, {transform_indices = @transform_4, window_bounds = array<i64: 1, 1>}, {pipeline_mode = #tpu.pipeline_mode<synchronous>, transform_indices = @transform_5, window_bounds = array<i64: 28, 28, 64>}, {pipeline_mode = #tpu.pipeline_mode<synchronous>, transform_indices = @transform_6, window_bounds = array<i64: 1, 64>}, {pipeline_mode = #tpu.pipeline_mode<synchronous>, transform_indices = @transform_7, window_bounds = array<i64: 64, 10>}, {pipeline_mode = #tpu.pipeline_mode<synchronous>, transform_indices = @transform_8, window_bounds = array<i64: 1, 10>}, {transform_indices = @transform_9, window_bounds = array<i64: 1, 1, 10>}]} {
    %c0 = arith.constant 0 : index
    %c0_0 = arith.constant 0 : index
    %c0_1 = arith.constant 0 : index
    %0 = vector.load %arg1[%c0, %c0_0, %c0_1] : memref<1x32x84xbf16, #tpu.memory_space<vmem>>, vector<1x32x84xbf16>
    %1 = vector.shape_cast %0 : vector<1x32x84xbf16> to vector<32x84xbf16>
    %c0_2 = arith.constant 0 : index
    %c0_3 = arith.constant 0 : index
    %2 = vector.load %arg2[%c0_2, %c0_3] : memref<84x896xbf16, #tpu.memory_space<vmem>>, vector<84x896xbf16>
    %cst = arith.constant dense<0.000000e+00> : vector<32x896xf32>
    %3 = tpu.matmul %1, %2, %cst {dimension_numbers = #tpu.dot_dimension_numbers<[1], [0], [0], [1], [0, 0, 1, 1], [], []>} : vector<32x84xbf16>, vector<84x896xbf16>, vector<32x896xf32> -> vector<32x896xf32>
    %4 = tpu.iota {dimensions = array<i32: 0>} : vector<32x1xi32>
    %c31_i32 = arith.constant 31 : i32
    %5 = vector.broadcast %c31_i32 : i32 to vector<32x1xi32>
    %6 = arith.andi %4, %5 : vector<32x1xi32>
    %c28_i32 = arith.constant 28 : i32
    %7 = vector.broadcast %c28_i32 : i32 to vector<32x1xi32>
    %8 = arith.cmpi slt, %6, %7 : vector<32x1xi32>
    %c0_4 = arith.constant 0 : index
    %c0_5 = arith.constant 0 : index
    %9 = vector.load %arg3[%c0_4, %c0_5] : memref<1x896xf32, #tpu.memory_space<vmem>>, vector<1x896xf32>
    %10 = vector.broadcast %9 : vector<1x896xf32> to vector<32x896xf32>
    %11 = arith.addf %3, %10 : vector<32x896xf32>
    %cst_6 = arith.constant 0.000000e+00 : f32
    %12 = vector.broadcast %cst_6 : f32 to vector<32x896xf32>
    %13 = arith.maximumf %11, %12 : vector<32x896xf32>
    %cst_7 = arith.constant 0.000000e+00 : f32
    %14 = vector.shape_cast %8 : vector<32x1xi1> to vector<32x1xi1>
    %15 = vector.broadcast %14 : vector<32x1xi1> to vector<32x896xi1>
    %16 = vector.broadcast %cst_7 : f32 to vector<32x896xf32>
    %17 = arith.select %15, %13, %16 : vector<32x896xi1>, vector<32x896xf32>
    %18 = arith.truncf %17 : vector<32x896xf32> to vector<32x896xbf16>
    %c0_8 = arith.constant 0 : index
    %c0_9 = arith.constant 0 : index
    %19 = vector.load %arg4[%c0_8, %c0_9] : memref<896x84xbf16, #tpu.memory_space<vmem>>, vector<896x84xbf16>
    %cst_10 = arith.constant dense<0.000000e+00> : vector<32x84xf32>
    %20 = tpu.matmul %18, %19, %cst_10 {dimension_numbers = #tpu.dot_dimension_numbers<[1], [0], [0], [1], [0, 0, 1, 1], [], []>} : vector<32x896xbf16>, vector<896x84xbf16>, vector<32x84xf32> -> vector<32x84xf32>
    %cst_11 = arith.constant 0.000000e+00 : f32
    %21 = vector.broadcast %cst_11 : f32 to vector<1x28xf32>
    %22 = vector.extract_strided_slice %20 {offsets = [0, 0], sizes = [31, 28], strides = [1, 1]} : vector<32x84xf32> to vector<31x28xf32>
    %23 = tpu.concatenate %21, %22 in 0 : vector<1x28xf32>, vector<31x28xf32> -> vector<32x28xf32>
    %24 = vector.extract_strided_slice %20 {offsets = [0, 28], sizes = [32, 28], strides = [1, 1]} : vector<32x84xf32> to vector<32x28xf32>
    %25 = vector.extract_strided_slice %20 {offsets = [1, 56], sizes = [31, 28], strides = [1, 1]} : vector<32x84xf32> to vector<31x28xf32>
    %26 = tpu.concatenate %25, %21 in 0 : vector<31x28xf32>, vector<1x28xf32> -> vector<32x28xf32>
    %27 = arith.addf %23, %24 : vector<32x28xf32>
    %28 = arith.addf %27, %26 : vector<32x28xf32>
    %c0_12 = arith.constant 0 : index
    %c0_13 = arith.constant 0 : index
    %29 = memref.load %arg5[%c0_12, %c0_13] : memref<1x1xf32, #tpu.memory_space<smem>>
    %30 = vector.broadcast %29 : f32 to vector<32x28xf32>
    %31 = arith.addf %28, %30 : vector<32x28xf32>
    %cst_14 = arith.constant 0.000000e+00 : f32
    %32 = vector.broadcast %cst_14 : f32 to vector<32x28xf32>
    %33 = arith.maximumf %31, %32 : vector<32x28xf32>
    %34 = vector.shape_cast %33 : vector<32x28xf32> to vector<1x32x28xf32>
    %35 = vector.extract_strided_slice %34 {offsets = [0, 0, 0], sizes = [1, 1, 28], strides = [1, 1, 1]} : vector<1x32x28xf32> to vector<1x1x28xf32>
    %36 = vector.shape_cast %35 : vector<1x1x28xf32> to vector<1x28xf32>
    %37 = arith.truncf %36 : vector<1x28xf32> to vector<1x28xbf16>
    %c0_15 = arith.constant 0 : index
    %c0_16 = arith.constant 0 : index
    %c0_17 = arith.constant 0 : index
    %38 = vector.load %arg6[%c0_15, %c0_16, %c0_17] : memref<28x28x64xbf16, #tpu.memory_space<vmem>>, vector<1x28x64xbf16>
    %39 = vector.shape_cast %38 : vector<1x28x64xbf16> to vector<28x64xbf16>
    %cst_18 = arith.constant dense<0.000000e+00> : vector<1x64xf32>
    %40 = tpu.matmul %37, %39, %cst_18 {dimension_numbers = #tpu.dot_dimension_numbers<[1], [0], [0], [1], [0, 0, 1, 1], [], []>} : vector<1x28xbf16>, vector<28x64xbf16>, vector<1x64xf32> -> vector<1x64xf32>
    %41 = vector.extract_strided_slice %34 {offsets = [0, 1, 0], sizes = [1, 1, 28], strides = [1, 1, 1]} : vector<1x32x28xf32> to vector<1x1x28xf32>
    %42 = vector.shape_cast %41 : vector<1x1x28xf32> to vector<1x28xf32>
    %43 = arith.truncf %42 : vector<1x28xf32> to vector<1x28xbf16>
    %c1 = arith.constant 1 : index
    %c0_19 = arith.constant 0 : index
    %c0_20 = arith.constant 0 : index
    %44 = vector.load %arg6[%c1, %c0_19, %c0_20] : memref<28x28x64xbf16, #tpu.memory_space<vmem>>, vector<1x28x64xbf16>
    %45 = vector.shape_cast %44 : vector<1x28x64xbf16> to vector<28x64xbf16>
    %cst_21 = arith.constant dense<0.000000e+00> : vector<1x64xf32>
    %46 = tpu.matmul %43, %45, %cst_21 {dimension_numbers = #tpu.dot_dimension_numbers<[1], [0], [0], [1], [0, 0, 1, 1], [], []>} : vector<1x28xbf16>, vector<28x64xbf16>, vector<1x64xf32> -> vector<1x64xf32>
    %47 = arith.addf %40, %46 : vector<1x64xf32>
    %48 = vector.extract_strided_slice %34 {offsets = [0, 2, 0], sizes = [1, 1, 28], strides = [1, 1, 1]} : vector<1x32x28xf32> to vector<1x1x28xf32>
    %49 = vector.shape_cast %48 : vector<1x1x28xf32> to vector<1x28xf32>
    %50 = arith.truncf %49 : vector<1x28xf32> to vector<1x28xbf16>
    %c2 = arith.constant 2 : index
    %c0_22 = arith.constant 0 : index
    %c0_23 = arith.constant 0 : index
    %51 = vector.load %arg6[%c2, %c0_22, %c0_23] : memref<28x28x64xbf16, #tpu.memory_space<vmem>>, vector<1x28x64xbf16>
    %52 = vector.shape_cast %51 : vector<1x28x64xbf16> to vector<28x64xbf16>
    %cst_24 = arith.constant dense<0.000000e+00> : vector<1x64xf32>
    %53 = tpu.matmul %50, %52, %cst_24 {dimension_numbers = #tpu.dot_dimension_numbers<[1], [0], [0], [1], [0, 0, 1, 1], [], []>} : vector<1x28xbf16>, vector<28x64xbf16>, vector<1x64xf32> -> vector<1x64xf32>
    %54 = arith.addf %47, %53 : vector<1x64xf32>
    %55 = vector.extract_strided_slice %34 {offsets = [0, 3, 0], sizes = [1, 1, 28], strides = [1, 1, 1]} : vector<1x32x28xf32> to vector<1x1x28xf32>
    %56 = vector.shape_cast %55 : vector<1x1x28xf32> to vector<1x28xf32>
    %57 = arith.truncf %56 : vector<1x28xf32> to vector<1x28xbf16>
    %c3 = arith.constant 3 : index
    %c0_25 = arith.constant 0 : index
    %c0_26 = arith.constant 0 : index
    %58 = vector.load %arg6[%c3, %c0_25, %c0_26] : memref<28x28x64xbf16, #tpu.memory_space<vmem>>, vector<1x28x64xbf16>
    %59 = vector.shape_cast %58 : vector<1x28x64xbf16> to vector<28x64xbf16>
    %cst_27 = arith.constant dense<0.000000e+00> : vector<1x64xf32>
    %60 = tpu.matmul %57, %59, %cst_27 {dimension_numbers = #tpu.dot_dimension_numbers<[1], [0], [0], [1], [0, 0, 1, 1], [], []>} : vector<1x28xbf16>, vector<28x64xbf16>, vector<1x64xf32> -> vector<1x64xf32>
    %61 = arith.addf %54, %60 : vector<1x64xf32>
    %62 = vector.extract_strided_slice %34 {offsets = [0, 4, 0], sizes = [1, 1, 28], strides = [1, 1, 1]} : vector<1x32x28xf32> to vector<1x1x28xf32>
    %63 = vector.shape_cast %62 : vector<1x1x28xf32> to vector<1x28xf32>
    %64 = arith.truncf %63 : vector<1x28xf32> to vector<1x28xbf16>
    %c4 = arith.constant 4 : index
    %c0_28 = arith.constant 0 : index
    %c0_29 = arith.constant 0 : index
    %65 = vector.load %arg6[%c4, %c0_28, %c0_29] : memref<28x28x64xbf16, #tpu.memory_space<vmem>>, vector<1x28x64xbf16>
    %66 = vector.shape_cast %65 : vector<1x28x64xbf16> to vector<28x64xbf16>
    %cst_30 = arith.constant dense<0.000000e+00> : vector<1x64xf32>
    %67 = tpu.matmul %64, %66, %cst_30 {dimension_numbers = #tpu.dot_dimension_numbers<[1], [0], [0], [1], [0, 0, 1, 1], [], []>} : vector<1x28xbf16>, vector<28x64xbf16>, vector<1x64xf32> -> vector<1x64xf32>
    %68 = arith.addf %61, %67 : vector<1x64xf32>
    %69 = vector.extract_strided_slice %34 {offsets = [0, 5, 0], sizes = [1, 1, 28], strides = [1, 1, 1]} : vector<1x32x28xf32> to vector<1x1x28xf32>
    %70 = vector.shape_cast %69 : vector<1x1x28xf32> to vector<1x28xf32>
    %71 = arith.truncf %70 : vector<1x28xf32> to vector<1x28xbf16>
    %c5 = arith.constant 5 : index
    %c0_31 = arith.constant 0 : index
    %c0_32 = arith.constant 0 : index
    %72 = vector.load %arg6[%c5, %c0_31, %c0_32] : memref<28x28x64xbf16, #tpu.memory_space<vmem>>, vector<1x28x64xbf16>
    %73 = vector.shape_cast %72 : vector<1x28x64xbf16> to vector<28x64xbf16>
    %cst_33 = arith.constant dense<0.000000e+00> : vector<1x64xf32>
    %74 = tpu.matmul %71, %73, %cst_33 {dimension_numbers = #tpu.dot_dimension_numbers<[1], [0], [0], [1], [0, 0, 1, 1], [], []>} : vector<1x28xbf16>, vector<28x64xbf16>, vector<1x64xf32> -> vector<1x64xf32>
    %75 = arith.addf %68, %74 : vector<1x64xf32>
    %76 = vector.extract_strided_slice %34 {offsets = [0, 6, 0], sizes = [1, 1, 28], strides = [1, 1, 1]} : vector<1x32x28xf32> to vector<1x1x28xf32>
    %77 = vector.shape_cast %76 : vector<1x1x28xf32> to vector<1x28xf32>
    %78 = arith.truncf %77 : vector<1x28xf32> to vector<1x28xbf16>
    %c6 = arith.constant 6 : index
    %c0_34 = arith.constant 0 : index
    %c0_35 = arith.constant 0 : index
    %79 = vector.load %arg6[%c6, %c0_34, %c0_35] : memref<28x28x64xbf16, #tpu.memory_space<vmem>>, vector<1x28x64xbf16>
    %80 = vector.shape_cast %79 : vector<1x28x64xbf16> to vector<28x64xbf16>
    %cst_36 = arith.constant dense<0.000000e+00> : vector<1x64xf32>
    %81 = tpu.matmul %78, %80, %cst_36 {dimension_numbers = #tpu.dot_dimension_numbers<[1], [0], [0], [1], [0, 0, 1, 1], [], []>} : vector<1x28xbf16>, vector<28x64xbf16>, vector<1x64xf32> -> vector<1x64xf32>
    %82 = arith.addf %75, %81 : vector<1x64xf32>
    %83 = vector.extract_strided_slice %34 {offsets = [0, 7, 0], sizes = [1, 1, 28], strides = [1, 1, 1]} : vector<1x32x28xf32> to vector<1x1x28xf32>
    %84 = vector.shape_cast %83 : vector<1x1x28xf32> to vector<1x28xf32>
    %85 = arith.truncf %84 : vector<1x28xf32> to vector<1x28xbf16>
    %c7 = arith.constant 7 : index
    %c0_37 = arith.constant 0 : index
    %c0_38 = arith.constant 0 : index
    %86 = vector.load %arg6[%c7, %c0_37, %c0_38] : memref<28x28x64xbf16, #tpu.memory_space<vmem>>, vector<1x28x64xbf16>
    %87 = vector.shape_cast %86 : vector<1x28x64xbf16> to vector<28x64xbf16>
    %cst_39 = arith.constant dense<0.000000e+00> : vector<1x64xf32>
    %88 = tpu.matmul %85, %87, %cst_39 {dimension_numbers = #tpu.dot_dimension_numbers<[1], [0], [0], [1], [0, 0, 1, 1], [], []>} : vector<1x28xbf16>, vector<28x64xbf16>, vector<1x64xf32> -> vector<1x64xf32>
    %89 = arith.addf %82, %88 : vector<1x64xf32>
    %90 = vector.extract_strided_slice %34 {offsets = [0, 8, 0], sizes = [1, 1, 28], strides = [1, 1, 1]} : vector<1x32x28xf32> to vector<1x1x28xf32>
    %91 = vector.shape_cast %90 : vector<1x1x28xf32> to vector<1x28xf32>
    %92 = arith.truncf %91 : vector<1x28xf32> to vector<1x28xbf16>
    %c8 = arith.constant 8 : index
    %c0_40 = arith.constant 0 : index
    %c0_41 = arith.constant 0 : index
    %93 = vector.load %arg6[%c8, %c0_40, %c0_41] : memref<28x28x64xbf16, #tpu.memory_space<vmem>>, vector<1x28x64xbf16>
    %94 = vector.shape_cast %93 : vector<1x28x64xbf16> to vector<28x64xbf16>
    %cst_42 = arith.constant dense<0.000000e+00> : vector<1x64xf32>
    %95 = tpu.matmul %92, %94, %cst_42 {dimension_numbers = #tpu.dot_dimension_numbers<[1], [0], [0], [1], [0, 0, 1, 1], [], []>} : vector<1x28xbf16>, vector<28x64xbf16>, vector<1x64xf32> -> vector<1x64xf32>
    %96 = arith.addf %89, %95 : vector<1x64xf32>
    %97 = vector.extract_strided_slice %34 {offsets = [0, 9, 0], sizes = [1, 1, 28], strides = [1, 1, 1]} : vector<1x32x28xf32> to vector<1x1x28xf32>
    %98 = vector.shape_cast %97 : vector<1x1x28xf32> to vector<1x28xf32>
    %99 = arith.truncf %98 : vector<1x28xf32> to vector<1x28xbf16>
    %c9 = arith.constant 9 : index
    %c0_43 = arith.constant 0 : index
    %c0_44 = arith.constant 0 : index
    %100 = vector.load %arg6[%c9, %c0_43, %c0_44] : memref<28x28x64xbf16, #tpu.memory_space<vmem>>, vector<1x28x64xbf16>
    %101 = vector.shape_cast %100 : vector<1x28x64xbf16> to vector<28x64xbf16>
    %cst_45 = arith.constant dense<0.000000e+00> : vector<1x64xf32>
    %102 = tpu.matmul %99, %101, %cst_45 {dimension_numbers = #tpu.dot_dimension_numbers<[1], [0], [0], [1], [0, 0, 1, 1], [], []>} : vector<1x28xbf16>, vector<28x64xbf16>, vector<1x64xf32> -> vector<1x64xf32>
    %103 = arith.addf %96, %102 : vector<1x64xf32>
    %104 = vector.extract_strided_slice %34 {offsets = [0, 10, 0], sizes = [1, 1, 28], strides = [1, 1, 1]} : vector<1x32x28xf32> to vector<1x1x28xf32>
    %105 = vector.shape_cast %104 : vector<1x1x28xf32> to vector<1x28xf32>
    %106 = arith.truncf %105 : vector<1x28xf32> to vector<1x28xbf16>
    %c10 = arith.constant 10 : index
    %c0_46 = arith.constant 0 : index
    %c0_47 = arith.constant 0 : index
    %107 = vector.load %arg6[%c10, %c0_46, %c0_47] : memref<28x28x64xbf16, #tpu.memory_space<vmem>>, vector<1x28x64xbf16>
    %108 = vector.shape_cast %107 : vector<1x28x64xbf16> to vector<28x64xbf16>
    %cst_48 = arith.constant dense<0.000000e+00> : vector<1x64xf32>
    %109 = tpu.matmul %106, %108, %cst_48 {dimension_numbers = #tpu.dot_dimension_numbers<[1], [0], [0], [1], [0, 0, 1, 1], [], []>} : vector<1x28xbf16>, vector<28x64xbf16>, vector<1x64xf32> -> vector<1x64xf32>
    %110 = arith.addf %103, %109 : vector<1x64xf32>
    %111 = vector.extract_strided_slice %34 {offsets = [0, 11, 0], sizes = [1, 1, 28], strides = [1, 1, 1]} : vector<1x32x28xf32> to vector<1x1x28xf32>
    %112 = vector.shape_cast %111 : vector<1x1x28xf32> to vector<1x28xf32>
    %113 = arith.truncf %112 : vector<1x28xf32> to vector<1x28xbf16>
    %c11 = arith.constant 11 : index
    %c0_49 = arith.constant 0 : index
    %c0_50 = arith.constant 0 : index
    %114 = vector.load %arg6[%c11, %c0_49, %c0_50] : memref<28x28x64xbf16, #tpu.memory_space<vmem>>, vector<1x28x64xbf16>
    %115 = vector.shape_cast %114 : vector<1x28x64xbf16> to vector<28x64xbf16>
    %cst_51 = arith.constant dense<0.000000e+00> : vector<1x64xf32>
    %116 = tpu.matmul %113, %115, %cst_51 {dimension_numbers = #tpu.dot_dimension_numbers<[1], [0], [0], [1], [0, 0, 1, 1], [], []>} : vector<1x28xbf16>, vector<28x64xbf16>, vector<1x64xf32> -> vector<1x64xf32>
    %117 = arith.addf %110, %116 : vector<1x64xf32>
    %118 = vector.extract_strided_slice %34 {offsets = [0, 12, 0], sizes = [1, 1, 28], strides = [1, 1, 1]} : vector<1x32x28xf32> to vector<1x1x28xf32>
    %119 = vector.shape_cast %118 : vector<1x1x28xf32> to vector<1x28xf32>
    %120 = arith.truncf %119 : vector<1x28xf32> to vector<1x28xbf16>
    %c12 = arith.constant 12 : index
    %c0_52 = arith.constant 0 : index
    %c0_53 = arith.constant 0 : index
    %121 = vector.load %arg6[%c12, %c0_52, %c0_53] : memref<28x28x64xbf16, #tpu.memory_space<vmem>>, vector<1x28x64xbf16>
    %122 = vector.shape_cast %121 : vector<1x28x64xbf16> to vector<28x64xbf16>
    %cst_54 = arith.constant dense<0.000000e+00> : vector<1x64xf32>
    %123 = tpu.matmul %120, %122, %cst_54 {dimension_numbers = #tpu.dot_dimension_numbers<[1], [0], [0], [1], [0, 0, 1, 1], [], []>} : vector<1x28xbf16>, vector<28x64xbf16>, vector<1x64xf32> -> vector<1x64xf32>
    %124 = arith.addf %117, %123 : vector<1x64xf32>
    %125 = vector.extract_strided_slice %34 {offsets = [0, 13, 0], sizes = [1, 1, 28], strides = [1, 1, 1]} : vector<1x32x28xf32> to vector<1x1x28xf32>
    %126 = vector.shape_cast %125 : vector<1x1x28xf32> to vector<1x28xf32>
    %127 = arith.truncf %126 : vector<1x28xf32> to vector<1x28xbf16>
    %c13 = arith.constant 13 : index
    %c0_55 = arith.constant 0 : index
    %c0_56 = arith.constant 0 : index
    %128 = vector.load %arg6[%c13, %c0_55, %c0_56] : memref<28x28x64xbf16, #tpu.memory_space<vmem>>, vector<1x28x64xbf16>
    %129 = vector.shape_cast %128 : vector<1x28x64xbf16> to vector<28x64xbf16>
    %cst_57 = arith.constant dense<0.000000e+00> : vector<1x64xf32>
    %130 = tpu.matmul %127, %129, %cst_57 {dimension_numbers = #tpu.dot_dimension_numbers<[1], [0], [0], [1], [0, 0, 1, 1], [], []>} : vector<1x28xbf16>, vector<28x64xbf16>, vector<1x64xf32> -> vector<1x64xf32>
    %131 = arith.addf %124, %130 : vector<1x64xf32>
    %132 = vector.extract_strided_slice %34 {offsets = [0, 14, 0], sizes = [1, 1, 28], strides = [1, 1, 1]} : vector<1x32x28xf32> to vector<1x1x28xf32>
    %133 = vector.shape_cast %132 : vector<1x1x28xf32> to vector<1x28xf32>
    %134 = arith.truncf %133 : vector<1x28xf32> to vector<1x28xbf16>
    %c14 = arith.constant 14 : index
    %c0_58 = arith.constant 0 : index
    %c0_59 = arith.constant 0 : index
    %135 = vector.load %arg6[%c14, %c0_58, %c0_59] : memref<28x28x64xbf16, #tpu.memory_space<vmem>>, vector<1x28x64xbf16>
    %136 = vector.shape_cast %135 : vector<1x28x64xbf16> to vector<28x64xbf16>
    %cst_60 = arith.constant dense<0.000000e+00> : vector<1x64xf32>
    %137 = tpu.matmul %134, %136, %cst_60 {dimension_numbers = #tpu.dot_dimension_numbers<[1], [0], [0], [1], [0, 0, 1, 1], [], []>} : vector<1x28xbf16>, vector<28x64xbf16>, vector<1x64xf32> -> vector<1x64xf32>
    %138 = arith.addf %131, %137 : vector<1x64xf32>
    %139 = vector.extract_strided_slice %34 {offsets = [0, 15, 0], sizes = [1, 1, 28], strides = [1, 1, 1]} : vector<1x32x28xf32> to vector<1x1x28xf32>
    %140 = vector.shape_cast %139 : vector<1x1x28xf32> to vector<1x28xf32>
    %141 = arith.truncf %140 : vector<1x28xf32> to vector<1x28xbf16>
    %c15 = arith.constant 15 : index
    %c0_61 = arith.constant 0 : index
    %c0_62 = arith.constant 0 : index
    %142 = vector.load %arg6[%c15, %c0_61, %c0_62] : memref<28x28x64xbf16, #tpu.memory_space<vmem>>, vector<1x28x64xbf16>
    %143 = vector.shape_cast %142 : vector<1x28x64xbf16> to vector<28x64xbf16>
    %cst_63 = arith.constant dense<0.000000e+00> : vector<1x64xf32>
    %144 = tpu.matmul %141, %143, %cst_63 {dimension_numbers = #tpu.dot_dimension_numbers<[1], [0], [0], [1], [0, 0, 1, 1], [], []>} : vector<1x28xbf16>, vector<28x64xbf16>, vector<1x64xf32> -> vector<1x64xf32>
    %145 = arith.addf %138, %144 : vector<1x64xf32>
    %146 = vector.extract_strided_slice %34 {offsets = [0, 16, 0], sizes = [1, 1, 28], strides = [1, 1, 1]} : vector<1x32x28xf32> to vector<1x1x28xf32>
    %147 = vector.shape_cast %146 : vector<1x1x28xf32> to vector<1x28xf32>
    %148 = arith.truncf %147 : vector<1x28xf32> to vector<1x28xbf16>
    %c16 = arith.constant 16 : index
    %c0_64 = arith.constant 0 : index
    %c0_65 = arith.constant 0 : index
    %149 = vector.load %arg6[%c16, %c0_64, %c0_65] : memref<28x28x64xbf16, #tpu.memory_space<vmem>>, vector<1x28x64xbf16>
    %150 = vector.shape_cast %149 : vector<1x28x64xbf16> to vector<28x64xbf16>
    %cst_66 = arith.constant dense<0.000000e+00> : vector<1x64xf32>
    %151 = tpu.matmul %148, %150, %cst_66 {dimension_numbers = #tpu.dot_dimension_numbers<[1], [0], [0], [1], [0, 0, 1, 1], [], []>} : vector<1x28xbf16>, vector<28x64xbf16>, vector<1x64xf32> -> vector<1x64xf32>
    %152 = arith.addf %145, %151 : vector<1x64xf32>
    %153 = vector.extract_strided_slice %34 {offsets = [0, 17, 0], sizes = [1, 1, 28], strides = [1, 1, 1]} : vector<1x32x28xf32> to vector<1x1x28xf32>
    %154 = vector.shape_cast %153 : vector<1x1x28xf32> to vector<1x28xf32>
    %155 = arith.truncf %154 : vector<1x28xf32> to vector<1x28xbf16>
    %c17 = arith.constant 17 : index
    %c0_67 = arith.constant 0 : index
    %c0_68 = arith.constant 0 : index
    %156 = vector.load %arg6[%c17, %c0_67, %c0_68] : memref<28x28x64xbf16, #tpu.memory_space<vmem>>, vector<1x28x64xbf16>
    %157 = vector.shape_cast %156 : vector<1x28x64xbf16> to vector<28x64xbf16>
    %cst_69 = arith.constant dense<0.000000e+00> : vector<1x64xf32>
    %158 = tpu.matmul %155, %157, %cst_69 {dimension_numbers = #tpu.dot_dimension_numbers<[1], [0], [0], [1], [0, 0, 1, 1], [], []>} : vector<1x28xbf16>, vector<28x64xbf16>, vector<1x64xf32> -> vector<1x64xf32>
    %159 = arith.addf %152, %158 : vector<1x64xf32>
    %160 = vector.extract_strided_slice %34 {offsets = [0, 18, 0], sizes = [1, 1, 28], strides = [1, 1, 1]} : vector<1x32x28xf32> to vector<1x1x28xf32>
    %161 = vector.shape_cast %160 : vector<1x1x28xf32> to vector<1x28xf32>
    %162 = arith.truncf %161 : vector<1x28xf32> to vector<1x28xbf16>
    %c18 = arith.constant 18 : index
    %c0_70 = arith.constant 0 : index
    %c0_71 = arith.constant 0 : index
    %163 = vector.load %arg6[%c18, %c0_70, %c0_71] : memref<28x28x64xbf16, #tpu.memory_space<vmem>>, vector<1x28x64xbf16>
    %164 = vector.shape_cast %163 : vector<1x28x64xbf16> to vector<28x64xbf16>
    %cst_72 = arith.constant dense<0.000000e+00> : vector<1x64xf32>
    %165 = tpu.matmul %162, %164, %cst_72 {dimension_numbers = #tpu.dot_dimension_numbers<[1], [0], [0], [1], [0, 0, 1, 1], [], []>} : vector<1x28xbf16>, vector<28x64xbf16>, vector<1x64xf32> -> vector<1x64xf32>
    %166 = arith.addf %159, %165 : vector<1x64xf32>
    %167 = vector.extract_strided_slice %34 {offsets = [0, 19, 0], sizes = [1, 1, 28], strides = [1, 1, 1]} : vector<1x32x28xf32> to vector<1x1x28xf32>
    %168 = vector.shape_cast %167 : vector<1x1x28xf32> to vector<1x28xf32>
    %169 = arith.truncf %168 : vector<1x28xf32> to vector<1x28xbf16>
    %c19 = arith.constant 19 : index
    %c0_73 = arith.constant 0 : index
    %c0_74 = arith.constant 0 : index
    %170 = vector.load %arg6[%c19, %c0_73, %c0_74] : memref<28x28x64xbf16, #tpu.memory_space<vmem>>, vector<1x28x64xbf16>
    %171 = vector.shape_cast %170 : vector<1x28x64xbf16> to vector<28x64xbf16>
    %cst_75 = arith.constant dense<0.000000e+00> : vector<1x64xf32>
    %172 = tpu.matmul %169, %171, %cst_75 {dimension_numbers = #tpu.dot_dimension_numbers<[1], [0], [0], [1], [0, 0, 1, 1], [], []>} : vector<1x28xbf16>, vector<28x64xbf16>, vector<1x64xf32> -> vector<1x64xf32>
    %173 = arith.addf %166, %172 : vector<1x64xf32>
    %174 = vector.extract_strided_slice %34 {offsets = [0, 20, 0], sizes = [1, 1, 28], strides = [1, 1, 1]} : vector<1x32x28xf32> to vector<1x1x28xf32>
    %175 = vector.shape_cast %174 : vector<1x1x28xf32> to vector<1x28xf32>
    %176 = arith.truncf %175 : vector<1x28xf32> to vector<1x28xbf16>
    %c20 = arith.constant 20 : index
    %c0_76 = arith.constant 0 : index
    %c0_77 = arith.constant 0 : index
    %177 = vector.load %arg6[%c20, %c0_76, %c0_77] : memref<28x28x64xbf16, #tpu.memory_space<vmem>>, vector<1x28x64xbf16>
    %178 = vector.shape_cast %177 : vector<1x28x64xbf16> to vector<28x64xbf16>
    %cst_78 = arith.constant dense<0.000000e+00> : vector<1x64xf32>
    %179 = tpu.matmul %176, %178, %cst_78 {dimension_numbers = #tpu.dot_dimension_numbers<[1], [0], [0], [1], [0, 0, 1, 1], [], []>} : vector<1x28xbf16>, vector<28x64xbf16>, vector<1x64xf32> -> vector<1x64xf32>
    %180 = arith.addf %173, %179 : vector<1x64xf32>
    %181 = vector.extract_strided_slice %34 {offsets = [0, 21, 0], sizes = [1, 1, 28], strides = [1, 1, 1]} : vector<1x32x28xf32> to vector<1x1x28xf32>
    %182 = vector.shape_cast %181 : vector<1x1x28xf32> to vector<1x28xf32>
    %183 = arith.truncf %182 : vector<1x28xf32> to vector<1x28xbf16>
    %c21 = arith.constant 21 : index
    %c0_79 = arith.constant 0 : index
    %c0_80 = arith.constant 0 : index
    %184 = vector.load %arg6[%c21, %c0_79, %c0_80] : memref<28x28x64xbf16, #tpu.memory_space<vmem>>, vector<1x28x64xbf16>
    %185 = vector.shape_cast %184 : vector<1x28x64xbf16> to vector<28x64xbf16>
    %cst_81 = arith.constant dense<0.000000e+00> : vector<1x64xf32>
    %186 = tpu.matmul %183, %185, %cst_81 {dimension_numbers = #tpu.dot_dimension_numbers<[1], [0], [0], [1], [0, 0, 1, 1], [], []>} : vector<1x28xbf16>, vector<28x64xbf16>, vector<1x64xf32> -> vector<1x64xf32>
    %187 = arith.addf %180, %186 : vector<1x64xf32>
    %188 = vector.extract_strided_slice %34 {offsets = [0, 22, 0], sizes = [1, 1, 28], strides = [1, 1, 1]} : vector<1x32x28xf32> to vector<1x1x28xf32>
    %189 = vector.shape_cast %188 : vector<1x1x28xf32> to vector<1x28xf32>
    %190 = arith.truncf %189 : vector<1x28xf32> to vector<1x28xbf16>
    %c22 = arith.constant 22 : index
    %c0_82 = arith.constant 0 : index
    %c0_83 = arith.constant 0 : index
    %191 = vector.load %arg6[%c22, %c0_82, %c0_83] : memref<28x28x64xbf16, #tpu.memory_space<vmem>>, vector<1x28x64xbf16>
    %192 = vector.shape_cast %191 : vector<1x28x64xbf16> to vector<28x64xbf16>
    %cst_84 = arith.constant dense<0.000000e+00> : vector<1x64xf32>
    %193 = tpu.matmul %190, %192, %cst_84 {dimension_numbers = #tpu.dot_dimension_numbers<[1], [0], [0], [1], [0, 0, 1, 1], [], []>} : vector<1x28xbf16>, vector<28x64xbf16>, vector<1x64xf32> -> vector<1x64xf32>
    %194 = arith.addf %187, %193 : vector<1x64xf32>
    %195 = vector.extract_strided_slice %34 {offsets = [0, 23, 0], sizes = [1, 1, 28], strides = [1, 1, 1]} : vector<1x32x28xf32> to vector<1x1x28xf32>
    %196 = vector.shape_cast %195 : vector<1x1x28xf32> to vector<1x28xf32>
    %197 = arith.truncf %196 : vector<1x28xf32> to vector<1x28xbf16>
    %c23 = arith.constant 23 : index
    %c0_85 = arith.constant 0 : index
    %c0_86 = arith.constant 0 : index
    %198 = vector.load %arg6[%c23, %c0_85, %c0_86] : memref<28x28x64xbf16, #tpu.memory_space<vmem>>, vector<1x28x64xbf16>
    %199 = vector.shape_cast %198 : vector<1x28x64xbf16> to vector<28x64xbf16>
    %cst_87 = arith.constant dense<0.000000e+00> : vector<1x64xf32>
    %200 = tpu.matmul %197, %199, %cst_87 {dimension_numbers = #tpu.dot_dimension_numbers<[1], [0], [0], [1], [0, 0, 1, 1], [], []>} : vector<1x28xbf16>, vector<28x64xbf16>, vector<1x64xf32> -> vector<1x64xf32>
    %201 = arith.addf %194, %200 : vector<1x64xf32>
    %202 = vector.extract_strided_slice %34 {offsets = [0, 24, 0], sizes = [1, 1, 28], strides = [1, 1, 1]} : vector<1x32x28xf32> to vector<1x1x28xf32>
    %203 = vector.shape_cast %202 : vector<1x1x28xf32> to vector<1x28xf32>
    %204 = arith.truncf %203 : vector<1x28xf32> to vector<1x28xbf16>
    %c24 = arith.constant 24 : index
    %c0_88 = arith.constant 0 : index
    %c0_89 = arith.constant 0 : index
    %205 = vector.load %arg6[%c24, %c0_88, %c0_89] : memref<28x28x64xbf16, #tpu.memory_space<vmem>>, vector<1x28x64xbf16>
    %206 = vector.shape_cast %205 : vector<1x28x64xbf16> to vector<28x64xbf16>
    %cst_90 = arith.constant dense<0.000000e+00> : vector<1x64xf32>
    %207 = tpu.matmul %204, %206, %cst_90 {dimension_numbers = #tpu.dot_dimension_numbers<[1], [0], [0], [1], [0, 0, 1, 1], [], []>} : vector<1x28xbf16>, vector<28x64xbf16>, vector<1x64xf32> -> vector<1x64xf32>
    %208 = arith.addf %201, %207 : vector<1x64xf32>
    %209 = vector.extract_strided_slice %34 {offsets = [0, 25, 0], sizes = [1, 1, 28], strides = [1, 1, 1]} : vector<1x32x28xf32> to vector<1x1x28xf32>
    %210 = vector.shape_cast %209 : vector<1x1x28xf32> to vector<1x28xf32>
    %211 = arith.truncf %210 : vector<1x28xf32> to vector<1x28xbf16>
    %c25 = arith.constant 25 : index
    %c0_91 = arith.constant 0 : index
    %c0_92 = arith.constant 0 : index
    %212 = vector.load %arg6[%c25, %c0_91, %c0_92] : memref<28x28x64xbf16, #tpu.memory_space<vmem>>, vector<1x28x64xbf16>
    %213 = vector.shape_cast %212 : vector<1x28x64xbf16> to vector<28x64xbf16>
    %cst_93 = arith.constant dense<0.000000e+00> : vector<1x64xf32>
    %214 = tpu.matmul %211, %213, %cst_93 {dimension_numbers = #tpu.dot_dimension_numbers<[1], [0], [0], [1], [0, 0, 1, 1], [], []>} : vector<1x28xbf16>, vector<28x64xbf16>, vector<1x64xf32> -> vector<1x64xf32>
    %215 = arith.addf %208, %214 : vector<1x64xf32>
    %216 = vector.extract_strided_slice %34 {offsets = [0, 26, 0], sizes = [1, 1, 28], strides = [1, 1, 1]} : vector<1x32x28xf32> to vector<1x1x28xf32>
    %217 = vector.shape_cast %216 : vector<1x1x28xf32> to vector<1x28xf32>
    %218 = arith.truncf %217 : vector<1x28xf32> to vector<1x28xbf16>
    %c26 = arith.constant 26 : index
    %c0_94 = arith.constant 0 : index
    %c0_95 = arith.constant 0 : index
    %219 = vector.load %arg6[%c26, %c0_94, %c0_95] : memref<28x28x64xbf16, #tpu.memory_space<vmem>>, vector<1x28x64xbf16>
    %220 = vector.shape_cast %219 : vector<1x28x64xbf16> to vector<28x64xbf16>
    %cst_96 = arith.constant dense<0.000000e+00> : vector<1x64xf32>
    %221 = tpu.matmul %218, %220, %cst_96 {dimension_numbers = #tpu.dot_dimension_numbers<[1], [0], [0], [1], [0, 0, 1, 1], [], []>} : vector<1x28xbf16>, vector<28x64xbf16>, vector<1x64xf32> -> vector<1x64xf32>
    %222 = arith.addf %215, %221 : vector<1x64xf32>
    %223 = vector.extract_strided_slice %34 {offsets = [0, 27, 0], sizes = [1, 1, 28], strides = [1, 1, 1]} : vector<1x32x28xf32> to vector<1x1x28xf32>
    %224 = vector.shape_cast %223 : vector<1x1x28xf32> to vector<1x28xf32>
    %225 = arith.truncf %224 : vector<1x28xf32> to vector<1x28xbf16>
    %c27 = arith.constant 27 : index
    %c0_97 = arith.constant 0 : index
    %c0_98 = arith.constant 0 : index
    %226 = vector.load %arg6[%c27, %c0_97, %c0_98] : memref<28x28x64xbf16, #tpu.memory_space<vmem>>, vector<1x28x64xbf16>
    %227 = vector.shape_cast %226 : vector<1x28x64xbf16> to vector<28x64xbf16>
    %cst_99 = arith.constant dense<0.000000e+00> : vector<1x64xf32>
    %228 = tpu.matmul %225, %227, %cst_99 {dimension_numbers = #tpu.dot_dimension_numbers<[1], [0], [0], [1], [0, 0, 1, 1], [], []>} : vector<1x28xbf16>, vector<28x64xbf16>, vector<1x64xf32> -> vector<1x64xf32>
    %229 = arith.addf %222, %228 : vector<1x64xf32>
    %c0_100 = arith.constant 0 : index
    %c0_101 = arith.constant 0 : index
    %230 = vector.load %arg7[%c0_100, %c0_101] : memref<1x64xf32, #tpu.memory_space<vmem>>, vector<1x64xf32>
    %231 = arith.addf %229, %230 : vector<1x64xf32>
    %cst_102 = arith.constant 0.000000e+00 : f32
    %232 = vector.broadcast %cst_102 : f32 to vector<1x64xf32>
    %233 = arith.maximumf %231, %232 : vector<1x64xf32>
    %234 = arith.truncf %233 : vector<1x64xf32> to vector<1x64xbf16>
    %c0_103 = arith.constant 0 : index
    %c0_104 = arith.constant 0 : index
    %235 = vector.load %arg8[%c0_103, %c0_104] : memref<64x10xbf16, #tpu.memory_space<vmem>>, vector<64x10xbf16>
    %cst_105 = arith.constant dense<0.000000e+00> : vector<1x10xf32>
    %236 = tpu.matmul %234, %235, %cst_105 {dimension_numbers = #tpu.dot_dimension_numbers<[1], [0], [0], [1], [0, 0, 1, 1], [], []>} : vector<1x64xbf16>, vector<64x10xbf16>, vector<1x10xf32> -> vector<1x10xf32>
    %c0_106 = arith.constant 0 : index
    %c0_107 = arith.constant 0 : index
    %237 = vector.load %arg9[%c0_106, %c0_107] : memref<1x10xf32, #tpu.memory_space<vmem>>, vector<1x10xf32>
    %238 = arith.addf %236, %237 : vector<1x10xf32>
    %239 = vector.shape_cast %238 : vector<1x10xf32> to vector<1x1x10xf32>
    %c0_108 = arith.constant 0 : index
    %c0_109 = arith.constant 0 : index
    %c0_110 = arith.constant 0 : index
    %240 = vector.load %arg10[%c0_108, %c0_109, %c0_110] : memref<1x1x10xf32, #tpu.memory_space<vmem>>, vector<1x1x10xf32>
    tpu.vector_store %arg10[%c0_108, %c0_109, %c0_110], %239 {strides = array<i32>} : memref<1x1x10xf32, #tpu.memory_space<vmem>>, vector<1x1x10xf32>,
    return
  }
  func.func @transform_0(%arg0: i32) -> (i32, i32, i32) {
    %c0_i32 = arith.constant 0 : i32
    %c0_i32_0 = arith.constant 0 : i32
    %c0_i32_1 = arith.constant 0 : i32
    return %arg0, %c0_i32, %c0_i32_0 : i32, i32, i32
  }
  func.func @transform_1(%arg0: i32) -> (i32, i32) {
    %c0_i32 = arith.constant 0 : i32
    %c0_i32_0 = arith.constant 0 : i32
    %c0_i32_1 = arith.constant 0 : i32
    return %c0_i32, %c0_i32_0 : i32, i32
  }
  func.func @transform_2(%arg0: i32) -> (i32, i32) {
    %c0_i32 = arith.constant 0 : i32
    %c0_i32_0 = arith.constant 0 : i32
    %c0_i32_1 = arith.constant 0 : i32
    return %c0_i32, %c0_i32_0 : i32, i32
  }
  func.func @transform_3(%arg0: i32) -> (i32, i32) {
    %c0_i32 = arith.constant 0 : i32
    %c0_i32_0 = arith.constant 0 : i32
    %c0_i32_1 = arith.constant 0 : i32
    return %c0_i32, %c0_i32_0 : i32, i32
  }
  func.func @transform_4(%arg0: i32) -> (i32, i32) {
    %c0_i32 = arith.constant 0 : i32
    %c0_i32_0 = arith.constant 0 : i32
    %c0_i32_1 = arith.constant 0 : i32
    return %c0_i32, %c0_i32_0 : i32, i32
  }
  func.func @transform_5(%arg0: i32) -> (i32, i32, i32) {
    %c0_i32 = arith.constant 0 : i32
    %c0_i32_0 = arith.constant 0 : i32
    %c0_i32_1 = arith.constant 0 : i32
    %c0_i32_2 = arith.constant 0 : i32
    return %c0_i32, %c0_i32_0, %c0_i32_1 : i32, i32, i32
  }
  func.func @transform_6(%arg0: i32) -> (i32, i32) {
    %c0_i32 = arith.constant 0 : i32
    %c0_i32_0 = arith.constant 0 : i32
    %c0_i32_1 = arith.constant 0 : i32
    return %c0_i32, %c0_i32_0 : i32, i32
  }
  func.func @transform_7(%arg0: i32) -> (i32, i32) {
    %c0_i32 = arith.constant 0 : i32
    %c0_i32_0 = arith.constant 0 : i32
    %c0_i32_1 = arith.constant 0 : i32
    return %c0_i32, %c0_i32_0 : i32, i32
  }
  func.func @transform_8(%arg0: i32) -> (i32, i32) {
    %c0_i32 = arith.constant 0 : i32
    %c0_i32_0 = arith.constant 0 : i32
    %c0_i32_1 = arith.constant 0 : i32
    return %c0_i32, %c0_i32_0 : i32, i32
  }
  func.func @transform_9(%arg0: i32) -> (i32, i32, i32) {
    %c0_i32 = arith.constant 0 : i32
    %c0_i32_0 = arith.constant 0 : i32
    %c0_i32_1 = arith.constant 0 : i32
    return %arg0, %c0_i32, %c0_i32_0 : i32, i32, i32
  }
}

</mosaic_0001>

<llo_original>
// kernel: tile.6
$region0: #{tile.6}
  #allocation0 [shape = 's32[1]{0}', space=sflag, size = 0x4, scoped, tag = 'scoped memory for tile.6']
  %s0 = inlined_call_operand.vmem [shape: f32[32], index: 0, kind: input, shape index: {}]
  %s1 = inlined_call_operand.vmem [shape: f32[28,32], index: 1, kind: output, shape index: {}]
  // Predicated region
  $region2: #{tile.6} parent=0 // pred_check
    _
  $region3: #{tile.6} parent=0 // pred_check_branch
    %3 = sbr.rel (0) target = $region5
  $region4: #{tile.6} parent=0 // pred_region
    _
  $region5: #{tile.6} parent=0 // pred_fallthru
    _
  %v4 = vld [vmem:[%s0] ss:$0 sm:$0xff]
  %5 = vst [vmem:[%s1] sm:$0xff] %v4
  %s6 = scalar_lea.vmem %s1, 8
  %7 = vst [vmem:[%s6] sm:$0xff] %v4
  %s8 = scalar_lea.vmem %s1, 16
  %9 = vst [vmem:[%s8] sm:$0xff] %v4
  %s10 = scalar_lea.vmem %s1, 24
  %11 = vst [vmem:[%s10] sm:$0xff] %v4

// kernel: tile.7
$region0: #{tile.7}
  %s0 = inlined_call_operand.vmem [shape: f32[28,32], index: 0, kind: input, shape index: {}]
  %s1 = inlined_call_operand.vmem [shape: f32[1,896], index: 1, kind: output, shape index: {}]
  $region1: #{tile.7} parent=0
    #allocation0 [shape = 'u8[28672]{0}', space=vmem, size = 0x7000, scoped, tag = 'scoped mem for output reshape']
    %v2 = vld [vmem:[%s0] ss:$4 sm:$0x7f]
    %vm3 = vcmask 261120
    %4 = vst.msk [vmem:[#allocation0] ss:$8 sm:$0xf] %vm3, %v2
    %5 = vst.msk [vmem:[#allocation0] ss:$8 sm:$0x70] %vm3, %v2
    %s6 = scalar_lea.vmem %s0, 3
    %v7 = vld [vmem:[%s6] ss:$4 sm:$0x7f]
    %8 = vrot.lane.b32.xlu0 %v7, 96
    %v9 = vpop.permute.xlu0 %8
    %vm10 = vcmask 1048320
    %11 = vst.msk [vmem:[#allocation0] ss:$8 sm:$0xf] %vm10, %v9
    %12 = vst.msk [vmem:[#allocation0] ss:$8 sm:$0x70] %vm10, %v9
    %s13 = scalar_lea.vmem %s0, 2
    %v14 = vld [vmem:[%s13] ss:$4 sm:$0x7f]
    %15 = vrot.lane.b32.xlu0 %v14, 64
    %v16 = vpop.permute.xlu0 %15
    %vm17 = vcmask 785920
    %18 = vst.msk [vmem:[#allocation0] ss:$8 sm:$0xf] %vm17, %v16
    %19 = vst.msk [vmem:[#allocation0] ss:$8 sm:$0x70] %vm17, %v16
    %s20 = scalar_lea.vmem %s0, 1
    %v21 = vld [vmem:[%s20] ss:$4 sm:$0x7f]
    %22 = vrot.lane.b32.xlu0 %v21, 32
    %v23 = vpop.permute.xlu0 %22
    %vm24 = vcmask 523520
    %25 = vst.msk [vmem:[#allocation0] ss:$8 sm:$0xf] %vm24, %v23
    %26 = vst.msk [vmem:[#allocation0] ss:$8 sm:$0x70] %vm24, %v23
    %s28 = sshllo.u32 0, 1
    %v30 = vld [vmem:[#allocation0] sm:%s28]
    %s31 = sshllo.u32 0, 1
    %32 = vst [vmem:[%s1] sm:%s31] %v30
    %s33 = scalar_lea.vmem [#allocation0], 8
    %v34 = vld [vmem:[%s33] sm:%s28]
    %s35 = sshllo.u32 0, 1
    %s36 = scalar_lea.vmem %s1, 1
    %37 = vst [vmem:[%s36] sm:%s35] %v34
    %s38 = scalar_lea.vmem [#allocation0], 16
    %v39 = vld [vmem:[%s38] sm:%s28]
    %s40 = sshllo.u32 0, 1
    %s41 = smul.addr 1, 2
    %s42 = scalar_lea.vmem %s1, %s41
    %43 = vst [vmem:[%s42] sm:%s40] %v39
    %s44 = scalar_lea.vmem [#allocation0], 24
    %v45 = vld [vmem:[%s44] sm:%s28]
    %s46 = sshllo.u32 0, 1
    %s47 = smul.addr 1, 3
    %s48 = scalar_lea.vmem %s1, %s47
    %49 = vst [vmem:[%s48] sm:%s46] %v45
    %s50 = scalar_lea.vmem [#allocation0], 32
    %v51 = vld [vmem:[%s50] sm:%s28]
    %s52 = sshllo.u32 0, 1
    %s53 = smul.addr 1, 4
    %s54 = scalar_lea.vmem %s1, %s53
    %55 = vst [vmem:[%s54] sm:%s52] %v51
    %s56 = scalar_lea.vmem [#allocation0], 40
    %v57 = vld [vmem:[%s56] sm:%s28]
    %s58 = sshllo.u32 0, 1
    %s59 = smul.addr 1, 5
    %s60 = scalar_lea.vmem %s1, %s59
    %61 = vst [vmem:[%s60] sm:%s58] %v57
    %s62 = scalar_lea.vmem [#allocation0], 48
    %v63 = vld [vmem:[%s62] sm:%s28]
    %s64 = sshllo.u32 0, 1
    %s65 = smul.addr 1, 6
    %s66 = scalar_lea.vmem %s1, %s65
    %67 = vst [vmem:[%s66] sm:%s64] %v63

// kernel: cnn2_forward.1
$region0: #{cnn2_forward.1}
  #allocation0 [shape = 'u32[]', space=smem, size = 0x4, offset = 0x4, fixed_abs, tag = 'smem constant byte address 0x4 - core index']
  #allocation1 [shape = 'u32[144,128]{1,0:T(1,128)}', space=vmem, size = 0x12000, scoped, tag = 'internal scratch']
  #allocation2 [shape = 'f32[1,1]{1,0:T(1,128)S(6)}', space=smem, size = 0x200, scoped, tag = 'scoped memory for cnn2_forward.1']
  %s0 = inlined_call_operand.vmem [shape: bf16[2,32,84], index: 0, kind: input, shape index: {}]
  %s1 = inlined_call_operand.vmem [shape: bf16[84,896], index: 1, kind: input, shape index: {}]
  %s2 = inlined_call_operand.vmem [shape: f32[1,896], index: 2, kind: input, shape index: {}]
  %s3 = inlined_call_operand.vmem [shape: bf16[896,84], index: 3, kind: input, shape index: {}]
  %s4 = inlined_call_operand.<no memory space> [shape: f32[1,1], index: 4, kind: input, shape index: {}]
  %s5 = inlined_call_operand.vmem [shape: bf16[28,28,64], index: 5, kind: input, shape index: {}]
  %s6 = inlined_call_operand.vmem [shape: f32[1,64], index: 6, kind: input, shape index: {}]
  %s7 = inlined_call_operand.vmem [shape: bf16[64,10], index: 7, kind: input, shape index: {}]
  %s8 = inlined_call_operand.vmem [shape: f32[1,10], index: 8, kind: input, shape index: {}]
  %s9 = inlined_call_operand.hbm [shape: f32[2,1,10], index: 9, kind: output, shape index: {}]
  %s10 = sld [smem:[#allocation0]]
  $region69: #{cnn2_forward.1} parent=0
    _
  %s12 = ssub.s32 1, %s10
  %s13 = scalar_select 0, %s12, %s10
  %14 = sst [smem:[#allocation2]] %s4
  $region1: #{cnn2_forward.1} parent=0
    #allocation3 [shape = 'u8[1024]{0}', space=vmem, size = 0x400, scoped, tag = 'output window, operand 0']
    #allocation4 [shape = 's32[2]{0}', space=sflag, size = 0x8, scoped, tag = 'scoped memory for cnn2_forward.1']
    %15 = vsyncpa [#allocation4], 0
    %s16 = scalar_lea.sflag [#allocation4], 1
    %17 = vsyncpa %s16, 0
    loop: start=0, step=1, limit=4
    $region2: #{cnn2_forward.1} parent=1 // loop_pre_header
      _
    $region3: #{cnn2_forward.1} parent=1 // loop_header
      %s19 = sphi 0, %s23
      %p20 = scmp.ge.s32.totalorder %s19, 4
      %s29 = sphi 0, %s31
      %s32 = sphi 0, %s29
      %s33 = sphi 0, %s32
      %s49 = sphi 0, %s33
      %s53 = sphi 0, %s53
      %s55 = sphi 0, %s53
      %s56 = sphi 0, %s55
      %s70 = sphi 0, %s56
      %s74 = sphi 0, %s74
      %s76 = sphi 0, %s74
      %s77 = sphi 0, %s76
      %s91 = sphi 0, %s77
      %s95 = sphi 0, %s95
      %s97 = sphi 0, %s95
      %s98 = sphi 0, %s97
      %s112 = sphi 0, %s98
      %s116 = sphi 0, %s116
      %s118 = sphi 0, %s116
      %s119 = sphi 0, %s118
      %s133 = sphi 0, %s119
      %s137 = sphi 0, %s137
      %s139 = sphi 0, %s137
      %s140 = sphi 0, %s139
      %s154 = sphi 0, %s140
      %s158 = sphi 0, %s158
      %s160 = sphi 0, %s158
      %s161 = sphi 0, %s160
      %s175 = sphi 0, %s161
      %s179 = sphi 0, %s179
      %s181 = sphi 0, %s179
      %s182 = sphi 0, %s181
      %s196 = sphi 0, %s182
      %s200 = sphi 0, %s200
      %s202 = sphi 0, %s200
      %s203 = sphi 0, %s202
      %s217 = sphi 0, %s203
      %s223 = sphi 0, %s225
      %s226 = sphi 0, %s223
      %s227 = sphi 0, %s226
      %s243 = sphi 0, %s227
    $region4: #{cnn2_forward.1} parent=1 // loop_header_branch
      %22 = sbr.rel (%p20) target = $region8
    $region5: #{cnn2_forward.1} parent=1 // loop_body
      %s24 = ssub.s32 %s19, 1
      %s25 = ssub.s32 %s19, 2
      %s26 = sadd.s32 %s19, 1
      %s27 = ssub.s32 %s19, %s26
      %p28 = scmp.eq.s32.totalorder %s27, 0
      %s30 = sadd.s32 %s29, 1
      %s31 = scalar_select %p28, %s29, %s30
      %p34 = pneg %p28
      %p35 = scmp.eq.s32.totalorder %s19, 1
      %p36 = por %p34, %p35
      %p37 = scmp.ne.s32.totalorder %s29, %s32
      %p38 = scmp.eq.s32.totalorder %s19, 0
      %p39 = por %p37, %p38
      %p40 = scmp.ne.s32.totalorder %s29, %s32
      %p41 = scmp.eq.s32.totalorder %s24, 1
      %p42 = por %p40, %p41
      %p43 = scmp.ne.s32.totalorder %s32, %s33
      %p44 = scmp.eq.s32.totalorder %s24, 0
      %p45 = por %p43, %p44
      %p46 = scmp.ne.s32.totalorder %s32, %s33
      %p47 = scmp.eq.s32.totalorder %s25, 1
      %p48 = por %p46, %p47
      %p50 = scmp.ne.s32.totalorder %s33, %s49
      %p51 = scmp.eq.s32.totalorder %s25, 0
      %p52 = por %p50, %p51
      %s54 = sadd.s32 %s53, 1
      %p57 = scmp.eq.s32.totalorder %s19, 1
      %p58 = scmp.ne.s32.totalorder %s53, %s55
      %p59 = scmp.eq.s32.totalorder %s19, 0
      %p60 = por %p58, %p59
      %p61 = scmp.ne.s32.totalorder %s53, %s55
      %p62 = scmp.eq.s32.totalorder %s24, 1
      %p63 = por %p61, %p62
      %p64 = scmp.ne.s32.totalorder %s55, %s56
      %p65 = scmp.eq.s32.totalorder %s24, 0
      %p66 = por %p64, %p65
      %p67 = scmp.ne.s32.totalorder %s55, %s56
      %p68 = scmp.eq.s32.totalorder %s25, 1
      %p69 = por %p67, %p68
      %p71 = scmp.ne.s32.totalorder %s56, %s70
      %p72 = scmp.eq.s32.totalorder %s25, 0
      %p73 = por %p71, %p72
      %s75 = sadd.s32 %s74, 1
      %p78 = scmp.eq.s32.totalorder %s19, 1
      %p79 = scmp.ne.s32.totalorder %s74, %s76
      %p80 = scmp.eq.s32.totalorder %s19, 0
      %p81 = por %p79, %p80
      %p82 = scmp.ne.s32.totalorder %s74, %s76
      %p83 = scmp.eq.s32.totalorder %s24, 1
      %p84 = por %p82, %p83
      %p85 = scmp.ne.s32.totalorder %s76, %s77
      %p86 = scmp.eq.s32.totalorder %s24, 0
      %p87 = por %p85, %p86
      %p88 = scmp.ne.s32.totalorder %s76, %s77
      %p89 = scmp.eq.s32.totalorder %s25, 1
      %p90 = por %p88, %p89
      %p92 = scmp.ne.s32.totalorder %s77, %s91
      %p93 = scmp.eq.s32.totalorder %s25, 0
      %p94 = por %p92, %p93
      %s96 = sadd.s32 %s95, 1
      %p99 = scmp.eq.s32.totalorder %s19, 1
      %p100 = scmp.ne.s32.totalorder %s95, %s97
      %p101 = scmp.eq.s32.totalorder %s19, 0
      %p102 = por %p100, %p101
      %p103 = scmp.ne.s32.totalorder %s95, %s97
      %p104 = scmp.eq.s32.totalorder %s24, 1
      %p105 = por %p103, %p104
      %p106 = scmp.ne.s32.totalorder %s97, %s98
      %p107 = scmp.eq.s32.totalorder %s24, 0
      %p108 = por %p106, %p107
      %p109 = scmp.ne.s32.totalorder %s97, %s98
      %p110 = scmp.eq.s32.totalorder %s25, 1
      %p111 = por %p109, %p110
      %p113 = scmp.ne.s32.totalorder %s98, %s112
      %p114 = scmp.eq.s32.totalorder %s25, 0
      %p115 = por %p113, %p114
      %s117 = sadd.s32 %s116, 1
      %p120 = scmp.eq.s32.totalorder %s19, 1
      %p121 = scmp.ne.s32.totalorder %s116, %s118
      %p122 = scmp.eq.s32.totalorder %s19, 0
      %p123 = por %p121, %p122
      %p124 = scmp.ne.s32.totalorder %s116, %s118
      %p125 = scmp.eq.s32.totalorder %s24, 1
      %p126 = por %p124, %p125
      %p127 = scmp.ne.s32.totalorder %s118, %s119
      %p128 = scmp.eq.s32.totalorder %s24, 0
      %p129 = por %p127, %p128
      %p130 = scmp.ne.s32.totalorder %s118, %s119
      %p131 = scmp.eq.s32.totalorder %s25, 1
      %p132 = por %p130, %p131
      %p134 = scmp.ne.s32.totalorder %s119, %s133
      %p135 = scmp.eq.s32.totalorder %s25, 0
      %p136 = por %p134, %p135
      %s138 = sadd.s32 %s137, 1
      %p141 = scmp.eq.s32.totalorder %s19, 1
      %p142 = scmp.ne.s32.totalorder %s137, %s139
      %p143 = scmp.eq.s32.totalorder %s19, 0
      %p144 = por %p142, %p143
      %p145 = scmp.ne.s32.totalorder %s137, %s139
      %p146 = scmp.eq.s32.totalorder %s24, 1
      %p147 = por %p145, %p146
      %p148 = scmp.ne.s32.totalorder %s139, %s140
      %p149 = scmp.eq.s32.totalorder %s24, 0
      %p150 = por %p148, %p149
      %p151 = scmp.ne.s32.totalorder %s139, %s140
      %p152 = scmp.eq.s32.totalorder %s25, 1
      %p153 = por %p151, %p152
      %p155 = scmp.ne.s32.totalorder %s140, %s154
      %p156 = scmp.eq.s32.totalorder %s25, 0
      %p157 = por %p155, %p156
      %s159 = sadd.s32 %s158, 1
      %p162 = scmp.eq.s32.totalorder %s19, 1
      %p163 = scmp.ne.s32.totalorder %s158, %s160
      %p164 = scmp.eq.s32.totalorder %s19, 0
      %p165 = por %p163, %p164
      %p166 = scmp.ne.s32.totalorder %s158, %s160
      %p167 = scmp.eq.s32.totalorder %s24, 1
      %p168 = por %p166, %p167
      %p169 = scmp.ne.s32.totalorder %s160, %s161
      %p170 = scmp.eq.s32.totalorder %s24, 0
      %p171 = por %p169, %p170
      %p172 = scmp.ne.s32.totalorder %s160, %s161
      %p173 = scmp.eq.s32.totalorder %s25, 1
      %p174 = por %p172, %p173
      %p176 = scmp.ne.s32.totalorder %s161, %s175
      %p177 = scmp.eq.s32.totalorder %s25, 0
      %p178 = por %p176, %p177
      %s180 = sadd.s32 %s179, 1
      %p183 = scmp.eq.s32.totalorder %s19, 1
      %p184 = scmp.ne.s32.totalorder %s179, %s181
      %p185 = scmp.eq.s32.totalorder %s19, 0
      %p186 = por %p184, %p185
      %p187 = scmp.ne.s32.totalorder %s179, %s181
      %p188 = scmp.eq.s32.totalorder %s24, 1
      %p189 = por %p187, %p188
      %p190 = scmp.ne.s32.totalorder %s181, %s182
      %p191 = scmp.eq.s32.totalorder %s24, 0
      %p192 = por %p190, %p191
      %p193 = scmp.ne.s32.totalorder %s181, %s182
      %p194 = scmp.eq.s32.totalorder %s25, 1
      %p195 = por %p193, %p194
      %p197 = scmp.ne.s32.totalorder %s182, %s196
      %p198 = scmp.eq.s32.totalorder %s25, 0
      %p199 = por %p197, %p198
      %s201 = sadd.s32 %s200, 1
      %p204 = scmp.eq.s32.totalorder %s19, 1
      %p205 = scmp.ne.s32.totalorder %s200, %s202
      %p206 = scmp.eq.s32.totalorder %s19, 0
      %p207 = por %p205, %p206
      %p208 = scmp.ne.s32.totalorder %s200, %s202
      %p209 = scmp.eq.s32.totalorder %s24, 1
      %p210 = por %p208, %p209
      %p211 = scmp.ne.s32.totalorder %s202, %s203
      %p212 = scmp.eq.s32.totalorder %s24, 0
      %p213 = por %p211, %p212
      %p214 = scmp.ne.s32.totalorder %s202, %s203
      %p215 = scmp.eq.s32.totalorder %s25, 1
      %p216 = por %p214, %p215
      %p218 = scmp.ne.s32.totalorder %s203, %s217
      %p219 = scmp.eq.s32.totalorder %s25, 0
      %p220 = por %p218, %p219
      %s221 = ssub.s32 %s19, %s26
      %p222 = scmp.eq.s32.totalorder %s221, 0
      %s224 = sadd.s32 %s223, 1
      %s225 = scalar_select %p222, %s223, %s224
      %p228 = pneg %p222
      %p229 = scmp.eq.s32.totalorder %s19, 1
      %p230 = por %p228, %p229
      %p231 = scmp.ne.s32.totalorder %s223, %s226
      %p232 = scmp.eq.s32.totalorder %s19, 0
      %p233 = por %p231, %p232
      %p234 = scmp.ne.s32.totalorder %s223, %s226
      %p235 = scmp.eq.s32.totalorder %s24, 1
      %p236 = por %p234, %p235
      %p237 = scmp.ne.s32.totalorder %s226, %s227
      %p238 = scmp.eq.s32.totalorder %s24, 0
      %p239 = por %p237, %p238
      %p240 = scmp.ne.s32.totalorder %s226, %s227
      %p241 = scmp.eq.s32.totalorder %s25, 1
      %p242 = por %p240, %p241
      %p244 = scmp.ne.s32.totalorder %s227, %s243
      %p245 = scmp.eq.s32.totalorder %s25, 0
      %p246 = por %p244, %p245
      %p247 = scmp.le.s32.totalorder 1, %s19
      %p248 = scmp.lt.s32.totalorder %s19, 3
      %p249 = pnand %p247, %p248
      %p250 = pneg %p249
      // Predicated region
      $region9: #{cnn2_forward.1} parent=5 // pred_check
        _
      $region10: #{cnn2_forward.1} parent=5 // pred_check_branch
        %252 = sbr.rel (%p249) target = $region12
      $region11: #{cnn2_forward.1} parent=5 // pred_region
        %s253 = ssub.s32 %s19, 1
        // Predicated region
        $region13: #{cnn2_forward.1} parent=11 // pred_check
          %p254 = pneg %p66
        $region14: #{cnn2_forward.1} parent=11 // pred_check_branch
          %256 = sbr.rel (%p254) target = $region16
        $region15: #{cnn2_forward.1} parent=11 // pred_region
          _
        $region16: #{cnn2_forward.1} parent=11 // pred_fallthru
          _
        // Predicated region
        $region17: #{cnn2_forward.1} parent=11 // pred_check
          %p257 = pneg %p87
        $region18: #{cnn2_forward.1} parent=11 // pred_check_branch
          %259 = sbr.rel (%p257) target = $region20
        $region19: #{cnn2_forward.1} parent=11 // pred_region
          _
        $region20: #{cnn2_forward.1} parent=11 // pred_fallthru
          _
        // Predicated region
        $region21: #{cnn2_forward.1} parent=11 // pred_check
          %p260 = pneg %p108
        $region22: #{cnn2_forward.1} parent=11 // pred_check_branch
          %262 = sbr.rel (%p260) target = $region24
        $region23: #{cnn2_forward.1} parent=11 // pred_region
          _
        $region24: #{cnn2_forward.1} parent=11 // pred_fallthru
          _
        // Predicated region
        $region25: #{cnn2_forward.1} parent=11 // pred_check
          %p263 = pneg %p129
        $region26: #{cnn2_forward.1} parent=11 // pred_check_branch
          %265 = sbr.rel (%p263) target = $region28
        $region27: #{cnn2_forward.1} parent=11 // pred_region
          _
        $region28: #{cnn2_forward.1} parent=11 // pred_fallthru
          _
        // Predicated region
        $region29: #{cnn2_forward.1} parent=11 // pred_check
          %p266 = pneg %p150
        $region30: #{cnn2_forward.1} parent=11 // pred_check_branch
          %268 = sbr.rel (%p266) target = $region32
        $region31: #{cnn2_forward.1} parent=11 // pred_region
          _
        $region32: #{cnn2_forward.1} parent=11 // pred_fallthru
          _
        // Predicated region
        $region33: #{cnn2_forward.1} parent=11 // pred_check
          %p269 = pneg %p171
        $region34: #{cnn2_forward.1} parent=11 // pred_check_branch
          %271 = sbr.rel (%p269) target = $region36
        $region35: #{cnn2_forward.1} parent=11 // pred_region
          _
        $region36: #{cnn2_forward.1} parent=11 // pred_fallthru
          _
        // Predicated region
        $region37: #{cnn2_forward.1} parent=11 // pred_check
          %p272 = pneg %p192
        $region38: #{cnn2_forward.1} parent=11 // pred_check_branch
          %274 = sbr.rel (%p272) target = $region40
        $region39: #{cnn2_forward.1} parent=11 // pred_region
          _
        $region40: #{cnn2_forward.1} parent=11 // pred_fallthru
          _
        // Predicated region
        $region41: #{cnn2_forward.1} parent=11 // pred_check
          %p275 = pneg %p213
        $region42: #{cnn2_forward.1} parent=11 // pred_check_branch
          %277 = sbr.rel (%p275) target = $region44
        $region43: #{cnn2_forward.1} parent=11 // pred_region
          _
        $region44: #{cnn2_forward.1} parent=11 // pred_fallthru
          _
      $region12: #{cnn2_forward.1} parent=5 // pred_fallthru
        _
      %p278 = scmp.lt.s32.totalorder %s19, 2
      // Predicated region
      $region45: #{cnn2_forward.1} parent=5 // pred_check
        %p279 = pneg %p278
      $region46: #{cnn2_forward.1} parent=5 // pred_check_branch
        %281 = sbr.rel (%p279) target = $region48
      $region47: #{cnn2_forward.1} parent=5 // pred_region
        // Predicated region
        $region49: #{cnn2_forward.1} parent=47 // pred_check
          %p282 = pneg %p39
        $region50: #{cnn2_forward.1} parent=47 // pred_check_branch
          %284 = sbr.rel (%p282) target = $region52
        $region51: #{cnn2_forward.1} parent=47 // pred_region
          %p285 = scmp.lt.s32.totalorder %s19, 1
          %s286 = scalar_select %p285, %s19, 1
          %s287 = smul.addr %s286, 4
          %s288 = smul.addr %s287, 4
          %s289 = scalar_lea.vmem %s0, %s288
        $region52: #{cnn2_forward.1} parent=47 // pred_fallthru
          _
      $region48: #{cnn2_forward.1} parent=5 // pred_fallthru
        _
      %p290 = scmp.le.s32.totalorder 1, %s19
      %p291 = scmp.lt.s32.totalorder %s19, 3
      %p292 = pnand %p290, %p291
      %p293 = pneg %p292
      // Predicated region
      $region53: #{cnn2_forward.1} parent=5 // pred_check
        _
      $region54: #{cnn2_forward.1} parent=5 // pred_check_branch
        %295 = sbr.rel (%p292) target = $region56
      $region55: #{cnn2_forward.1} parent=5 // pred_region
        %s296 = ssub.s32 %s19, 1
        %p297 = scmp.lt.s32.totalorder %s24, 1
        %s298 = scalar_select %p297, %s24, 1
        %s299 = smul.addr %s298, 4
        %s300 = smul.addr %s299, 4
        %s301 = scalar_lea.vmem %s0, %s300
        %p302 = pneg %p45
        %p303 = pneg %p42
        %p304 = pneg %p66
        %p305 = pneg %p63
        %p306 = pneg %p87
        %p307 = pneg %p84
        %p308 = pneg %p108
        %p309 = pneg %p105
        %p310 = pneg %p129
        %p311 = pneg %p126
        %p312 = pneg %p150
        %p313 = pneg %p147
        %p314 = pneg %p171
        %p315 = pneg %p168
        %p316 = pneg %p192
        %p317 = pneg %p189
        %p318 = pneg %p213
        %p319 = pneg %p210
        %p320 = pneg %p239
        %p321 = pneg %p236
        %s322 = sand.u32 %s226, 1
        %s323 = scalar_lea.sflag [#allocation4], %s322
        %s324 = sand.u32 %s226, 1
        %s325 = scalar_lea.vmem [#allocation3], %s324
        %p326 = scmp.lt.s32.totalorder %s24, 1
        %s327 = scalar_select %p326, %s24, 1
        %s328 = smul.addr %s327, 4
        %s329 = smul.addr %s328, 4
        %s330 = scalar_lea.vmem %s0, %s329
        %v332 = vld [vmem:[%s330] sm:$0xf]
        %v333 = vld [vmem:[%s330 + $0x4] sm:$0xf]
        %v334 = vld [vmem:[%s330 + $0x8] sm:$0xf]
        %v335 = vld [vmem:[%s330 + $0xc] sm:$0xf]
        %v336 = vld [vmem:[%s1] sm:$0xff]
        %v337 = vld [vmem:[%s1 + $0x8] sm:$0xff]
        %v338 = vld [vmem:[%s1 + $0x10] sm:$0xff]
        %v339 = vld [vmem:[%s1 + $0x18] sm:$0xf]
        %v340 = vld [vmem:[%s1 + $0x1c] sm:$0xff]
        %v341 = vld [vmem:[%s1 + $0x24] sm:$0xff]
        %v342 = vld [vmem:[%s1 + $0x2c] sm:$0xff]
        %v343 = vld [vmem:[%s1 + $0x34] sm:$0xf]
        %v344 = vld [vmem:[%s1 + $0x38] sm:$0xff]
        %v345 = vld [vmem:[%s1 + $0x40] sm:$0xff]
        %v346 = vld [vmem:[%s1 + $0x48] sm:$0xff]
        %v347 = vld [vmem:[%s1 + $0x50] sm:$0xf]
        %v348 = vld [vmem:[%s1 + $0x54] sm:$0xff]
        %v349 = vld [vmem:[%s1 + $0x5c] sm:$0xff]
        %v350 = vld [vmem:[%s1 + $0x64] sm:$0xff]
        %v351 = vld [vmem:[%s1 + $0x6c] sm:$0xf]
        %v352 = vld [vmem:[%s1 + $0x70] sm:$0xff]
        %v353 = vld [vmem:[%s1 + $0x78] sm:$0xff]
        %v354 = vld [vmem:[%s1 + $0x80] sm:$0xff]
        %v355 = vld [vmem:[%s1 + $0x88] sm:$0xf]
        %v356 = vld [vmem:[%s1 + $0x8c] sm:$0xff]
        %v357 = vld [vmem:[%s1 + $0x94] sm:$0xff]
        %v358 = vld [vmem:[%s1 + $0x9c] sm:$0xff]
        %v359 = vld [vmem:[%s1 + $0xa4] sm:$0xf]
        %v360 = vld [vmem:[%s1 + $0xa8] sm:$0xff]
        %v361 = vld [vmem:[%s1 + $0xb0] sm:$0xff]
        %v362 = vld [vmem:[%s1 + $0xb8] sm:$0xff]
        %v363 = vld [vmem:[%s1 + $0xc0] sm:$0xf]
        %v364 = vld [vmem:[%s1 + $0xc4] sm:$0xff]
        %v365 = vld [vmem:[%s1 + $0xcc] sm:$0xff]
        %v366 = vld [vmem:[%s1 + $0xd4] sm:$0xff]
        %v367 = vld [vmem:[%s1 + $0xdc] sm:$0xf]
        %v368 = vld [vmem:[%s1 + $0xe0] sm:$0xff]
        %v369 = vld [vmem:[%s1 + $0xe8] sm:$0xff]
        %v370 = vld [vmem:[%s1 + $0xf0] sm:$0xff]
        %v371 = vld [vmem:[%s1 + $0xf8] sm:$0xf]
        %v372 = vld [vmem:[%s1 + $0xfc] sm:$0xff]
        %v373 = vld [vmem:[%s1 + $0x104] sm:$0xff]
        %v374 = vld [vmem:[%s1 + $0x10c] sm:$0xff]
        %v375 = vld [vmem:[%s1 + $0x114] sm:$0xf]
        %v376 = vld [vmem:[%s1 + $0x118] sm:$0x33]
        %v377 = vld [vmem:[%s1 + $0x120] sm:$0x33]
        %v378 = vld [vmem:[%s1 + $0x128] sm:$0x33]
        %v379 = vld [vmem:[%s1 + $0x130] sm:$0x3]
        %v380 = vlaneseq
        %v381 = vshrl.u32 %v380, 7
        %v382 = vadd.s32 %v381, 8
        %v383 = vadd.s32 %v381, 16
        %v384 = vadd.s32 %v381, 24
        %v385 = vand.u32 %v381, 31
        %v386 = vand.u32 %v382, 31
        %v387 = vand.u32 %v383, 31
        %v388 = vand.u32 %v384, 31
        %vm389 = vcmp.lt.s32.totalorder %v385, 28
        %vm390 = vcmp.lt.s32.totalorder %v386, 28
        %vm391 = vcmp.lt.s32.totalorder %v387, 28
        %vm392 = vcmp.lt.s32.totalorder %v388, 28
        %v393 = vld [vmem:[%s2] sm:$0xff]
        %v395 = vlaneseq
        %v396 = vshrl.u32 %v395, 7
        %v397 = vsub.s32 0, %v396
        %v398 = vrot.slane %v393, %v397
        %v399 = vlaneseq
        %v400 = vshrl.u32 %v399, 7
        %v401 = vsub.s32 1, %v400
        %v402 = vrot.slane %v393, %v401
        %v403 = vlaneseq
        %v404 = vshrl.u32 %v403, 7
        %v405 = vsub.s32 2, %v404
        %v406 = vrot.slane %v393, %v405
        %v407 = vlaneseq
        %v408 = vshrl.u32 %v407, 7
        %v409 = vsub.s32 3, %v408
        %v410 = vrot.slane %v393, %v409
        %v411 = vlaneseq
        %v412 = vshrl.u32 %v411, 7
        %v413 = vsub.s32 4, %v412
        %v414 = vrot.slane %v393, %v413
        %v415 = vlaneseq
        %v416 = vshrl.u32 %v415, 7
        %v417 = vsub.s32 5, %v416
        %v418 = vrot.slane %v393, %v417
        %v419 = vlaneseq
        %v420 = vshrl.u32 %v419, 7
        %v421 = vsub.s32 6, %v420
        %v422 = vrot.slane %v393, %v421
        %v434 = vunpack.c.l.b16 %v332
        %v435 = vunpack.c.l.b16 %v333
        %v436 = vunpack.c.l.b16 %v334
        %v437 = vunpack.c.l.b16 %v335
        %v438 = vpack.c.b16 %v435, %v434
        %v439 = vpack.c.b16 %v437, %v436
        %v484 = vunpack.c.l.b16 %v336
        %v485 = vunpack.c.h.b16 %v336
        %v486 = vunpack.c.l.b16 %v337
        %v487 = vunpack.c.h.b16 %v337
        %v488 = vunpack.c.l.b16 %v338
        %v489 = vunpack.c.h.b16 %v338
        %v490 = vunpack.c.l.b16 %v339
        %v491 = vunpack.c.l.b16 %v340
        %v492 = vunpack.c.h.b16 %v340
        %v493 = vunpack.c.l.b16 %v341
        %v494 = vunpack.c.h.b16 %v341
        %v495 = vunpack.c.l.b16 %v342
        %v496 = vunpack.c.h.b16 %v342
        %v497 = vunpack.c.l.b16 %v343
        %v498 = vunpack.c.l.b16 %v344
        %v499 = vunpack.c.h.b16 %v344
        %v500 = vunpack.c.l.b16 %v345
        %v501 = vunpack.c.h.b16 %v345
        %v502 = vunpack.c.l.b16 %v346
        %v503 = vunpack.c.h.b16 %v346
        %v504 = vunpack.c.l.b16 %v347
        %v505 = vunpack.c.l.b16 %v348
        %v506 = vunpack.c.h.b16 %v348
        %v507 = vunpack.c.l.b16 %v349
        %v508 = vunpack.c.h.b16 %v349
        %v509 = vunpack.c.l.b16 %v350
        %v510 = vunpack.c.h.b16 %v350
        %v511 = vunpack.c.l.b16 %v351
        %v512 = vunpack.c.l.b16 %v352
        %v513 = vunpack.c.h.b16 %v352
        %v514 = vunpack.c.l.b16 %v353
        %v515 = vunpack.c.h.b16 %v353
        %v516 = vunpack.c.l.b16 %v354
        %v517 = vunpack.c.h.b16 %v354
        %v518 = vunpack.c.l.b16 %v355
        %v519 = vunpack.c.l.b16 %v356
        %v520 = vunpack.c.h.b16 %v356
        %v521 = vunpack.c.l.b16 %v357
        %v522 = vunpack.c.h.b16 %v357
        %v523 = vunpack.c.l.b16 %v358
        %v524 = vunpack.c.h.b16 %v358
        %v525 = vunpack.c.l.b16 %v359
        %v526 = vunpack.c.l.b16 %v360
        %v527 = vunpack.c.h.b16 %v360
        %v528 = vunpack.c.l.b16 %v361
        %v529 = vunpack.c.h.b16 %v361
        %v530 = vunpack.c.l.b16 %v362
        %v531 = vunpack.c.h.b16 %v362
        %v532 = vunpack.c.l.b16 %v363
        %v533 = vunpack.c.l.b16 %v364
        %v534 = vunpack.c.h.b16 %v364
        %v535 = vunpack.c.l.b16 %v365
        %v536 = vunpack.c.h.b16 %v365
        %v537 = vunpack.c.l.b16 %v366
        %v538 = vunpack.c.h.b16 %v366
        %v539 = vunpack.c.l.b16 %v367
        %v540 = vunpack.c.l.b16 %v368
        %v541 = vunpack.c.h.b16 %v368
        %v542 = vunpack.c.l.b16 %v369
        %v543 = vunpack.c.h.b16 %v369
        %v544 = vunpack.c.l.b16 %v370
        %v545 = vunpack.c.h.b16 %v370
        %v546 = vunpack.c.l.b16 %v371
        %v547 = vunpack.c.l.b16 %v372
        %v548 = vunpack.c.h.b16 %v372
        %v549 = vunpack.c.l.b16 %v373
        %v550 = vunpack.c.h.b16 %v373
        %v551 = vunpack.c.l.b16 %v374
        %v552 = vunpack.c.h.b16 %v374
        %v553 = vunpack.c.l.b16 %v375
        %v554 = vunpack.c.l.b16 %v376
        %v555 = vunpack.c.h.b16 %v376
        %v556 = vunpack.c.l.b16 %v377
        %v557 = vunpack.c.h.b16 %v377
        %v558 = vunpack.c.l.b16 %v378
        %v559 = vunpack.c.h.b16 %v378
        %v560 = vunpack.c.l.b16 %v379
        %v561 = vpack.c.b16 %v491, %v484
        %v562 = vpack.c.b16 %v492, %v485
        %v563 = vpack.c.b16 %v493, %v486
        %v564 = vpack.c.b16 %v494, %v487
        %v565 = vpack.c.b16 %v495, %v488
        %v566 = vpack.c.b16 %v496, %v489
        %v567 = vpack.c.b16 %v497, %v490
        %v568 = vpack.c.b16 %v505, %v498
        %v569 = vpack.c.b16 %v506, %v499
        %v570 = vpack.c.b16 %v507, %v500
        %v571 = vpack.c.b16 %v508, %v501
        %v572 = vpack.c.b16 %v509, %v502
        %v573 = vpack.c.b16 %v510, %v503
        %v574 = vpack.c.b16 %v511, %v504
        %v575 = vpack.c.b16 %v519, %v512
        %v576 = vpack.c.b16 %v520, %v513
        %v577 = vpack.c.b16 %v521, %v514
        %v578 = vpack.c.b16 %v522, %v515
        %v579 = vpack.c.b16 %v523, %v516
        %v580 = vpack.c.b16 %v524, %v517
        %v581 = vpack.c.b16 %v525, %v518
        %v582 = vpack.c.b16 %v533, %v526
        %v583 = vpack.c.b16 %v534, %v527
        %v584 = vpack.c.b16 %v535, %v528
        %v585 = vpack.c.b16 %v536, %v529
        %v586 = vpack.c.b16 %v537, %v530
        %v587 = vpack.c.b16 %v538, %v531
        %v588 = vpack.c.b16 %v539, %v532
        %v589 = vpack.c.b16 %v547, %v540
        %v590 = vpack.c.b16 %v548, %v541
        %v591 = vpack.c.b16 %v549, %v542
        %v592 = vpack.c.b16 %v550, %v543
        %v593 = vpack.c.b16 %v551, %v544
        %v594 = vpack.c.b16 %v552, %v545
        %v595 = vpack.c.b16 %v553, %v546
        %v596 = vpack.c.b16 %v554, %v554
        %v597 = vpack.c.b16 %v555, %v555
        %v598 = vpack.c.b16 %v556, %v556
        %v599 = vpack.c.b16 %v557, %v557
        %v600 = vpack.c.b16 %v558, %v558
        %v601 = vpack.c.b16 %v559, %v559
        %v602 = vpack.c.b16 %v560, %v560
        %vm638 = vcmask 687104
        %v640 = vsel %vm638, %v438, 0
        %v643 = vsel %vm638, %v439, 0
        %vm645 = vcmask 1041408
        %v647 = vsel %vm645, %v596, 0
        %v650 = vsel %vm645, %v597, 0
        %v653 = vsel %vm645, %v598, 0
        %v656 = vsel %vm645, %v599, 0
        %v659 = vsel %vm645, %v600, 0
        %v662 = vsel %vm645, %v601, 0
        %v665 = vsel %vm645, %v602, 0
        %667 = vmatprep.subr.bf16.mxu0 %v562
        %668 = vmatpush1.bf16.msra.mxu0 %v561
        %669 = vmatprep.subr.bf16.mxu0 %v569
        %670 = vmatpush1.bf16.msra.mxu0 %v568
        %671 = vmatprep.subr.bf16.mxu0 %v576
        %672 = vmatpush1.bf16.msra.mxu0 %v575
        %673 = vmatprep.subr.bf16.mxu0 %v583
        %674 = vmatpush1.bf16.msra.mxu0 %v582
        %675 = vmatprep.subr.bf16.mxu0 %v590
        %676 = vmatpush1.bf16.msra.mxu0 %v589
        %677 = vmatprep.subr.bf16.mxu0 %v650
        %678 = vmatpush1.bf16.msra.mxu0 %v647
        %679 = vmatprep.subr.bf16.mxu0 0
        %680 = vmatpush1.bf16.msra.mxu0 0
        %681 = vmatprep.subr.bf16.mxu0 0
        %682 = vmatpush1.bf16.msra.mxu0 0
        %683 = vmatprep.subr.bf16.mxu0 0
        %684 = vmatpush1.bf16.msra.mxu0 0
        %685 = vmatprep.subr.bf16.mxu0 0
        %686 = vmatpush1.bf16.msra.mxu0 0
        %687 = vmatprep.subr.bf16.mxu0 0
        %688 = vmatpush1.bf16.msra.mxu0 0
        %689 = vmatprep.subr.bf16.mxu0 0
        %690 = vmatpush1.bf16.msra.mxu0 0
        %691 = vmatprep.subr.bf16.mxu0 0
        %692 = vmatpush1.bf16.msra.mxu0 0
        %693 = vmatprep.subr.bf16.mxu0 0
        %694 = vmatpush1.bf16.msra.mxu0 0
        %695 = vmatprep.subr.bf16.mxu0 0
        %696 = vmatpush1.bf16.msra.mxu0 0
        %697 = vmatprep.subr.bf16.mxu0 0
        %698 = vmatpush1.bf16.msra.mxu0 0
        %699 = vmatprep.mubr.bf16.mxu0 0
        %700 = vmatmul.mubr.bf16.gmra.mrb[0].mxu0 %v640
        %v701 = vpop.f32.mrb[0].mxu0
        %v702 = vadd.f32 %v398, %v701
        %v703 = vpop.f32.mrb[0].mxu0
        %v704 = vadd.f32 %v402, %v703
        %v705 = vpop.f32.mrb[0].mxu0
        %v706 = vadd.f32 %v398, %v705
        %v707 = vpop.f32.mrb[0].mxu0
        %v708 = vadd.f32 %v402, %v707
        %709 = vmatprep.mubr.bf16.mxu0 0
        %710 = vmatmul.mubr.bf16.gmra.mrb[0].mxu0 %v643
        %v711 = vpop.f32.mrb[0].mxu0
        %v712 = vadd.f32 %v398, %v711
        %v713 = vpop.f32.mrb[0].mxu0
        %v714 = vadd.f32 %v402, %v713
        %v715 = vpop.f32.mrb[0].mxu0
        %v716 = vadd.f32 %v398, %v715
        %v717 = vpop.f32.mrb[0].mxu0
        %v718 = vadd.f32 %v402, %v717
        %719 = vdwg.mxu0
        %720 = vmatprep.subr.bf16.mxu0 %v564
        %721 = vmatpush1.bf16.msra.mxu0 %v563
        %722 = vmatprep.subr.bf16.mxu0 %v571
        %723 = vmatpush1.bf16.msra.mxu0 %v570
        %724 = vmatprep.subr.bf16.mxu0 %v578
        %725 = vmatpush1.bf16.msra.mxu0 %v577
        %726 = vmatprep.subr.bf16.mxu0 %v585
        %727 = vmatpush1.bf16.msra.mxu0 %v584
        %728 = vmatprep.subr.bf16.mxu0 %v592
        %729 = vmatpush1.bf16.msra.mxu0 %v591
        %730 = vmatprep.subr.bf16.mxu0 %v656
        %731 = vmatpush1.bf16.msra.mxu0 %v653
        %732 = vmatprep.subr.bf16.mxu0 0
        %733 = vmatpush1.bf16.msra.mxu0 0
        %734 = vmatprep.subr.bf16.mxu0 0
        %735 = vmatpush1.bf16.msra.mxu0 0
        %736 = vmatprep.subr.bf16.mxu0 0
        %737 = vmatpush1.bf16.msra.mxu0 0
        %738 = vmatprep.subr.bf16.mxu0 0
        %739 = vmatpush1.bf16.msra.mxu0 0
        %740 = vmatprep.subr.bf16.mxu0 0
        %741 = vmatpush1.bf16.msra.mxu0 0
        %742 = vmatprep.subr.bf16.mxu0 0
        %743 = vmatpush1.bf16.msra.mxu0 0
        %744 = vmatprep.subr.bf16.mxu0 0
        %745 = vmatpush1.bf16.msra.mxu0 0
        %746 = vmatprep.subr.bf16.mxu0 0
        %747 = vmatpush1.bf16.msra.mxu0 0
        %748 = vmatprep.subr.bf16.mxu0 0
        %749 = vmatpush1.bf16.msra.mxu0 0
        %750 = vmatprep.subr.bf16.mxu0 0
        %751 = vmatpush1.bf16.msra.mxu0 0
        %752 = vmatprep.mubr.bf16.mxu0 0
        %753 = vmatmul.mubr.bf16.gmra.mrb[0].mxu0 %v640
        %v754 = vpop.f32.mrb[0].mxu0
        %v755 = vadd.f32 %v406, %v754
        %v756 = vpop.f32.mrb[0].mxu0
        %v757 = vadd.f32 %v410, %v756
        %v758 = vpop.f32.mrb[0].mxu0
        %v759 = vadd.f32 %v406, %v758
        %v760 = vpop.f32.mrb[0].mxu0
        %v761 = vadd.f32 %v410, %v760
        %762 = vmatprep.mubr.bf16.mxu0 0
        %763 = vmatmul.mubr.bf16.gmra.mrb[0].mxu0 %v643
        %v764 = vpop.f32.mrb[0].mxu0
        %v765 = vadd.f32 %v406, %v764
        %v766 = vpop.f32.mrb[0].mxu0
        %v767 = vadd.f32 %v410, %v766
        %v768 = vpop.f32.mrb[0].mxu0
        %v769 = vadd.f32 %v406, %v768
        %v770 = vpop.f32.mrb[0].mxu0
        %v771 = vadd.f32 %v410, %v770
        %772 = vdwg.mxu0
        %773 = vmatprep.subr.bf16.mxu0 %v566
        %774 = vmatpush1.bf16.msra.mxu0 %v565
        %775 = vmatprep.subr.bf16.mxu0 %v573
        %776 = vmatpush1.bf16.msra.mxu0 %v572
        %777 = vmatprep.subr.bf16.mxu0 %v580
        %778 = vmatpush1.bf16.msra.mxu0 %v579
        %779 = vmatprep.subr.bf16.mxu0 %v587
        %780 = vmatpush1.bf16.msra.mxu0 %v586
        %781 = vmatprep.subr.bf16.mxu0 %v594
        %782 = vmatpush1.bf16.msra.mxu0 %v593
        %783 = vmatprep.subr.bf16.mxu0 %v662
        %784 = vmatpush1.bf16.msra.mxu0 %v659
        %785 = vmatprep.subr.bf16.mxu0 0
        %786 = vmatpush1.bf16.msra.mxu0 0
        %787 = vmatprep.subr.bf16.mxu0 0
        %788 = vmatpush1.bf16.msra.mxu0 0
        %789 = vmatprep.subr.bf16.mxu0 0
        %790 = vmatpush1.bf16.msra.mxu0 0
        %791 = vmatprep.subr.bf16.mxu0 0
        %792 = vmatpush1.bf16.msra.mxu0 0
        %793 = vmatprep.subr.bf16.mxu0 0
        %794 = vmatpush1.bf16.msra.mxu0 0
        %795 = vmatprep.subr.bf16.mxu0 0
        %796 = vmatpush1.bf16.msra.mxu0 0
        %797 = vmatprep.subr.bf16.mxu0 0
        %798 = vmatpush1.bf16.msra.mxu0 0
        %799 = vmatprep.subr.bf16.mxu0 0
        %800 = vmatpush1.bf16.msra.mxu0 0
        %801 = vmatprep.subr.bf16.mxu0 0
        %802 = vmatpush1.bf16.msra.mxu0 0
        %803 = vmatprep.subr.bf16.mxu0 0
        %804 = vmatpush1.bf16.msra.mxu0 0
        %805 = vmatprep.mubr.bf16.mxu0 0
        %806 = vmatmul.mubr.bf16.gmra.mrb[0].mxu0 %v640
        %v807 = vpop.f32.mrb[0].mxu0
        %v808 = vadd.f32 %v414, %v807
        %v809 = vpop.f32.mrb[0].mxu0
        %v810 = vadd.f32 %v418, %v809
        %v811 = vpop.f32.mrb[0].mxu0
        %v812 = vadd.f32 %v414, %v811
        %v813 = vpop.f32.mrb[0].mxu0
        %v814 = vadd.f32 %v418, %v813
        %815 = vmatprep.mubr.bf16.mxu0 0
        %816 = vmatmul.mubr.bf16.gmra.mrb[0].mxu0 %v643
        %v817 = vpop.f32.mrb[0].mxu0
        %v818 = vadd.f32 %v414, %v817
        %v819 = vpop.f32.mrb[0].mxu0
        %v820 = vadd.f32 %v418, %v819
        %v821 = vpop.f32.mrb[0].mxu0
        %v822 = vadd.f32 %v414, %v821
        %v823 = vpop.f32.mrb[0].mxu0
        %v824 = vadd.f32 %v418, %v823
        %825 = vdwg.mxu0
        %826 = vmatprep.subr.bf16.mxu0 0
        %827 = vmatpush1.bf16.msra.mxu0 %v567
        %828 = vmatprep.subr.bf16.mxu0 0
        %829 = vmatpush1.bf16.msra.mxu0 %v574
        %830 = vmatprep.subr.bf16.mxu0 0
        %831 = vmatpush1.bf16.msra.mxu0 %v581
        %832 = vmatprep.subr.bf16.mxu0 0
        %833 = vmatpush1.bf16.msra.mxu0 %v588
        %834 = vmatprep.subr.bf16.mxu0 0
        %835 = vmatpush1.bf16.msra.mxu0 %v595
        %836 = vmatprep.subr.bf16.mxu0 0
        %837 = vmatpush1.bf16.msra.mxu0 %v665
        %838 = vmatprep.subr.bf16.mxu0 0
        %839 = vmatpush1.bf16.msra.mxu0 0
        %840 = vmatprep.subr.bf16.mxu0 0
        %841 = vmatpush1.bf16.msra.mxu0 0
        %842 = vmatprep.subr.bf16.mxu0 0
        %843 = vmatpush1.bf16.msra.mxu0 0
        %844 = vmatprep.subr.bf16.mxu0 0
        %845 = vmatpush1.bf16.msra.mxu0 0
        %846 = vmatprep.subr.bf16.mxu0 0
        %847 = vmatpush1.bf16.msra.mxu0 0
        %848 = vmatprep.subr.bf16.mxu0 0
        %849 = vmatpush1.bf16.msra.mxu0 0
        %850 = vmatprep.subr.bf16.mxu0 0
        %851 = vmatpush1.bf16.msra.mxu0 0
        %852 = vmatprep.subr.bf16.mxu0 0
        %853 = vmatpush1.bf16.msra.mxu0 0
        %854 = vmatprep.subr.bf16.mxu0 0
        %855 = vmatpush1.bf16.msra.mxu0 0
        %856 = vmatprep.subr.bf16.mxu0 0
        %857 = vmatpush1.bf16.msra.mxu0 0
        %858 = vmatprep.mubr.bf16.mxu0 0
        %859 = vmatmul.mubr.bf16.gmra.mrb[0].mxu0 %v640
        %v860 = vpop.f32.mrb[0].mxu0
        %v861 = vadd.f32 %v422, %v860
        %v862 = vpop.f32.mrb[0].mxu0
        %v863 = vpop.f32.mrb[0].mxu0
        %v864 = vadd.f32 %v422, %v863
        %v865 = vpop.f32.mrb[0].mxu0
        %866 = vmatprep.mubr.bf16.mxu0 0
        %867 = vmatmul.mubr.bf16.gmra.mrb[0].mxu0 %v643
        %v868 = vpop.f32.mrb[0].mxu0
        %v869 = vadd.f32 %v422, %v868
        %v870 = vpop.f32.mrb[0].mxu0
        %v871 = vpop.f32.mrb[0].mxu0
        %v872 = vadd.f32 %v422, %v871
        %v873 = vpop.f32.mrb[0].mxu0
        %874 = vdwg.mxu0
        %v875 = vmax.f32 %v702, 0.0
        %v876 = vmax.f32 %v704, 0.0
        %v877 = vmax.f32 %v755, 0.0
        %v878 = vmax.f32 %v757, 0.0
        %v879 = vmax.f32 %v808, 0.0
        %v880 = vmax.f32 %v810, 0.0
        %v881 = vmax.f32 %v861, 0.0
        %v882 = vmax.f32 %v706, 0.0
        %v883 = vmax.f32 %v708, 0.0
        %v884 = vmax.f32 %v759, 0.0
        %v885 = vmax.f32 %v761, 0.0
        %v886 = vmax.f32 %v812, 0.0
        %v887 = vmax.f32 %v814, 0.0
        %v888 = vmax.f32 %v864, 0.0
        %v889 = vmax.f32 %v712, 0.0
        %v890 = vmax.f32 %v714, 0.0
        %v891 = vmax.f32 %v765, 0.0
        %v892 = vmax.f32 %v767, 0.0
        %v893 = vmax.f32 %v818, 0.0
        %v894 = vmax.f32 %v820, 0.0
        %v895 = vmax.f32 %v869, 0.0
        %v896 = vmax.f32 %v716, 0.0
        %v897 = vmax.f32 %v718, 0.0
        %v898 = vmax.f32 %v769, 0.0
        %v899 = vmax.f32 %v771, 0.0
        %v900 = vmax.f32 %v822, 0.0
        %v901 = vmax.f32 %v824, 0.0
        %v902 = vmax.f32 %v872, 0.0
        %v903 = vsel %vm389, 1, 0
        %v904 = vsel %vm390, 1, 0
        %v905 = vsel %vm391, 1, 0
        %v906 = vsel %vm392, 1, 0
        %vm907 = vcmp.eq.s32.totalorder %v903, 1
        %vm908 = vcmp.eq.s32.totalorder %v904, 1
        %vm909 = vcmp.eq.s32.totalorder %v905, 1
        %vm910 = vcmp.eq.s32.totalorder %v906, 1
        %v911 = vsel %vm907, %v875, 0.0
        %v912 = vsel %vm907, %v876, 0.0
        %v913 = vsel %vm907, %v877, 0.0
        %v914 = vsel %vm907, %v878, 0.0
        %v915 = vsel %vm907, %v879, 0.0
        %v916 = vsel %vm907, %v880, 0.0
        %v917 = vsel %vm907, %v881, 0.0
        %v918 = vsel %vm908, %v882, 0.0
        %v919 = vsel %vm908, %v883, 0.0
        %v920 = vsel %vm908, %v884, 0.0
        %v921 = vsel %vm908, %v885, 0.0
        %v922 = vsel %vm908, %v886, 0.0
        %v923 = vsel %vm908, %v887, 0.0
        %v924 = vsel %vm908, %v888, 0.0
        %v925 = vsel %vm909, %v889, 0.0
        %v926 = vsel %vm909, %v890, 0.0
        %v927 = vsel %vm909, %v891, 0.0
        %v928 = vsel %vm909, %v892, 0.0
        %v929 = vsel %vm909, %v893, 0.0
        %v930 = vsel %vm909, %v894, 0.0
        %v931 = vsel %vm909, %v895, 0.0
        %v932 = vsel %vm910, %v896, 0.0
        %v933 = vsel %vm910, %v897, 0.0
        %v934 = vsel %vm910, %v898, 0.0
        %v935 = vsel %vm910, %v899, 0.0
        %v936 = vsel %vm910, %v900, 0.0
        %v937 = vsel %vm910, %v901, 0.0
        %v938 = vsel %vm910, %v902, 0.0
        %v939 = vpack.c.bf16 %v918, %v911
        %v940 = vpack.c.bf16 %v919, %v912
        %v941 = vpack.c.bf16 %v920, %v913
        %v942 = vpack.c.bf16 %v921, %v914
        %v943 = vpack.c.bf16 %v922, %v915
        %v944 = vpack.c.bf16 %v923, %v916
        %v945 = vpack.c.bf16 %v924, %v917
        %v946 = vpack.c.bf16 %v932, %v925
        %v947 = vpack.c.bf16 %v933, %v926
        %v948 = vpack.c.bf16 %v934, %v927
        %v949 = vpack.c.bf16 %v935, %v928
        %v950 = vpack.c.bf16 %v936, %v929
        %v951 = vpack.c.bf16 %v937, %v930
        %v952 = vpack.c.bf16 %v938, %v931
        %v953 = vld [vmem:[%s3] sm:$0xf]
        %v954 = vld [vmem:[%s3 + $0x4] sm:$0xf]
        %v955 = vld [vmem:[%s3 + $0x8] sm:$0xf]
        %v956 = vld [vmem:[%s3 + $0xc] sm:$0xf]
        %v957 = vld [vmem:[%s3 + $0x10] sm:$0xf]
        %v958 = vld [vmem:[%s3 + $0x14] sm:$0xf]
        %v959 = vld [vmem:[%s3 + $0x18] sm:$0xf]
        %v960 = vld [vmem:[%s3 + $0x1c] sm:$0xf]
        %v961 = vld [vmem:[%s3 + $0x20] sm:$0xf]
        %v962 = vld [vmem:[%s3 + $0x24] sm:$0xf]
        %v963 = vld [vmem:[%s3 + $0x28] sm:$0xf]
        %v964 = vld [vmem:[%s3 + $0x2c] sm:$0xf]
        %v965 = vld [vmem:[%s3 + $0x30] sm:$0xf]
        %v966 = vld [vmem:[%s3 + $0x34] sm:$0xf]
        %v967 = vld [vmem:[%s3 + $0x38] sm:$0xf]
        %v968 = vld [vmem:[%s3 + $0x3c] sm:$0xf]
        %v969 = vld [vmem:[%s3 + $0x40] sm:$0xf]
        %v970 = vld [vmem:[%s3 + $0x44] sm:$0xf]
        %v971 = vld [vmem:[%s3 + $0x48] sm:$0xf]
        %v972 = vld [vmem:[%s3 + $0x4c] sm:$0xf]
        %v973 = vld [vmem:[%s3 + $0x50] sm:$0xf]
        %v974 = vld [vmem:[%s3 + $0x54] sm:$0xf]
        %v975 = vld [vmem:[%s3 + $0x58] sm:$0xf]
        %v976 = vld [vmem:[%s3 + $0x5c] sm:$0xf]
        %v977 = vld [vmem:[%s3 + $0x60] sm:$0xf]
        %v978 = vld [vmem:[%s3 + $0x64] sm:$0xf]
        %v979 = vld [vmem:[%s3 + $0x68] sm:$0xf]
        %v980 = vld [vmem:[%s3 + $0x6c] sm:$0xf]
        %v981 = vld [vmem:[%s3 + $0x70] sm:$0xf]
        %v982 = vld [vmem:[%s3 + $0x74] sm:$0xf]
        %v983 = vld [vmem:[%s3 + $0x78] sm:$0xf]
        %v984 = vld [vmem:[%s3 + $0x7c] sm:$0xf]
        %v985 = vld [vmem:[%s3 + $0x80] sm:$0xf]
        %v986 = vld [vmem:[%s3 + $0x84] sm:$0xf]
        %v987 = vld [vmem:[%s3 + $0x88] sm:$0xf]
        %v988 = vld [vmem:[%s3 + $0x8c] sm:$0xf]
        %v989 = vld [vmem:[%s3 + $0x90] sm:$0xf]
        %v990 = vld [vmem:[%s3 + $0x94] sm:$0xf]
        %v991 = vld [vmem:[%s3 + $0x98] sm:$0xf]
        %v992 = vld [vmem:[%s3 + $0x9c] sm:$0xf]
        %v993 = vld [vmem:[%s3 + $0xa0] sm:$0xf]
        %v994 = vld [vmem:[%s3 + $0xa4] sm:$0xf]
        %v995 = vld [vmem:[%s3 + $0xa8] sm:$0xf]
        %v996 = vld [vmem:[%s3 + $0xac] sm:$0xf]
        %v997 = vld [vmem:[%s3 + $0xb0] sm:$0xf]
        %v998 = vld [vmem:[%s3 + $0xb4] sm:$0xf]
        %v999 = vld [vmem:[%s3 + $0xb8] sm:$0xf]
        %v1000 = vld [vmem:[%s3 + $0xbc] sm:$0xf]
        %v1001 = vld [vmem:[%s3 + $0xc0] sm:$0xf]
        %v1002 = vld [vmem:[%s3 + $0xc4] sm:$0xf]
        %v1003 = vld [vmem:[%s3 + $0xc8] sm:$0xf]
        %v1004 = vld [vmem:[%s3 + $0xcc] sm:$0xf]
        %v1005 = vld [vmem:[%s3 + $0xd0] sm:$0xf]
        %v1006 = vld [vmem:[%s3 + $0xd4] sm:$0xf]
        %v1007 = vld [vmem:[%s3 + $0xd8] sm:$0xf]
        %v1008 = vld [vmem:[%s3 + $0xdc] sm:$0xf]
        %v1009 = vld [vmem:[%s3 + $0xe0] sm:$0xf]
        %v1010 = vld [vmem:[%s3 + $0xe4] sm:$0xf]
        %v1011 = vld [vmem:[%s3 + $0xe8] sm:$0xf]
        %v1012 = vld [vmem:[%s3 + $0xec] sm:$0xf]
        %v1013 = vld [vmem:[%s3 + $0xf0] sm:$0xf]
        %v1014 = vld [vmem:[%s3 + $0xf4] sm:$0xf]
        %v1015 = vld [vmem:[%s3 + $0xf8] sm:$0xf]
        %v1016 = vld [vmem:[%s3 + $0xfc] sm:$0xf]
        %v1017 = vld [vmem:[%s3 + $0x100] sm:$0xf]
        %v1018 = vld [vmem:[%s3 + $0x104] sm:$0xf]
        %v1019 = vld [vmem:[%s3 + $0x108] sm:$0xf]
        %v1020 = vld [vmem:[%s3 + $0x10c] sm:$0xf]
        %v1021 = vld [vmem:[%s3 + $0x110] sm:$0xf]
        %v1022 = vld [vmem:[%s3 + $0x114] sm:$0xf]
        %v1023 = vld [vmem:[%s3 + $0x118] sm:$0xf]
        %v1024 = vld [vmem:[%s3 + $0x11c] sm:$0xf]
        %v1025 = vld [vmem:[%s3 + $0x120] sm:$0xf]
        %v1026 = vld [vmem:[%s3 + $0x124] sm:$0xf]
        %v1027 = vld [vmem:[%s3 + $0x128] sm:$0xf]
        %v1028 = vld [vmem:[%s3 + $0x12c] sm:$0xf]
        %v1029 = vld [vmem:[%s3 + $0x130] sm:$0xf]
        %v1030 = vld [vmem:[%s3 + $0x134] sm:$0xf]
        %v1031 = vld [vmem:[%s3 + $0x138] sm:$0xf]
        %v1032 = vld [vmem:[%s3 + $0x13c] sm:$0xf]
        %v1033 = vld [vmem:[%s3 + $0x140] sm:$0xf]
        %v1034 = vld [vmem:[%s3 + $0x144] sm:$0xf]
        %v1035 = vld [vmem:[%s3 + $0x148] sm:$0xf]
        %v1036 = vld [vmem:[%s3 + $0x14c] sm:$0xf]
        %v1037 = vld [vmem:[%s3 + $0x150] sm:$0xf]
        %v1038 = vld [vmem:[%s3 + $0x154] sm:$0xf]
        %v1039 = vld [vmem:[%s3 + $0x158] sm:$0xf]
        %v1040 = vld [vmem:[%s3 + $0x15c] sm:$0xf]
        %v1041 = vld [vmem:[%s3 + $0x160] sm:$0xf]
        %v1042 = vld [vmem:[%s3 + $0x164] sm:$0xf]
        %v1043 = vld [vmem:[%s3 + $0x168] sm:$0xf]
        %v1044 = vld [vmem:[%s3 + $0x16c] sm:$0xf]
        %v1045 = vld [vmem:[%s3 + $0x170] sm:$0xf]
        %v1046 = vld [vmem:[%s3 + $0x174] sm:$0xf]
        %v1047 = vld [vmem:[%s3 + $0x178] sm:$0xf]
        %v1048 = vld [vmem:[%s3 + $0x17c] sm:$0xf]
        %v1049 = vld [vmem:[%s3 + $0x180] sm:$0xf]
        %v1050 = vld [vmem:[%s3 + $0x184] sm:$0xf]
        %v1051 = vld [vmem:[%s3 + $0x188] sm:$0xf]
        %v1052 = vld [vmem:[%s3 + $0x18c] sm:$0xf]
        %v1053 = vld [vmem:[%s3 + $0x190] sm:$0xf]
        %v1054 = vld [vmem:[%s3 + $0x194] sm:$0xf]
        %v1055 = vld [vmem:[%s3 + $0x198] sm:$0xf]
        %v1056 = vld [vmem:[%s3 + $0x19c] sm:$0xf]
        %v1057 = vld [vmem:[%s3 + $0x1a0] sm:$0xf]
        %v1058 = vld [vmem:[%s3 + $0x1a4] sm:$0xf]
        %v1059 = vld [vmem:[%s3 + $0x1a8] sm:$0xf]
        %v1060 = vld [vmem:[%s3 + $0x1ac] sm:$0xf]
        %v1061 = vld [vmem:[%s3 + $0x1b0] sm:$0xf]
        %v1062 = vld [vmem:[%s3 + $0x1b4] sm:$0xf]
        %v1063 = vld [vmem:[%s3 + $0x1b8] sm:$0xf]
        %v1064 = vld [vmem:[%s3 + $0x1bc] sm:$0xf]
        %v1177 = vunpack.c.l.b16 %v953
        %v1178 = vunpack.c.l.b16 %v954
        %v1179 = vunpack.c.l.b16 %v955
        %v1180 = vunpack.c.l.b16 %v956
        %v1181 = vunpack.c.l.b16 %v957
        %v1182 = vunpack.c.l.b16 %v958
        %v1183 = vunpack.c.l.b16 %v959
        %v1184 = vunpack.c.l.b16 %v960
        %v1185 = vunpack.c.l.b16 %v961
        %v1186 = vunpack.c.l.b16 %v962
        %v1187 = vunpack.c.l.b16 %v963
        %v1188 = vunpack.c.l.b16 %v964
        %v1189 = vunpack.c.l.b16 %v965
        %v1190 = vunpack.c.l.b16 %v966
        %v1191 = vunpack.c.l.b16 %v967
        %v1192 = vunpack.c.l.b16 %v968
        %v1193 = vunpack.c.l.b16 %v969
        %v1194 = vunpack.c.l.b16 %v970
        %v1195 = vunpack.c.l.b16 %v971
        %v1196 = vunpack.c.l.b16 %v972
        %v1197 = vunpack.c.l.b16 %v973
        %v1198 = vunpack.c.l.b16 %v974
        %v1199 = vunpack.c.l.b16 %v975
        %v1200 = vunpack.c.l.b16 %v976
        %v1201 = vunpack.c.l.b16 %v977
        %v1202 = vunpack.c.l.b16 %v978
        %v1203 = vunpack.c.l.b16 %v979
        %v1204 = vunpack.c.l.b16 %v980
        %v1205 = vunpack.c.l.b16 %v981
        %v1206 = vunpack.c.l.b16 %v982
        %v1207 = vunpack.c.l.b16 %v983
        %v1208 = vunpack.c.l.b16 %v984
        %v1209 = vunpack.c.l.b16 %v985
        %v1210 = vunpack.c.l.b16 %v986
        %v1211 = vunpack.c.l.b16 %v987
        %v1212 = vunpack.c.l.b16 %v988
        %v1213 = vunpack.c.l.b16 %v989
        %v1214 = vunpack.c.l.b16 %v990
        %v1215 = vunpack.c.l.b16 %v991
        %v1216 = vunpack.c.l.b16 %v992
        %v1217 = vunpack.c.l.b16 %v993
        %v1218 = vunpack.c.l.b16 %v994
        %v1219 = vunpack.c.l.b16 %v995
        %v1220 = vunpack.c.l.b16 %v996
        %v1221 = vunpack.c.l.b16 %v997
        %v1222 = vunpack.c.l.b16 %v998
        %v1223 = vunpack.c.l.b16 %v999
        %v1224 = vunpack.c.l.b16 %v1000
        %v1225 = vunpack.c.l.b16 %v1001
        %v1226 = vunpack.c.l.b16 %v1002
        %v1227 = vunpack.c.l.b16 %v1003
        %v1228 = vunpack.c.l.b16 %v1004
        %v1229 = vunpack.c.l.b16 %v1005
        %v1230 = vunpack.c.l.b16 %v1006
        %v1231 = vunpack.c.l.b16 %v1007
        %v1232 = vunpack.c.l.b16 %v1008
        %v1233 = vunpack.c.l.b16 %v1009
        %v1234 = vunpack.c.l.b16 %v1010
        %v1235 = vunpack.c.l.b16 %v1011
        %v1236 = vunpack.c.l.b16 %v1012
        %v1237 = vunpack.c.l.b16 %v1013
        %v1238 = vunpack.c.l.b16 %v1014
        %v1239 = vunpack.c.l.b16 %v1015
        %v1240 = vunpack.c.l.b16 %v1016
        %v1241 = vunpack.c.l.b16 %v1017
        %v1242 = vunpack.c.l.b16 %v1018
        %v1243 = vunpack.c.l.b16 %v1019
        %v1244 = vunpack.c.l.b16 %v1020
        %v1245 = vunpack.c.l.b16 %v1021
        %v1246 = vunpack.c.l.b16 %v1022
        %v1247 = vunpack.c.l.b16 %v1023
        %v1248 = vunpack.c.l.b16 %v1024
        %v1249 = vunpack.c.l.b16 %v1025
        %v1250 = vunpack.c.l.b16 %v1026
        %v1251 = vunpack.c.l.b16 %v1027
        %v1252 = vunpack.c.l.b16 %v1028
        %v1253 = vunpack.c.l.b16 %v1029
        %v1254 = vunpack.c.l.b16 %v1030
        %v1255 = vunpack.c.l.b16 %v1031
        %v1256 = vunpack.c.l.b16 %v1032
        %v1257 = vunpack.c.l.b16 %v1033
        %v1258 = vunpack.c.l.b16 %v1034
        %v1259 = vunpack.c.l.b16 %v1035
        %v1260 = vunpack.c.l.b16 %v1036
        %v1261 = vunpack.c.l.b16 %v1037
        %v1262 = vunpack.c.l.b16 %v1038
        %v1263 = vunpack.c.l.b16 %v1039
        %v1264 = vunpack.c.l.b16 %v1040
        %v1265 = vunpack.c.l.b16 %v1041
        %v1266 = vunpack.c.l.b16 %v1042
        %v1267 = vunpack.c.l.b16 %v1043
        %v1268 = vunpack.c.l.b16 %v1044
        %v1269 = vunpack.c.l.b16 %v1045
        %v1270 = vunpack.c.l.b16 %v1046
        %v1271 = vunpack.c.l.b16 %v1047
        %v1272 = vunpack.c.l.b16 %v1048
        %v1273 = vunpack.c.l.b16 %v1049
        %v1274 = vunpack.c.l.b16 %v1050
        %v1275 = vunpack.c.l.b16 %v1051
        %v1276 = vunpack.c.l.b16 %v1052
        %v1277 = vunpack.c.l.b16 %v1053
        %v1278 = vunpack.c.l.b16 %v1054
        %v1279 = vunpack.c.l.b16 %v1055
        %v1280 = vunpack.c.l.b16 %v1056
        %v1281 = vunpack.c.l.b16 %v1057
        %v1282 = vunpack.c.l.b16 %v1058
        %v1283 = vunpack.c.l.b16 %v1059
        %v1284 = vunpack.c.l.b16 %v1060
        %v1285 = vunpack.c.l.b16 %v1061
        %v1286 = vunpack.c.l.b16 %v1062
        %v1287 = vunpack.c.l.b16 %v1063
        %v1288 = vunpack.c.l.b16 %v1064
        %v1289 = vpack.c.b16 %v1178, %v1177
        %v1290 = vpack.c.b16 %v1180, %v1179
        %v1291 = vpack.c.b16 %v1182, %v1181
        %v1292 = vpack.c.b16 %v1184, %v1183
        %v1293 = vpack.c.b16 %v1186, %v1185
        %v1294 = vpack.c.b16 %v1188, %v1187
        %v1295 = vpack.c.b16 %v1190, %v1189
        %v1296 = vpack.c.b16 %v1192, %v1191
        %v1297 = vpack.c.b16 %v1194, %v1193
        %v1298 = vpack.c.b16 %v1196, %v1195
        %v1299 = vpack.c.b16 %v1198, %v1197
        %v1300 = vpack.c.b16 %v1200, %v1199
        %v1301 = vpack.c.b16 %v1202, %v1201
        %v1302 = vpack.c.b16 %v1204, %v1203
        %v1303 = vpack.c.b16 %v1206, %v1205
        %v1304 = vpack.c.b16 %v1208, %v1207
        %v1305 = vpack.c.b16 %v1210, %v1209
        %v1306 = vpack.c.b16 %v1212, %v1211
        %v1307 = vpack.c.b16 %v1214, %v1213
        %v1308 = vpack.c.b16 %v1216, %v1215
        %v1309 = vpack.c.b16 %v1218, %v1217
        %v1310 = vpack.c.b16 %v1220, %v1219
        %v1311 = vpack.c.b16 %v1222, %v1221
        %v1312 = vpack.c.b16 %v1224, %v1223
        %v1313 = vpack.c.b16 %v1226, %v1225
        %v1314 = vpack.c.b16 %v1228, %v1227
        %v1315 = vpack.c.b16 %v1230, %v1229
        %v1316 = vpack.c.b16 %v1232, %v1231
        %v1317 = vpack.c.b16 %v1234, %v1233
        %v1318 = vpack.c.b16 %v1236, %v1235
        %v1319 = vpack.c.b16 %v1238, %v1237
        %v1320 = vpack.c.b16 %v1240, %v1239
        %v1321 = vpack.c.b16 %v1242, %v1241
        %v1322 = vpack.c.b16 %v1244, %v1243
        %v1323 = vpack.c.b16 %v1246, %v1245
        %v1324 = vpack.c.b16 %v1248, %v1247
        %v1325 = vpack.c.b16 %v1250, %v1249
        %v1326 = vpack.c.b16 %v1252, %v1251
        %v1327 = vpack.c.b16 %v1254, %v1253
        %v1328 = vpack.c.b16 %v1256, %v1255
        %v1329 = vpack.c.b16 %v1258, %v1257
        %v1330 = vpack.c.b16 %v1260, %v1259
        %v1331 = vpack.c.b16 %v1262, %v1261
        %v1332 = vpack.c.b16 %v1264, %v1263
        %v1333 = vpack.c.b16 %v1266, %v1265
        %v1334 = vpack.c.b16 %v1268, %v1267
        %v1335 = vpack.c.b16 %v1270, %v1269
        %v1336 = vpack.c.b16 %v1272, %v1271
        %v1337 = vpack.c.b16 %v1274, %v1273
        %v1338 = vpack.c.b16 %v1276, %v1275
        %v1339 = vpack.c.b16 %v1278, %v1277
        %v1340 = vpack.c.b16 %v1280, %v1279
        %v1341 = vpack.c.b16 %v1282, %v1281
        %v1342 = vpack.c.b16 %v1284, %v1283
        %v1343 = vpack.c.b16 %v1286, %v1285
        %v1344 = vpack.c.b16 %v1288, %v1287
        %1401 = vmatprep.subr.bf16.mxu0 0
        %1402 = vmatpush1.bf16.msra.mxu0 %v1289
        %1403 = vmatprep.subr.bf16.mxu0 0
        %1404 = vmatpush1.bf16.msra.mxu0 %v1290
        %1405 = vmatprep.subr.bf16.mxu0 0
        %1406 = vmatpush1.bf16.msra.mxu0 %v1291
        %1407 = vmatprep.subr.bf16.mxu0 0
        %1408 = vmatpush1.bf16.msra.mxu0 %v1292
        %1409 = vmatprep.subr.bf16.mxu0 0
        %1410 = vmatpush1.bf16.msra.mxu0 %v1293
        %1411 = vmatprep.subr.bf16.mxu0 0
        %1412 = vmatpush1.bf16.msra.mxu0 %v1294
        %1413 = vmatprep.subr.bf16.mxu0 0
        %1414 = vmatpush1.bf16.msra.mxu0 %v1295
        %1415 = vmatprep.subr.bf16.mxu0 0
        %1416 = vmatpush1.bf16.msra.mxu0 %v1296
        %1417 = vmatprep.subr.bf16.mxu0 0
        %1418 = vmatpush1.bf16.msra.mxu0 %v1297
        %1419 = vmatprep.subr.bf16.mxu0 0
        %1420 = vmatpush1.bf16.msra.mxu0 %v1298
        %1421 = vmatprep.subr.bf16.mxu0 0
        %1422 = vmatpush1.bf16.msra.mxu0 %v1299
        %1423 = vmatprep.subr.bf16.mxu0 0
        %1424 = vmatpush1.bf16.msra.mxu0 %v1300
        %1425 = vmatprep.subr.bf16.mxu0 0
        %1426 = vmatpush1.bf16.msra.mxu0 %v1301
        %1427 = vmatprep.subr.bf16.mxu0 0
        %1428 = vmatpush1.bf16.msra.mxu0 %v1302
        %1429 = vmatprep.subr.bf16.mxu0 0
        %1430 = vmatpush1.bf16.msra.mxu0 %v1303
        %1431 = vmatprep.subr.bf16.mxu0 0
        %1432 = vmatpush1.bf16.msra.mxu0 %v1304
        %1433 = vmatprep.mubr.bf16.mxu0 %v940
        %1434 = vmatmul.mubr.bf16.gmra.mrb[0].mxu0 %v939
        %v1435 = vpop.f32.mrb[0].mxu0
        %v1436 = vadd.f32 0.0, %v1435
        %v1437 = vpop.f32.mrb[0].mxu0
        %v1438 = vpop.f32.mrb[0].mxu0
        %v1439 = vadd.f32 0.0, %v1438
        %v1440 = vpop.f32.mrb[0].mxu0
        %1441 = vmatprep.mubr.bf16.mxu0 %v947
        %1442 = vmatmul.mubr.bf16.gmra.mrb[0].mxu0 %v946
        %v1443 = vpop.f32.mrb[0].mxu0
        %v1444 = vadd.f32 0.0, %v1443
        %v1445 = vpop.f32.mrb[0].mxu0
        %v1446 = vpop.f32.mrb[0].mxu0
        %v1447 = vadd.f32 0.0, %v1446
        %v1448 = vpop.f32.mrb[0].mxu0
        %1449 = vdwg.mxu0
        %1450 = vmatprep.subr.bf16.mxu0 0
        %1451 = vmatpush1.bf16.msra.mxu0 %v1305
        %1452 = vmatprep.subr.bf16.mxu0 0
        %1453 = vmatpush1.bf16.msra.mxu0 %v1306
        %1454 = vmatprep.subr.bf16.mxu0 0
        %1455 = vmatpush1.bf16.msra.mxu0 %v1307
        %1456 = vmatprep.subr.bf16.mxu0 0
        %1457 = vmatpush1.bf16.msra.mxu0 %v1308
        %1458 = vmatprep.subr.bf16.mxu0 0
        %1459 = vmatpush1.bf16.msra.mxu0 %v1309
        %1460 = vmatprep.subr.bf16.mxu0 0
        %1461 = vmatpush1.bf16.msra.mxu0 %v1310
        %1462 = vmatprep.subr.bf16.mxu0 0
        %1463 = vmatpush1.bf16.msra.mxu0 %v1311
        %1464 = vmatprep.subr.bf16.mxu0 0
        %1465 = vmatpush1.bf16.msra.mxu0 %v1312
        %1466 = vmatprep.subr.bf16.mxu0 0
        %1467 = vmatpush1.bf16.msra.mxu0 %v1313
        %1468 = vmatprep.subr.bf16.mxu0 0
        %1469 = vmatpush1.bf16.msra.mxu0 %v1314
        %1470 = vmatprep.subr.bf16.mxu0 0
        %1471 = vmatpush1.bf16.msra.mxu0 %v1315
        %1472 = vmatprep.subr.bf16.mxu0 0
        %1473 = vmatpush1.bf16.msra.mxu0 %v1316
        %1474 = vmatprep.subr.bf16.mxu0 0
        %1475 = vmatpush1.bf16.msra.mxu0 %v1317
        %1476 = vmatprep.subr.bf16.mxu0 0
        %1477 = vmatpush1.bf16.msra.mxu0 %v1318
        %1478 = vmatprep.subr.bf16.mxu0 0
        %1479 = vmatpush1.bf16.msra.mxu0 %v1319
        %1480 = vmatprep.subr.bf16.mxu0 0
        %1481 = vmatpush1.bf16.msra.mxu0 %v1320
        %1482 = vmatprep.mubr.bf16.mxu0 %v942
        %1483 = vmatmul.mubr.bf16.gmra.mrb[0].mxu0 %v941
        %v1484 = vpop.f32.mrb[0].mxu0
        %v1485 = vadd.f32 %v1436, %v1484
        %v1486 = vpop.f32.mrb[0].mxu0
        %v1487 = vpop.f32.mrb[0].mxu0
        %v1488 = vadd.f32 %v1439, %v1487
        %v1489 = vpop.f32.mrb[0].mxu0
        %1490 = vmatprep.mubr.bf16.mxu0 %v949
        %1491 = vmatmul.mubr.bf16.gmra.mrb[0].mxu0 %v948
        %v1492 = vpop.f32.mrb[0].mxu0
        %v1493 = vadd.f32 %v1444, %v1492
        %v1494 = vpop.f32.mrb[0].mxu0
        %v1495 = vpop.f32.mrb[0].mxu0
        %v1496 = vadd.f32 %v1447, %v1495
        %v1497 = vpop.f32.mrb[0].mxu0
        %1498 = vdwg.mxu0
        %1499 = vmatprep.subr.bf16.mxu0 0
        %1500 = vmatpush1.bf16.msra.mxu0 %v1321
        %1501 = vmatprep.subr.bf16.mxu0 0
        %1502 = vmatpush1.bf16.msra.mxu0 %v1322
        %1503 = vmatprep.subr.bf16.mxu0 0
        %1504 = vmatpush1.bf16.msra.mxu0 %v1323
        %1505 = vmatprep.subr.bf16.mxu0 0
        %1506 = vmatpush1.bf16.msra.mxu0 %v1324
        %1507 = vmatprep.subr.bf16.mxu0 0
        %1508 = vmatpush1.bf16.msra.mxu0 %v1325
        %1509 = vmatprep.subr.bf16.mxu0 0
        %1510 = vmatpush1.bf16.msra.mxu0 %v1326
        %1511 = vmatprep.subr.bf16.mxu0 0
        %1512 = vmatpush1.bf16.msra.mxu0 %v1327
        %1513 = vmatprep.subr.bf16.mxu0 0
        %1514 = vmatpush1.bf16.msra.mxu0 %v1328
        %1515 = vmatprep.subr.bf16.mxu0 0
        %1516 = vmatpush1.bf16.msra.mxu0 %v1329
        %1517 = vmatprep.subr.bf16.mxu0 0
        %1518 = vmatpush1.bf16.msra.mxu0 %v1330
        %1519 = vmatprep.subr.bf16.mxu0 0
        %1520 = vmatpush1.bf16.msra.mxu0 %v1331
        %1521 = vmatprep.subr.bf16.mxu0 0
        %1522 = vmatpush1.bf16.msra.mxu0 %v1332
        %1523 = vmatprep.subr.bf16.mxu0 0
        %1524 = vmatpush1.bf16.msra.mxu0 %v1333
        %1525 = vmatprep.subr.bf16.mxu0 0
        %1526 = vmatpush1.bf16.msra.mxu0 %v1334
        %1527 = vmatprep.subr.bf16.mxu0 0
        %1528 = vmatpush1.bf16.msra.mxu0 %v1335
        %1529 = vmatprep.subr.bf16.mxu0 0
        %1530 = vmatpush1.bf16.msra.mxu0 %v1336
        %1531 = vmatprep.mubr.bf16.mxu0 %v944
        %1532 = vmatmul.mubr.bf16.gmra.mrb[0].mxu0 %v943
        %v1533 = vpop.f32.mrb[0].mxu0
        %v1534 = vadd.f32 %v1485, %v1533
        %v1535 = vpop.f32.mrb[0].mxu0
        %v1536 = vpop.f32.mrb[0].mxu0
        %v1537 = vadd.f32 %v1488, %v1536
        %v1538 = vpop.f32.mrb[0].mxu0
        %1539 = vmatprep.mubr.bf16.mxu0 %v951
        %1540 = vmatmul.mubr.bf16.gmra.mrb[0].mxu0 %v950
        %v1541 = vpop.f32.mrb[0].mxu0
        %v1542 = vadd.f32 %v1493, %v1541
        %v1543 = vpop.f32.mrb[0].mxu0
        %v1544 = vpop.f32.mrb[0].mxu0
        %v1545 = vadd.f32 %v1496, %v1544
        %v1546 = vpop.f32.mrb[0].mxu0
        %1547 = vdwg.mxu0
        %1548 = vmatprep.subr.bf16.mxu0 0
        %1549 = vmatpush1.bf16.msra.mxu0 %v1337
        %1550 = vmatprep.subr.bf16.mxu0 0
        %1551 = vmatpush1.bf16.msra.mxu0 %v1338
        %1552 = vmatprep.subr.bf16.mxu0 0
        %1553 = vmatpush1.bf16.msra.mxu0 %v1339
        %1554 = vmatprep.subr.bf16.mxu0 0
        %1555 = vmatpush1.bf16.msra.mxu0 %v1340
        %1556 = vmatprep.subr.bf16.mxu0 0
        %1557 = vmatpush1.bf16.msra.mxu0 %v1341
        %1558 = vmatprep.subr.bf16.mxu0 0
        %1559 = vmatpush1.bf16.msra.mxu0 %v1342
        %1560 = vmatprep.subr.bf16.mxu0 0
        %1561 = vmatpush1.bf16.msra.mxu0 %v1343
        %1562 = vmatprep.subr.bf16.mxu0 0
        %1563 = vmatpush1.bf16.msra.mxu0 %v1344
        %1564 = vmatprep.subr.bf16.mxu0 0
        %1565 = vmatpush1.bf16.msra.mxu0 0
        %1566 = vmatprep.subr.bf16.mxu0 0
        %1567 = vmatpush1.bf16.msra.mxu0 0
        %1568 = vmatprep.subr.bf16.mxu0 0
        %1569 = vmatpush1.bf16.msra.mxu0 0
        %1570 = vmatprep.subr.bf16.mxu0 0
        %1571 = vmatpush1.bf16.msra.mxu0 0
        %1572 = vmatprep.subr.bf16.mxu0 0
        %1573 = vmatpush1.bf16.msra.mxu0 0
        %1574 = vmatprep.subr.bf16.mxu0 0
        %1575 = vmatpush1.bf16.msra.mxu0 0
        %1576 = vmatprep.subr.bf16.mxu0 0
        %1577 = vmatpush1.bf16.msra.mxu0 0
        %1578 = vmatprep.subr.bf16.mxu0 0
        %1579 = vmatpush1.bf16.msra.mxu0 0
        %1580 = vmatprep.mubr.bf16.mxu0 0
        %1581 = vmatmul.mubr.bf16.gmra.mrb[0].mxu0 %v945
        %v1582 = vpop.f32.mrb[0].mxu0
        %v1583 = vadd.f32 %v1534, %v1582
        %v1584 = vpop.f32.mrb[0].mxu0
        %v1585 = vpop.f32.mrb[0].mxu0
        %v1586 = vadd.f32 %v1537, %v1585
        %v1587 = vpop.f32.mrb[0].mxu0
        %1588 = vmatprep.mubr.bf16.mxu0 0
        %1589 = vmatmul.mubr.bf16.gmra.mrb[0].mxu0 %v952
        %v1590 = vpop.f32.mrb[0].mxu0
        %v1591 = vadd.f32 %v1542, %v1590
        %v1592 = vpop.f32.mrb[0].mxu0
        %v1593 = vpop.f32.mrb[0].mxu0
        %v1594 = vadd.f32 %v1545, %v1593
        %v1595 = vpop.f32.mrb[0].mxu0
        %1596 = vdwg.mxu0
        %vm1601 = vcmask 1040384
        %v1602 = vrot.slane %v1583, 7
        %v1603 = vrot.slane %v1586, 7
        %v1604 = vsel %vm1601, %v1602, %v1603
        %v1605 = vrot.slane %v1591, 7
        %v1606 = vsel %vm1601, %v1603, %v1605
        %v1607 = vrot.slane %v1594, 7
        %v1608 = vsel %vm1601, %v1605, %v1607
        %v1613 = vsel %vm1601, 0.0, %v1602
        %vm1614 = vcmask 1046528
        %v1615 = vrot.slane %v1583, 1
        %v1616 = vrot.slane %v1586, 1
        %v1617 = vsel %vm1614, %v1615, %v1616
        %v1618 = vrot.slane %v1591, 1
        %v1619 = vsel %vm1614, %v1616, %v1618
        %v1620 = vrot.slane %v1594, 1
        %v1621 = vsel %vm1614, %v1618, %v1620
        %v1623 = vsel %vm1614, %v1620, 0.0
        %1624 = vrot.lane.b32.xlu0 %v1583, 100
        %v1625 = vpop.permute.xlu0 %1624
        %1626 = vrot.lane.b32.xlu0 %v1586, 100
        %v1627 = vpop.permute.xlu0 %1626
        %1628 = vrot.lane.b32.xlu0 %v1591, 100
        %v1629 = vpop.permute.xlu0 %1628
        %1630 = vrot.lane.b32.xlu0 %v1594, 100
        %v1631 = vpop.permute.xlu0 %1630
        %v1636 = vadd.f32 %v1613, %v1625
        %v1637 = vadd.f32 %v1604, %v1627
        %v1638 = vadd.f32 %v1606, %v1629
        %v1639 = vadd.f32 %v1608, %v1631
        %1641 = vrot.lane.b32.xlu0 %v1617, 72
        %v1642 = vpop.permute.xlu0 %1641
        %1643 = vrot.lane.b32.xlu0 %v1619, 72
        %v1644 = vpop.permute.xlu0 %1643
        %1645 = vrot.lane.b32.xlu0 %v1621, 72
        %v1646 = vpop.permute.xlu0 %1645
        %1647 = vrot.lane.b32.xlu0 %v1623, 72
        %v1648 = vpop.permute.xlu0 %1647
        %v1653 = vadd.f32 %v1636, %v1642
        %v1654 = vadd.f32 %v1637, %v1644
        %v1655 = vadd.f32 %v1638, %v1646
        %v1656 = vadd.f32 %v1639, %v1648
        %s1657 = sld [smem:[#allocation2]]
        %v1658 = vstv %s1657
        %v1659 = vadd.f32 %v1653, %v1658
        %v1660 = vadd.f32 %v1654, %v1658
        %v1661 = vadd.f32 %v1655, %v1658
        %v1662 = vadd.f32 %v1656, %v1658
        %v1663 = vmax.f32 %v1659, 0.0
        %v1664 = vmax.f32 %v1660, 0.0
        %v1665 = vmax.f32 %v1661, 0.0
        %v1666 = vmax.f32 %v1662, 0.0
        %v1667 = vpack.c.bf16 %v1663, %v1663
        %v1668 = vld [vmem:[%s5] sm:$0xf]
        %v1669 = vld [vmem:[%s5 + $0x4] sm:$0xf]
        %v1670 = vld [vmem:[%s5 + $0x8] sm:$0xf]
        %v1671 = vld [vmem:[%s5 + $0xc] sm:$0x3]
        %s1672 = scalar_lea.vmem %s5, 16
        %v1673 = vld [vmem:[%s1672] sm:$0xf]
        %v1674 = vld [vmem:[%s1672 + $0x4] sm:$0xf]
        %v1675 = vld [vmem:[%s1672 + $0x8] sm:$0xf]
        %v1676 = vld [vmem:[%s1672 + $0xc] sm:$0x3]
        %v1678 = vshrl.u32 %v1667, 16
        %v1684 = vunpack.c.l.b16 %v1673
        %v1685 = vunpack.c.l.b16 %v1674
        %v1686 = vunpack.c.l.b16 %v1675
        %v1687 = vunpack.c.l.b16 %v1676
        %v1688 = vpack.c.b16 %v1685, %v1684
        %v1689 = vpack.c.b16 %v1687, %v1686
        %vm1691 = vcmask 228352
        %v1693 = vsel %vm1691, %v1678, 0
        %vm1695 = vcmask 1045504
        %v1697 = vsel %vm1695, %v1689, 0
        %1699 = vmatprep.subr.bf16.mxu0 0
        %1700 = vmatpush1.bf16.msra.mxu0 %v1688
        %1701 = vmatprep.subr.bf16.mxu0 0
        %1702 = vmatpush1.bf16.msra.mxu0 %v1697
        %1703 = vmatprep.subr.bf16.mxu0 0
        %1704 = vmatpush1.bf16.msra.mxu0 0
        %1705 = vmatprep.subr.bf16.mxu0 0
        %1706 = vmatpush1.bf16.msra.mxu0 0
        %1707 = vmatprep.subr.bf16.mxu0 0
        %1708 = vmatpush1.bf16.msra.mxu0 0
        %1709 = vmatprep.subr.bf16.mxu0 0
        %1710 = vmatpush1.bf16.msra.mxu0 0
        %1711 = vmatprep.subr.bf16.mxu0 0
        %1712 = vmatpush1.bf16.msra.mxu0 0
        %1713 = vmatprep.subr.bf16.mxu0 0
        %1714 = vmatpush1.bf16.msra.mxu0 0
        %1715 = vmatprep.subr.bf16.mxu0 0
        %1716 = vmatpush1.bf16.msra.mxu0 0
        %1717 = vmatprep.subr.bf16.mxu0 0
        %1718 = vmatpush1.bf16.msra.mxu0 0
        %1719 = vmatprep.subr.bf16.mxu0 0
        %1720 = vmatpush1.bf16.msra.mxu0 0
        %1721 = vmatprep.subr.bf16.mxu0 0
        %1722 = vmatpush1.bf16.msra.mxu0 0
        %1723 = vmatprep.subr.bf16.mxu0 0
        %1724 = vmatpush1.bf16.msra.mxu0 0
        %1725 = vmatprep.subr.bf16.mxu0 0
        %1726 = vmatpush1.bf16.msra.mxu0 0
        %1727 = vmatprep.subr.bf16.mxu0 0
        %1728 = vmatpush1.bf16.msra.mxu0 0
        %1729 = vmatprep.subr.bf16.mxu0 0
        %1730 = vmatpush1.bf16.msra.mxu0 0
        %1731 = vmatprep.mubr.bf16.mxu0 0
        %1732 = vmatmul.mubr.bf16.gmra.mrb[0].mxu0 %v1693
        %v1733 = vpop.f32.mrb[0].mxu0
        %v1734 = vadd.f32 0.0, %v1733
        %v1735 = vpop.f32.mrb[0].mxu0
        %v1736 = vpop.f32.mrb[0].mxu0
        %v1737 = vpop.f32.mrb[0].mxu0
        %1738 = vdwg.mxu0
        %v1743 = vunpack.c.l.b16 %v1668
        %v1744 = vunpack.c.l.b16 %v1669
        %v1745 = vunpack.c.l.b16 %v1670
        %v1746 = vunpack.c.l.b16 %v1671
        %v1747 = vpack.c.b16 %v1744, %v1743
        %v1748 = vpack.c.b16 %v1746, %v1745
        %v1750 = vsel %vm1691, %v1667, 0
        %v1753 = vsel %vm1695, %v1748, 0
        %1755 = vmatprep.subr.bf16.mxu0 0
        %1756 = vmatpush1.bf16.msra.mxu0 %v1747
        %1757 = vmatprep.subr.bf16.mxu0 0
        %1758 = vmatpush1.bf16.msra.mxu0 %v1753
        %1759 = vmatprep.subr.bf16.mxu0 0
        %1760 = vmatpush1.bf16.msra.mxu0 0
        %1761 = vmatprep.subr.bf16.mxu0 0
        %1762 = vmatpush1.bf16.msra.mxu0 0
        %1763 = vmatprep.subr.bf16.mxu0 0
        %1764 = vmatpush1.bf16.msra.mxu0 0
        %1765 = vmatprep.subr.bf16.mxu0 0
        %1766 = vmatpush1.bf16.msra.mxu0 0
        %1767 = vmatprep.subr.bf16.mxu0 0
        %1768 = vmatpush1.bf16.msra.mxu0 0
        %1769 = vmatprep.subr.bf16.mxu0 0
        %1770 = vmatpush1.bf16.msra.mxu0 0
        %1771 = vmatprep.subr.bf16.mxu0 0
        %1772 = vmatpush1.bf16.msra.mxu0 0
        %1773 = vmatprep.subr.bf16.mxu0 0
        %1774 = vmatpush1.bf16.msra.mxu0 0
        %1775 = vmatprep.subr.bf16.mxu0 0
        %1776 = vmatpush1.bf16.msra.mxu0 0
        %1777 = vmatprep.subr.bf16.mxu0 0
        %1778 = vmatpush1.bf16.msra.mxu0 0
        %1779 = vmatprep.subr.bf16.mxu0 0
        %1780 = vmatpush1.bf16.msra.mxu0 0
        %1781 = vmatprep.subr.bf16.mxu0 0
        %1782 = vmatpush1.bf16.msra.mxu0 0
        %1783 = vmatprep.subr.bf16.mxu0 0
        %1784 = vmatpush1.bf16.msra.mxu0 0
        %1785 = vmatprep.subr.bf16.mxu0 0
        %1786 = vmatpush1.bf16.msra.mxu0 0
        %1787 = vmatprep.mubr.bf16.mxu0 0
        %1788 = vmatmul.mubr.bf16.gmra.mrb[0].mxu0 %v1750
        %v1789 = vpop.f32.mrb[0].mxu0
        %v1790 = vadd.f32 %v1734, %v1789
        %v1791 = vpop.f32.mrb[0].mxu0
        %v1792 = vpop.f32.mrb[0].mxu0
        %v1793 = vpop.f32.mrb[0].mxu0
        %1794 = vdwg.mxu0
        %s1795 = scalar_lea.vmem %s5, 32
        %v1796 = vld [vmem:[%s1795] sm:$0xf]
        %v1797 = vld [vmem:[%s1795 + $0x4] sm:$0xf]
        %v1798 = vld [vmem:[%s1795 + $0x8] sm:$0xf]
        %v1799 = vld [vmem:[%s1795 + $0xc] sm:$0x3]
        %v1801 = vrot.slane %v1667, 1
        %v1806 = vunpack.c.l.b16 %v1796
        %v1807 = vunpack.c.l.b16 %v1797
        %v1808 = vunpack.c.l.b16 %v1798
        %v1809 = vunpack.c.l.b16 %v1799
        %v1810 = vpack.c.b16 %v1807, %v1806
        %v1811 = vpack.c.b16 %v1809, %v1808
        %v1814 = vsel %vm1691, %v1801, 0
        %v1817 = vsel %vm1695, %v1811, 0
        %1819 = vmatprep.subr.bf16.mxu0 0
        %1820 = vmatpush1.bf16.msra.mxu0 %v1810
        %1821 = vmatprep.subr.bf16.mxu0 0
        %1822 = vmatpush1.bf16.msra.mxu0 %v1817
        %1823 = vmatprep.subr.bf16.mxu0 0
        %1824 = vmatpush1.bf16.msra.mxu0 0
        %1825 = vmatprep.subr.bf16.mxu0 0
        %1826 = vmatpush1.bf16.msra.mxu0 0
        %1827 = vmatprep.subr.bf16.mxu0 0
        %1828 = vmatpush1.bf16.msra.mxu0 0
        %1829 = vmatprep.subr.bf16.mxu0 0
        %1830 = vmatpush1.bf16.msra.mxu0 0
        %1831 = vmatprep.subr.bf16.mxu0 0
        %1832 = vmatpush1.bf16.msra.mxu0 0
        %1833 = vmatprep.subr.bf16.mxu0 0
        %1834 = vmatpush1.bf16.msra.mxu0 0
        %1835 = vmatprep.subr.bf16.mxu0 0
        %1836 = vmatpush1.bf16.msra.mxu0 0
        %1837 = vmatprep.subr.bf16.mxu0 0
        %1838 = vmatpush1.bf16.msra.mxu0 0
        %1839 = vmatprep.subr.bf16.mxu0 0
        %1840 = vmatpush1.bf16.msra.mxu0 0
        %1841 = vmatprep.subr.bf16.mxu0 0
        %1842 = vmatpush1.bf16.msra.mxu0 0
        %1843 = vmatprep.subr.bf16.mxu0 0
        %1844 = vmatpush1.bf16.msra.mxu0 0
        %1845 = vmatprep.subr.bf16.mxu0 0
        %1846 = vmatpush1.bf16.msra.mxu0 0
        %1847 = vmatprep.subr.bf16.mxu0 0
        %1848 = vmatpush1.bf16.msra.mxu0 0
        %1849 = vmatprep.subr.bf16.mxu0 0
        %1850 = vmatpush1.bf16.msra.mxu0 0
        %1851 = vmatprep.mubr.bf16.mxu0 0
        %1852 = vmatmul.mubr.bf16.gmra.mrb[0].mxu0 %v1814
        %v1853 = vpop.f32.mrb[0].mxu0
        %v1854 = vadd.f32 0.0, %v1853
        %v1855 = vpop.f32.mrb[0].mxu0
        %v1856 = vpop.f32.mrb[0].mxu0
        %v1857 = vpop.f32.mrb[0].mxu0
        %1858 = vdwg.mxu0
        %v1859 = vadd.f32 %v1790, %v1854
        %s1860 = scalar_lea.vmem %s5, 48
        %v1861 = vld [vmem:[%s1860] sm:$0xf]
        %v1862 = vld [vmem:[%s1860 + $0x4] sm:$0xf]
        %v1863 = vld [vmem:[%s1860 + $0x8] sm:$0xf]
        %v1864 = vld [vmem:[%s1860 + $0xc] sm:$0x3]
        %v1865 = vrot.slane %v1678, 1
        %v1870 = vunpack.c.l.b16 %v1861
        %v1871 = vunpack.c.l.b16 %v1862
        %v1872 = vunpack.c.l.b16 %v1863
        %v1873 = vunpack.c.l.b16 %v1864
        %v1874 = vpack.c.b16 %v1871, %v1870
        %v1875 = vpack.c.b16 %v1873, %v1872
        %v1878 = vsel %vm1691, %v1865, 0
        %v1881 = vsel %vm1695, %v1875, 0
        %1883 = vmatprep.subr.bf16.mxu0 0
        %1884 = vmatpush1.bf16.msra.mxu0 %v1874
        %1885 = vmatprep.subr.bf16.mxu0 0
        %1886 = vmatpush1.bf16.msra.mxu0 %v1881
        %1887 = vmatprep.subr.bf16.mxu0 0
        %1888 = vmatpush1.bf16.msra.mxu0 0
        %1889 = vmatprep.subr.bf16.mxu0 0
        %1890 = vmatpush1.bf16.msra.mxu0 0
        %1891 = vmatprep.subr.bf16.mxu0 0
        %1892 = vmatpush1.bf16.msra.mxu0 0
        %1893 = vmatprep.subr.bf16.mxu0 0
        %1894 = vmatpush1.bf16.msra.mxu0 0
        %1895 = vmatprep.subr.bf16.mxu0 0
        %1896 = vmatpush1.bf16.msra.mxu0 0
        %1897 = vmatprep.subr.bf16.mxu0 0
        %1898 = vmatpush1.bf16.msra.mxu0 0
        %1899 = vmatprep.subr.bf16.mxu0 0
        %1900 = vmatpush1.bf16.msra.mxu0 0
        %1901 = vmatprep.subr.bf16.mxu0 0
        %1902 = vmatpush1.bf16.msra.mxu0 0
        %1903 = vmatprep.subr.bf16.mxu0 0
        %1904 = vmatpush1.bf16.msra.mxu0 0
        %1905 = vmatprep.subr.bf16.mxu0 0
        %1906 = vmatpush1.bf16.msra.mxu0 0
        %1907 = vmatprep.subr.bf16.mxu0 0
        %1908 = vmatpush1.bf16.msra.mxu0 0
        %1909 = vmatprep.subr.bf16.mxu0 0
        %1910 = vmatpush1.bf16.msra.mxu0 0
        %1911 = vmatprep.subr.bf16.mxu0 0
        %1912 = vmatpush1.bf16.msra.mxu0 0
        %1913 = vmatprep.subr.bf16.mxu0 0
        %1914 = vmatpush1.bf16.msra.mxu0 0
        %1915 = vmatprep.mubr.bf16.mxu0 0
        %1916 = vmatmul.mubr.bf16.gmra.mrb[0].mxu0 %v1878
        %v1917 = vpop.f32.mrb[0].mxu0
        %v1918 = vadd.f32 0.0, %v1917
        %v1919 = vpop.f32.mrb[0].mxu0
        %v1920 = vpop.f32.mrb[0].mxu0
        %v1921 = vpop.f32.mrb[0].mxu0
        %1922 = vdwg.mxu0
        %v1923 = vadd.f32 %v1859, %v1918
        %s1924 = scalar_lea.vmem %s5, 64
        %v1925 = vld [vmem:[%s1924] sm:$0xf]
        %v1926 = vld [vmem:[%s1924 + $0x4] sm:$0xf]
        %v1927 = vld [vmem:[%s1924 + $0x8] sm:$0xf]
        %v1928 = vld [vmem:[%s1924 + $0xc] sm:$0x3]
        %v1929 = vrot.slane %v1667, 2
        %v1934 = vunpack.c.l.b16 %v1925
        %v1935 = vunpack.c.l.b16 %v1926
        %v1936 = vunpack.c.l.b16 %v1927
        %v1937 = vunpack.c.l.b16 %v1928
        %v1938 = vpack.c.b16 %v1935, %v1934
        %v1939 = vpack.c.b16 %v1937, %v1936
        %v1942 = vsel %vm1691, %v1929, 0
        %v1945 = vsel %vm1695, %v1939, 0
        %1947 = vmatprep.subr.bf16.mxu0 0
        %1948 = vmatpush1.bf16.msra.mxu0 %v1938
        %1949 = vmatprep.subr.bf16.mxu0 0
        %1950 = vmatpush1.bf16.msra.mxu0 %v1945
        %1951 = vmatprep.subr.bf16.mxu0 0
        %1952 = vmatpush1.bf16.msra.mxu0 0
        %1953 = vmatprep.subr.bf16.mxu0 0
        %1954 = vmatpush1.bf16.msra.mxu0 0
        %1955 = vmatprep.subr.bf16.mxu0 0
        %1956 = vmatpush1.bf16.msra.mxu0 0
        %1957 = vmatprep.subr.bf16.mxu0 0
        %1958 = vmatpush1.bf16.msra.mxu0 0
        %1959 = vmatprep.subr.bf16.mxu0 0
        %1960 = vmatpush1.bf16.msra.mxu0 0
        %1961 = vmatprep.subr.bf16.mxu0 0
        %1962 = vmatpush1.bf16.msra.mxu0 0
        %1963 = vmatprep.subr.bf16.mxu0 0
        %1964 = vmatpush1.bf16.msra.mxu0 0
        %1965 = vmatprep.subr.bf16.mxu0 0
        %1966 = vmatpush1.bf16.msra.mxu0 0
        %1967 = vmatprep.subr.bf16.mxu0 0
        %1968 = vmatpush1.bf16.msra.mxu0 0
        %1969 = vmatprep.subr.bf16.mxu0 0
        %1970 = vmatpush1.bf16.msra.mxu0 0
        %1971 = vmatprep.subr.bf16.mxu0 0
        %1972 = vmatpush1.bf16.msra.mxu0 0
        %1973 = vmatprep.subr.bf16.mxu0 0
        %1974 = vmatpush1.bf16.msra.mxu0 0
        %1975 = vmatprep.subr.bf16.mxu0 0
        %1976 = vmatpush1.bf16.msra.mxu0 0
        %1977 = vmatprep.subr.bf16.mxu0 0
        %1978 = vmatpush1.bf16.msra.mxu0 0
        %1979 = vmatprep.mubr.bf16.mxu0 0
        %1980 = vmatmul.mubr.bf16.gmra.mrb[0].mxu0 %v1942
        %v1981 = vpop.f32.mrb[0].mxu0
        %v1982 = vadd.f32 0.0, %v1981
        %v1983 = vpop.f32.mrb[0].mxu0
        %v1984 = vpop.f32.mrb[0].mxu0
        %v1985 = vpop.f32.mrb[0].mxu0
        %1986 = vdwg.mxu0
        %v1987 = vadd.f32 %v1923, %v1982
        %s1988 = scalar_lea.vmem %s5, 80
        %v1989 = vld [vmem:[%s1988] sm:$0xf]
        %v1990 = vld [vmem:[%s1988 + $0x4] sm:$0xf]
        %v1991 = vld [vmem:[%s1988 + $0x8] sm:$0xf]
        %v1992 = vld [vmem:[%s1988 + $0xc] sm:$0x3]
        %v1993 = vrot.slane %v1678, 2
        %v1998 = vunpack.c.l.b16 %v1989
        %v1999 = vunpack.c.l.b16 %v1990
        %v2000 = vunpack.c.l.b16 %v1991
        %v2001 = vunpack.c.l.b16 %v1992
        %v2002 = vpack.c.b16 %v1999, %v1998
        %v2003 = vpack.c.b16 %v2001, %v2000
        %v2006 = vsel %vm1691, %v1993, 0
        %v2009 = vsel %vm1695, %v2003, 0
        %2011 = vmatprep.subr.bf16.mxu0 0
        %2012 = vmatpush1.bf16.msra.mxu0 %v2002
        %2013 = vmatprep.subr.bf16.mxu0 0
        %2014 = vmatpush1.bf16.msra.mxu0 %v2009
        %2015 = vmatprep.subr.bf16.mxu0 0
        %2016 = vmatpush1.bf16.msra.mxu0 0
        %2017 = vmatprep.subr.bf16.mxu0 0
        %2018 = vmatpush1.bf16.msra.mxu0 0
        %2019 = vmatprep.subr.bf16.mxu0 0
        %2020 = vmatpush1.bf16.msra.mxu0 0
        %2021 = vmatprep.subr.bf16.mxu0 0
        %2022 = vmatpush1.bf16.msra.mxu0 0
        %2023 = vmatprep.subr.bf16.mxu0 0
        %2024 = vmatpush1.bf16.msra.mxu0 0
        %2025 = vmatprep.subr.bf16.mxu0 0
        %2026 = vmatpush1.bf16.msra.mxu0 0
        %2027 = vmatprep.subr.bf16.mxu0 0
        %2028 = vmatpush1.bf16.msra.mxu0 0
        %2029 = vmatprep.subr.bf16.mxu0 0
        %2030 = vmatpush1.bf16.msra.mxu0 0
        %2031 = vmatprep.subr.bf16.mxu0 0
        %2032 = vmatpush1.bf16.msra.mxu0 0
        %2033 = vmatprep.subr.bf16.mxu0 0
        %2034 = vmatpush1.bf16.msra.mxu0 0
        %2035 = vmatprep.subr.bf16.mxu0 0
        %2036 = vmatpush1.bf16.msra.mxu0 0
        %2037 = vmatprep.subr.bf16.mxu0 0
        %2038 = vmatpush1.bf16.msra.mxu0 0
        %2039 = vmatprep.subr.bf16.mxu0 0
        %2040 = vmatpush1.bf16.msra.mxu0 0
        %2041 = vmatprep.subr.bf16.mxu0 0
        %2042 = vmatpush1.bf16.msra.mxu0 0
        %2043 = vmatprep.mubr.bf16.mxu0 0
        %2044 = vmatmul.mubr.bf16.gmra.mrb[0].mxu0 %v2006
        %v2045 = vpop.f32.mrb[0].mxu0
        %v2046 = vadd.f32 0.0, %v2045
        %v2047 = vpop.f32.mrb[0].mxu0
        %v2048 = vpop.f32.mrb[0].mxu0
        %v2049 = vpop.f32.mrb[0].mxu0
        %2050 = vdwg.mxu0
        %v2051 = vadd.f32 %v1987, %v2046
        %s2052 = scalar_lea.vmem %s5, 96
        %v2053 = vld [vmem:[%s2052] sm:$0xf]
        %v2054 = vld [vmem:[%s2052 + $0x4] sm:$0xf]
        %v2055 = vld [vmem:[%s2052 + $0x8] sm:$0xf]
        %v2056 = vld [vmem:[%s2052 + $0xc] sm:$0x3]
        %v2057 = vrot.slane %v1667, 3
        %v2062 = vunpack.c.l.b16 %v2053
        %v2063 = vunpack.c.l.b16 %v2054
        %v2064 = vunpack.c.l.b16 %v2055
        %v2065 = vunpack.c.l.b16 %v2056
        %v2066 = vpack.c.b16 %v2063, %v2062
        %v2067 = vpack.c.b16 %v2065, %v2064
        %v2070 = vsel %vm1691, %v2057, 0
        %v2073 = vsel %vm1695, %v2067, 0
        %2075 = vmatprep.subr.bf16.mxu0 0
        %2076 = vmatpush1.bf16.msra.mxu0 %v2066
        %2077 = vmatprep.subr.bf16.mxu0 0
        %2078 = vmatpush1.bf16.msra.mxu0 %v2073
        %2079 = vmatprep.subr.bf16.mxu0 0
        %2080 = vmatpush1.bf16.msra.mxu0 0
        %2081 = vmatprep.subr.bf16.mxu0 0
        %2082 = vmatpush1.bf16.msra.mxu0 0
        %2083 = vmatprep.subr.bf16.mxu0 0
        %2084 = vmatpush1.bf16.msra.mxu0 0
        %2085 = vmatprep.subr.bf16.mxu0 0
        %2086 = vmatpush1.bf16.msra.mxu0 0
        %2087 = vmatprep.subr.bf16.mxu0 0
        %2088 = vmatpush1.bf16.msra.mxu0 0
        %2089 = vmatprep.subr.bf16.mxu0 0
        %2090 = vmatpush1.bf16.msra.mxu0 0
        %2091 = vmatprep.subr.bf16.mxu0 0
        %2092 = vmatpush1.bf16.msra.mxu0 0
        %2093 = vmatprep.subr.bf16.mxu0 0
        %2094 = vmatpush1.bf16.msra.mxu0 0
        %2095 = vmatprep.subr.bf16.mxu0 0
        %2096 = vmatpush1.bf16.msra.mxu0 0
        %2097 = vmatprep.subr.bf16.mxu0 0
        %2098 = vmatpush1.bf16.msra.mxu0 0
        %2099 = vmatprep.subr.bf16.mxu0 0
        %2100 = vmatpush1.bf16.msra.mxu0 0
        %2101 = vmatprep.subr.bf16.mxu0 0
        %2102 = vmatpush1.bf16.msra.mxu0 0
        %2103 = vmatprep.subr.bf16.mxu0 0
        %2104 = vmatpush1.bf16.msra.mxu0 0
        %2105 = vmatprep.subr.bf16.mxu0 0
        %2106 = vmatpush1.bf16.msra.mxu0 0
        %2107 = vmatprep.mubr.bf16.mxu0 0
        %2108 = vmatmul.mubr.bf16.gmra.mrb[0].mxu0 %v2070
        %v2109 = vpop.f32.mrb[0].mxu0
        %v2110 = vadd.f32 0.0, %v2109
        %v2111 = vpop.f32.mrb[0].mxu0
        %v2112 = vpop.f32.mrb[0].mxu0
        %v2113 = vpop.f32.mrb[0].mxu0
        %2114 = vdwg.mxu0
        %v2115 = vadd.f32 %v2051, %v2110
        %s2116 = scalar_lea.vmem %s5, 112
        %v2117 = vld [vmem:[%s2116] sm:$0xf]
        %v2118 = vld [vmem:[%s2116 + $0x4] sm:$0xf]
        %v2119 = vld [vmem:[%s2116 + $0x8] sm:$0xf]
        %v2120 = vld [vmem:[%s2116 + $0xc] sm:$0x3]
        %v2121 = vrot.slane %v1678, 3
        %v2126 = vunpack.c.l.b16 %v2117
        %v2127 = vunpack.c.l.b16 %v2118
        %v2128 = vunpack.c.l.b16 %v2119
        %v2129 = vunpack.c.l.b16 %v2120
        %v2130 = vpack.c.b16 %v2127, %v2126
        %v2131 = vpack.c.b16 %v2129, %v2128
        %v2134 = vsel %vm1691, %v2121, 0
        %v2137 = vsel %vm1695, %v2131, 0
        %2139 = vmatprep.subr.bf16.mxu0 0
        %2140 = vmatpush1.bf16.msra.mxu0 %v2130
        %2141 = vmatprep.subr.bf16.mxu0 0
        %2142 = vmatpush1.bf16.msra.mxu0 %v2137
        %2143 = vmatprep.subr.bf16.mxu0 0
        %2144 = vmatpush1.bf16.msra.mxu0 0
        %2145 = vmatprep.subr.bf16.mxu0 0
        %2146 = vmatpush1.bf16.msra.mxu0 0
        %2147 = vmatprep.subr.bf16.mxu0 0
        %2148 = vmatpush1.bf16.msra.mxu0 0
        %2149 = vmatprep.subr.bf16.mxu0 0
        %2150 = vmatpush1.bf16.msra.mxu0 0
        %2151 = vmatprep.subr.bf16.mxu0 0
        %2152 = vmatpush1.bf16.msra.mxu0 0
        %2153 = vmatprep.subr.bf16.mxu0 0
        %2154 = vmatpush1.bf16.msra.mxu0 0
        %2155 = vmatprep.subr.bf16.mxu0 0
        %2156 = vmatpush1.bf16.msra.mxu0 0
        %2157 = vmatprep.subr.bf16.mxu0 0
        %2158 = vmatpush1.bf16.msra.mxu0 0
        %2159 = vmatprep.subr.bf16.mxu0 0
        %2160 = vmatpush1.bf16.msra.mxu0 0
        %2161 = vmatprep.subr.bf16.mxu0 0
        %2162 = vmatpush1.bf16.msra.mxu0 0
        %2163 = vmatprep.subr.bf16.mxu0 0
        %2164 = vmatpush1.bf16.msra.mxu0 0
        %2165 = vmatprep.subr.bf16.mxu0 0
        %2166 = vmatpush1.bf16.msra.mxu0 0
        %2167 = vmatprep.subr.bf16.mxu0 0
        %2168 = vmatpush1.bf16.msra.mxu0 0
        %2169 = vmatprep.subr.bf16.mxu0 0
        %2170 = vmatpush1.bf16.msra.mxu0 0
        %2171 = vmatprep.mubr.bf16.mxu0 0
        %2172 = vmatmul.mubr.bf16.gmra.mrb[0].mxu0 %v2134
        %v2173 = vpop.f32.mrb[0].mxu0
        %v2174 = vadd.f32 0.0, %v2173
        %v2175 = vpop.f32.mrb[0].mxu0
        %v2176 = vpop.f32.mrb[0].mxu0
        %v2177 = vpop.f32.mrb[0].mxu0
        %2178 = vdwg.mxu0
        %v2179 = vadd.f32 %v2115, %v2174
        %v2180 = vpack.c.bf16 %v1664, %v1664
        %s2181 = scalar_lea.vmem %s5, 128
        %v2182 = vld [vmem:[%s2181] sm:$0xf]
        %v2183 = vld [vmem:[%s2181 + $0x4] sm:$0xf]
        %v2184 = vld [vmem:[%s2181 + $0x8] sm:$0xf]
        %v2185 = vld [vmem:[%s2181 + $0xc] sm:$0x3]
        %v2190 = vunpack.c.l.b16 %v2182
        %v2191 = vunpack.c.l.b16 %v2183
        %v2192 = vunpack.c.l.b16 %v2184
        %v2193 = vunpack.c.l.b16 %v2185
        %v2194 = vpack.c.b16 %v2191, %v2190
        %v2195 = vpack.c.b16 %v2193, %v2192
        %v2198 = vsel %vm1691, %v2180, 0
        %v2201 = vsel %vm1695, %v2195, 0
        %2203 = vmatprep.subr.bf16.mxu0 0
        %2204 = vmatpush1.bf16.msra.mxu0 %v2194
        %2205 = vmatprep.subr.bf16.mxu0 0
        %2206 = vmatpush1.bf16.msra.mxu0 %v2201
        %2207 = vmatprep.subr.bf16.mxu0 0
        %2208 = vmatpush1.bf16.msra.mxu0 0
        %2209 = vmatprep.subr.bf16.mxu0 0
        %2210 = vmatpush1.bf16.msra.mxu0 0
        %2211 = vmatprep.subr.bf16.mxu0 0
        %2212 = vmatpush1.bf16.msra.mxu0 0
        %2213 = vmatprep.subr.bf16.mxu0 0
        %2214 = vmatpush1.bf16.msra.mxu0 0
        %2215 = vmatprep.subr.bf16.mxu0 0
        %2216 = vmatpush1.bf16.msra.mxu0 0
        %2217 = vmatprep.subr.bf16.mxu0 0
        %2218 = vmatpush1.bf16.msra.mxu0 0
        %2219 = vmatprep.subr.bf16.mxu0 0
        %2220 = vmatpush1.bf16.msra.mxu0 0
        %2221 = vmatprep.subr.bf16.mxu0 0
        %2222 = vmatpush1.bf16.msra.mxu0 0
        %2223 = vmatprep.subr.bf16.mxu0 0
        %2224 = vmatpush1.bf16.msra.mxu0 0
        %2225 = vmatprep.subr.bf16.mxu0 0
        %2226 = vmatpush1.bf16.msra.mxu0 0
        %2227 = vmatprep.subr.bf16.mxu0 0
        %2228 = vmatpush1.bf16.msra.mxu0 0
        %2229 = vmatprep.subr.bf16.mxu0 0
        %2230 = vmatpush1.bf16.msra.mxu0 0
        %2231 = vmatprep.subr.bf16.mxu0 0
        %2232 = vmatpush1.bf16.msra.mxu0 0
        %2233 = vmatprep.subr.bf16.mxu0 0
        %2234 = vmatpush1.bf16.msra.mxu0 0
        %2235 = vmatprep.mubr.bf16.mxu0 0
        %2236 = vmatmul.mubr.bf16.gmra.mrb[0].mxu0 %v2198
        %v2237 = vpop.f32.mrb[0].mxu0
        %v2238 = vadd.f32 0.0, %v2237
        %v2239 = vpop.f32.mrb[0].mxu0
        %v2240 = vpop.f32.mrb[0].mxu0
        %v2241 = vpop.f32.mrb[0].mxu0
        %2242 = vdwg.mxu0
        %v2243 = vadd.f32 %v2179, %v2238
        %s2244 = scalar_lea.vmem %s5, 144
        %v2245 = vld [vmem:[%s2244] sm:$0xf]
        %v2246 = vld [vmem:[%s2244 + $0x4] sm:$0xf]
        %v2247 = vld [vmem:[%s2244 + $0x8] sm:$0xf]
        %v2248 = vld [vmem:[%s2244 + $0xc] sm:$0x3]
        %v2249 = vshrl.u32 %v2180, 16
        %v2255 = vunpack.c.l.b16 %v2245
        %v2256 = vunpack.c.l.b16 %v2246
        %v2257 = vunpack.c.l.b16 %v2247
        %v2258 = vunpack.c.l.b16 %v2248
        %v2259 = vpack.c.b16 %v2256, %v2255
        %v2260 = vpack.c.b16 %v2258, %v2257
        %v2263 = vsel %vm1691, %v2249, 0
        %v2266 = vsel %vm1695, %v2260, 0
        %2268 = vmatprep.subr.bf16.mxu0 0
        %2269 = vmatpush1.bf16.msra.mxu0 %v2259
        %2270 = vmatprep.subr.bf16.mxu0 0
        %2271 = vmatpush1.bf16.msra.mxu0 %v2266
        %2272 = vmatprep.subr.bf16.mxu0 0
        %2273 = vmatpush1.bf16.msra.mxu0 0
        %2274 = vmatprep.subr.bf16.mxu0 0
        %2275 = vmatpush1.bf16.msra.mxu0 0
        %2276 = vmatprep.subr.bf16.mxu0 0
        %2277 = vmatpush1.bf16.msra.mxu0 0
        %2278 = vmatprep.subr.bf16.mxu0 0
        %2279 = vmatpush1.bf16.msra.mxu0 0
        %2280 = vmatprep.subr.bf16.mxu0 0
        %2281 = vmatpush1.bf16.msra.mxu0 0
        %2282 = vmatprep.subr.bf16.mxu0 0
        %2283 = vmatpush1.bf16.msra.mxu0 0
        %2284 = vmatprep.subr.bf16.mxu0 0
        %2285 = vmatpush1.bf16.msra.mxu0 0
        %2286 = vmatprep.subr.bf16.mxu0 0
        %2287 = vmatpush1.bf16.msra.mxu0 0
        %2288 = vmatprep.subr.bf16.mxu0 0
        %2289 = vmatpush1.bf16.msra.mxu0 0
        %2290 = vmatprep.subr.bf16.mxu0 0
        %2291 = vmatpush1.bf16.msra.mxu0 0
        %2292 = vmatprep.subr.bf16.mxu0 0
        %2293 = vmatpush1.bf16.msra.mxu0 0
        %2294 = vmatprep.subr.bf16.mxu0 0
        %2295 = vmatpush1.bf16.msra.mxu0 0
        %2296 = vmatprep.subr.bf16.mxu0 0
        %2297 = vmatpush1.bf16.msra.mxu0 0
        %2298 = vmatprep.subr.bf16.mxu0 0
        %2299 = vmatpush1.bf16.msra.mxu0 0
        %2300 = vmatprep.mubr.bf16.mxu0 0
        %2301 = vmatmul.mubr.bf16.gmra.mrb[0].mxu0 %v2263
        %v2302 = vpop.f32.mrb[0].mxu0
        %v2303 = vadd.f32 0.0, %v2302
        %v2304 = vpop.f32.mrb[0].mxu0
        %v2305 = vpop.f32.mrb[0].mxu0
        %v2306 = vpop.f32.mrb[0].mxu0
        %2307 = vdwg.mxu0
        %v2308 = vadd.f32 %v2243, %v2303
        %s2309 = scalar_lea.vmem %s5, 160
        %v2310 = vld [vmem:[%s2309] sm:$0xf]
        %v2311 = vld [vmem:[%s2309 + $0x4] sm:$0xf]
        %v2312 = vld [vmem:[%s2309 + $0x8] sm:$0xf]
        %v2313 = vld [vmem:[%s2309 + $0xc] sm:$0x3]
        %v2315 = vrot.slane %v2180, 1
        %v2320 = vunpack.c.l.b16 %v2310
        %v2321 = vunpack.c.l.b16 %v2311
        %v2322 = vunpack.c.l.b16 %v2312
        %v2323 = vunpack.c.l.b16 %v2313
        %v2324 = vpack.c.b16 %v2321, %v2320
        %v2325 = vpack.c.b16 %v2323, %v2322
        %v2328 = vsel %vm1691, %v2315, 0
        %v2331 = vsel %vm1695, %v2325, 0
        %2333 = vmatprep.subr.bf16.mxu0 0
        %2334 = vmatpush1.bf16.msra.mxu0 %v2324
        %2335 = vmatprep.subr.bf16.mxu0 0
        %2336 = vmatpush1.bf16.msra.mxu0 %v2331
        %2337 = vmatprep.subr.bf16.mxu0 0
        %2338 = vmatpush1.bf16.msra.mxu0 0
        %2339 = vmatprep.subr.bf16.mxu0 0
        %2340 = vmatpush1.bf16.msra.mxu0 0
        %2341 = vmatprep.subr.bf16.mxu0 0
        %2342 = vmatpush1.bf16.msra.mxu0 0
        %2343 = vmatprep.subr.bf16.mxu0 0
        %2344 = vmatpush1.bf16.msra.mxu0 0
        %2345 = vmatprep.subr.bf16.mxu0 0
        %2346 = vmatpush1.bf16.msra.mxu0 0
        %2347 = vmatprep.subr.bf16.mxu0 0
        %2348 = vmatpush1.bf16.msra.mxu0 0
        %2349 = vmatprep.subr.bf16.mxu0 0
        %2350 = vmatpush1.bf16.msra.mxu0 0
        %2351 = vmatprep.subr.bf16.mxu0 0
        %2352 = vmatpush1.bf16.msra.mxu0 0
        %2353 = vmatprep.subr.bf16.mxu0 0
        %2354 = vmatpush1.bf16.msra.mxu0 0
        %2355 = vmatprep.subr.bf16.mxu0 0
        %2356 = vmatpush1.bf16.msra.mxu0 0
        %2357 = vmatprep.subr.bf16.mxu0 0
        %2358 = vmatpush1.bf16.msra.mxu0 0
        %2359 = vmatprep.subr.bf16.mxu0 0
        %2360 = vmatpush1.bf16.msra.mxu0 0
        %2361 = vmatprep.subr.bf16.mxu0 0
        %2362 = vmatpush1.bf16.msra.mxu0 0
        %2363 = vmatprep.subr.bf16.mxu0 0
        %2364 = vmatpush1.bf16.msra.mxu0 0
        %2365 = vmatprep.mubr.bf16.mxu0 0
        %2366 = vmatmul.mubr.bf16.gmra.mrb[0].mxu0 %v2328
        %v2367 = vpop.f32.mrb[0].mxu0
        %v2368 = vadd.f32 0.0, %v2367
        %v2369 = vpop.f32.mrb[0].mxu0
        %v2370 = vpop.f32.mrb[0].mxu0
        %v2371 = vpop.f32.mrb[0].mxu0
        %2372 = vdwg.mxu0
        %v2373 = vadd.f32 %v2308, %v2368
        %s2374 = scalar_lea.vmem %s5, 176
        %v2375 = vld [vmem:[%s2374] sm:$0xf]
        %v2376 = vld [vmem:[%s2374 + $0x4] sm:$0xf]
        %v2377 = vld [vmem:[%s2374 + $0x8] sm:$0xf]
        %v2378 = vld [vmem:[%s2374 + $0xc] sm:$0x3]
        %v2379 = vrot.slane %v2249, 1
        %v2384 = vunpack.c.l.b16 %v2375
        %v2385 = vunpack.c.l.b16 %v2376
        %v2386 = vunpack.c.l.b16 %v2377
        %v2387 = vunpack.c.l.b16 %v2378
        %v2388 = vpack.c.b16 %v2385, %v2384
        %v2389 = vpack.c.b16 %v2387, %v2386
        %v2392 = vsel %vm1691, %v2379, 0
        %v2395 = vsel %vm1695, %v2389, 0
        %2397 = vmatprep.subr.bf16.mxu0 0
        %2398 = vmatpush1.bf16.msra.mxu0 %v2388
        %2399 = vmatprep.subr.bf16.mxu0 0
        %2400 = vmatpush1.bf16.msra.mxu0 %v2395
        %2401 = vmatprep.subr.bf16.mxu0 0
        %2402 = vmatpush1.bf16.msra.mxu0 0
        %2403 = vmatprep.subr.bf16.mxu0 0
        %2404 = vmatpush1.bf16.msra.mxu0 0
        %2405 = vmatprep.subr.bf16.mxu0 0
        %2406 = vmatpush1.bf16.msra.mxu0 0
        %2407 = vmatprep.subr.bf16.mxu0 0
        %2408 = vmatpush1.bf16.msra.mxu0 0
        %2409 = vmatprep.subr.bf16.mxu0 0
        %2410 = vmatpush1.bf16.msra.mxu0 0
        %2411 = vmatprep.subr.bf16.mxu0 0
        %2412 = vmatpush1.bf16.msra.mxu0 0
        %2413 = vmatprep.subr.bf16.mxu0 0
        %2414 = vmatpush1.bf16.msra.mxu0 0
        %2415 = vmatprep.subr.bf16.mxu0 0
        %2416 = vmatpush1.bf16.msra.mxu0 0
        %2417 = vmatprep.subr.bf16.mxu0 0
        %2418 = vmatpush1.bf16.msra.mxu0 0
        %2419 = vmatprep.subr.bf16.mxu0 0
        %2420 = vmatpush1.bf16.msra.mxu0 0
        %2421 = vmatprep.subr.bf16.mxu0 0
        %2422 = vmatpush1.bf16.msra.mxu0 0
        %2423 = vmatprep.subr.bf16.mxu0 0
        %2424 = vmatpush1.bf16.msra.mxu0 0
        %2425 = vmatprep.subr.bf16.mxu0 0
        %2426 = vmatpush1.bf16.msra.mxu0 0
        %2427 = vmatprep.subr.bf16.mxu0 0
        %2428 = vmatpush1.bf16.msra.mxu0 0
        %2429 = vmatprep.mubr.bf16.mxu0 0
        %2430 = vmatmul.mubr.bf16.gmra.mrb[0].mxu0 %v2392
        %v2431 = vpop.f32.mrb[0].mxu0
        %v2432 = vadd.f32 0.0, %v2431
        %v2433 = vpop.f32.mrb[0].mxu0
        %v2434 = vpop.f32.mrb[0].mxu0
        %v2435 = vpop.f32.mrb[0].mxu0
        %2436 = vdwg.mxu0
        %v2437 = vadd.f32 %v2373, %v2432
        %s2438 = scalar_lea.vmem %s5, 192
        %v2439 = vld [vmem:[%s2438] sm:$0xf]
        %v2440 = vld [vmem:[%s2438 + $0x4] sm:$0xf]
        %v2441 = vld [vmem:[%s2438 + $0x8] sm:$0xf]
        %v2442 = vld [vmem:[%s2438 + $0xc] sm:$0x3]
        %v2443 = vrot.slane %v2180, 2
        %v2448 = vunpack.c.l.b16 %v2439
        %v2449 = vunpack.c.l.b16 %v2440
        %v2450 = vunpack.c.l.b16 %v2441
        %v2451 = vunpack.c.l.b16 %v2442
        %v2452 = vpack.c.b16 %v2449, %v2448
        %v2453 = vpack.c.b16 %v2451, %v2450
        %v2456 = vsel %vm1691, %v2443, 0
        %v2459 = vsel %vm1695, %v2453, 0
        %2461 = vmatprep.subr.bf16.mxu0 0
        %2462 = vmatpush1.bf16.msra.mxu0 %v2452
        %2463 = vmatprep.subr.bf16.mxu0 0
        %2464 = vmatpush1.bf16.msra.mxu0 %v2459
        %2465 = vmatprep.subr.bf16.mxu0 0
        %2466 = vmatpush1.bf16.msra.mxu0 0
        %2467 = vmatprep.subr.bf16.mxu0 0
        %2468 = vmatpush1.bf16.msra.mxu0 0
        %2469 = vmatprep.subr.bf16.mxu0 0
        %2470 = vmatpush1.bf16.msra.mxu0 0
        %2471 = vmatprep.subr.bf16.mxu0 0
        %2472 = vmatpush1.bf16.msra.mxu0 0
        %2473 = vmatprep.subr.bf16.mxu0 0
        %2474 = vmatpush1.bf16.msra.mxu0 0
        %2475 = vmatprep.subr.bf16.mxu0 0
        %2476 = vmatpush1.bf16.msra.mxu0 0
        %2477 = vmatprep.subr.bf16.mxu0 0
        %2478 = vmatpush1.bf16.msra.mxu0 0
        %2479 = vmatprep.subr.bf16.mxu0 0
        %2480 = vmatpush1.bf16.msra.mxu0 0
        %2481 = vmatprep.subr.bf16.mxu0 0
        %2482 = vmatpush1.bf16.msra.mxu0 0
        %2483 = vmatprep.subr.bf16.mxu0 0
        %2484 = vmatpush1.bf16.msra.mxu0 0
        %2485 = vmatprep.subr.bf16.mxu0 0
        %2486 = vmatpush1.bf16.msra.mxu0 0
        %2487 = vmatprep.subr.bf16.mxu0 0
        %2488 = vmatpush1.bf16.msra.mxu0 0
        %2489 = vmatprep.subr.bf16.mxu0 0
        %2490 = vmatpush1.bf16.msra.mxu0 0
        %2491 = vmatprep.subr.bf16.mxu0 0
        %2492 = vmatpush1.bf16.msra.mxu0 0
        %2493 = vmatprep.mubr.bf16.mxu0 0
        %2494 = vmatmul.mubr.bf16.gmra.mrb[0].mxu0 %v2456
        %v2495 = vpop.f32.mrb[0].mxu0
        %v2496 = vadd.f32 0.0, %v2495
        %v2497 = vpop.f32.mrb[0].mxu0
        %v2498 = vpop.f32.mrb[0].mxu0
        %v2499 = vpop.f32.mrb[0].mxu0
        %2500 = vdwg.mxu0
        %v2501 = vadd.f32 %v2437, %v2496
        %s2502 = scalar_lea.vmem %s5, 208
        %v2503 = vld [vmem:[%s2502] sm:$0xf]
        %v2504 = vld [vmem:[%s2502 + $0x4] sm:$0xf]
        %v2505 = vld [vmem:[%s2502 + $0x8] sm:$0xf]
        %v2506 = vld [vmem:[%s2502 + $0xc] sm:$0x3]
        %v2507 = vrot.slane %v2249, 2
        %v2512 = vunpack.c.l.b16 %v2503
        %v2513 = vunpack.c.l.b16 %v2504
        %v2514 = vunpack.c.l.b16 %v2505
        %v2515 = vunpack.c.l.b16 %v2506
        %v2516 = vpack.c.b16 %v2513, %v2512
        %v2517 = vpack.c.b16 %v2515, %v2514
        %v2520 = vsel %vm1691, %v2507, 0
        %v2523 = vsel %vm1695, %v2517, 0
        %2525 = vmatprep.subr.bf16.mxu0 0
        %2526 = vmatpush1.bf16.msra.mxu0 %v2516
        %2527 = vmatprep.subr.bf16.mxu0 0
        %2528 = vmatpush1.bf16.msra.mxu0 %v2523
        %2529 = vmatprep.subr.bf16.mxu0 0
        %2530 = vmatpush1.bf16.msra.mxu0 0
        %2531 = vmatprep.subr.bf16.mxu0 0
        %2532 = vmatpush1.bf16.msra.mxu0 0
        %2533 = vmatprep.subr.bf16.mxu0 0
        %2534 = vmatpush1.bf16.msra.mxu0 0
        %2535 = vmatprep.subr.bf16.mxu0 0
        %2536 = vmatpush1.bf16.msra.mxu0 0
        %2537 = vmatprep.subr.bf16.mxu0 0
        %2538 = vmatpush1.bf16.msra.mxu0 0
        %2539 = vmatprep.subr.bf16.mxu0 0
        %2540 = vmatpush1.bf16.msra.mxu0 0
        %2541 = vmatprep.subr.bf16.mxu0 0
        %2542 = vmatpush1.bf16.msra.mxu0 0
        %2543 = vmatprep.subr.bf16.mxu0 0
        %2544 = vmatpush1.bf16.msra.mxu0 0
        %2545 = vmatprep.subr.bf16.mxu0 0
        %2546 = vmatpush1.bf16.msra.mxu0 0
        %2547 = vmatprep.subr.bf16.mxu0 0
        %2548 = vmatpush1.bf16.msra.mxu0 0
        %2549 = vmatprep.subr.bf16.mxu0 0
        %2550 = vmatpush1.bf16.msra.mxu0 0
        %2551 = vmatprep.subr.bf16.mxu0 0
        %2552 = vmatpush1.bf16.msra.mxu0 0
        %2553 = vmatprep.subr.bf16.mxu0 0
        %2554 = vmatpush1.bf16.msra.mxu0 0
        %2555 = vmatprep.subr.bf16.mxu0 0
        %2556 = vmatpush1.bf16.msra.mxu0 0
        %2557 = vmatprep.mubr.bf16.mxu0 0
        %2558 = vmatmul.mubr.bf16.gmra.mrb[0].mxu0 %v2520
        %v2559 = vpop.f32.mrb[0].mxu0
        %v2560 = vadd.f32 0.0, %v2559
        %v2561 = vpop.f32.mrb[0].mxu0
        %v2562 = vpop.f32.mrb[0].mxu0
        %v2563 = vpop.f32.mrb[0].mxu0
        %2564 = vdwg.mxu0
        %v2565 = vadd.f32 %v2501, %v2560
        %s2566 = scalar_lea.vmem %s5, 224
        %v2567 = vld [vmem:[%s2566] sm:$0xf]
        %v2568 = vld [vmem:[%s2566 + $0x4] sm:$0xf]
        %v2569 = vld [vmem:[%s2566 + $0x8] sm:$0xf]
        %v2570 = vld [vmem:[%s2566 + $0xc] sm:$0x3]
        %v2571 = vrot.slane %v2180, 3
        %v2576 = vunpack.c.l.b16 %v2567
        %v2577 = vunpack.c.l.b16 %v2568
        %v2578 = vunpack.c.l.b16 %v2569
        %v2579 = vunpack.c.l.b16 %v2570
        %v2580 = vpack.c.b16 %v2577, %v2576
        %v2581 = vpack.c.b16 %v2579, %v2578
        %v2584 = vsel %vm1691, %v2571, 0
        %v2587 = vsel %vm1695, %v2581, 0
        %2589 = vmatprep.subr.bf16.mxu0 0
        %2590 = vmatpush1.bf16.msra.mxu0 %v2580
        %2591 = vmatprep.subr.bf16.mxu0 0
        %2592 = vmatpush1.bf16.msra.mxu0 %v2587
        %2593 = vmatprep.subr.bf16.mxu0 0
        %2594 = vmatpush1.bf16.msra.mxu0 0
        %2595 = vmatprep.subr.bf16.mxu0 0
        %2596 = vmatpush1.bf16.msra.mxu0 0
        %2597 = vmatprep.subr.bf16.mxu0 0
        %2598 = vmatpush1.bf16.msra.mxu0 0
        %2599 = vmatprep.subr.bf16.mxu0 0
        %2600 = vmatpush1.bf16.msra.mxu0 0
        %2601 = vmatprep.subr.bf16.mxu0 0
        %2602 = vmatpush1.bf16.msra.mxu0 0
        %2603 = vmatprep.subr.bf16.mxu0 0
        %2604 = vmatpush1.bf16.msra.mxu0 0
        %2605 = vmatprep.subr.bf16.mxu0 0
        %2606 = vmatpush1.bf16.msra.mxu0 0
        %2607 = vmatprep.subr.bf16.mxu0 0
        %2608 = vmatpush1.bf16.msra.mxu0 0
        %2609 = vmatprep.subr.bf16.mxu0 0
        %2610 = vmatpush1.bf16.msra.mxu0 0
        %2611 = vmatprep.subr.bf16.mxu0 0
        %2612 = vmatpush1.bf16.msra.mxu0 0
        %2613 = vmatprep.subr.bf16.mxu0 0
        %2614 = vmatpush1.bf16.msra.mxu0 0
        %2615 = vmatprep.subr.bf16.mxu0 0
        %2616 = vmatpush1.bf16.msra.mxu0 0
        %2617 = vmatprep.subr.bf16.mxu0 0
        %2618 = vmatpush1.bf16.msra.mxu0 0
        %2619 = vmatprep.subr.bf16.mxu0 0
        %2620 = vmatpush1.bf16.msra.mxu0 0
        %2621 = vmatprep.mubr.bf16.mxu0 0
        %2622 = vmatmul.mubr.bf16.gmra.mrb[0].mxu0 %v2584
        %v2623 = vpop.f32.mrb[0].mxu0
        %v2624 = vadd.f32 0.0, %v2623
        %v2625 = vpop.f32.mrb[0].mxu0
        %v2626 = vpop.f32.mrb[0].mxu0
        %v2627 = vpop.f32.mrb[0].mxu0
        %2628 = vdwg.mxu0
        %v2629 = vadd.f32 %v2565, %v2624
        %s2630 = scalar_lea.vmem %s5, 240
        %v2631 = vld [vmem:[%s2630] sm:$0xf]
        %v2632 = vld [vmem:[%s2630 + $0x4] sm:$0xf]
        %v2633 = vld [vmem:[%s2630 + $0x8] sm:$0xf]
        %v2634 = vld [vmem:[%s2630 + $0xc] sm:$0x3]
        %v2635 = vrot.slane %v2249, 3
        %v2640 = vunpack.c.l.b16 %v2631
        %v2641 = vunpack.c.l.b16 %v2632
        %v2642 = vunpack.c.l.b16 %v2633
        %v2643 = vunpack.c.l.b16 %v2634
        %v2644 = vpack.c.b16 %v2641, %v2640
        %v2645 = vpack.c.b16 %v2643, %v2642
        %v2648 = vsel %vm1691, %v2635, 0
        %v2651 = vsel %vm1695, %v2645, 0
        %2653 = vmatprep.subr.bf16.mxu0 0
        %2654 = vmatpush1.bf16.msra.mxu0 %v2644
        %2655 = vmatprep.subr.bf16.mxu0 0
        %2656 = vmatpush1.bf16.msra.mxu0 %v2651
        %2657 = vmatprep.subr.bf16.mxu0 0
        %2658 = vmatpush1.bf16.msra.mxu0 0
        %2659 = vmatprep.subr.bf16.mxu0 0
        %2660 = vmatpush1.bf16.msra.mxu0 0
        %2661 = vmatprep.subr.bf16.mxu0 0
        %2662 = vmatpush1.bf16.msra.mxu0 0
        %2663 = vmatprep.subr.bf16.mxu0 0
        %2664 = vmatpush1.bf16.msra.mxu0 0
        %2665 = vmatprep.subr.bf16.mxu0 0
        %2666 = vmatpush1.bf16.msra.mxu0 0
        %2667 = vmatprep.subr.bf16.mxu0 0
        %2668 = vmatpush1.bf16.msra.mxu0 0
        %2669 = vmatprep.subr.bf16.mxu0 0
        %2670 = vmatpush1.bf16.msra.mxu0 0
        %2671 = vmatprep.subr.bf16.mxu0 0
        %2672 = vmatpush1.bf16.msra.mxu0 0
        %2673 = vmatprep.subr.bf16.mxu0 0
        %2674 = vmatpush1.bf16.msra.mxu0 0
        %2675 = vmatprep.subr.bf16.mxu0 0
        %2676 = vmatpush1.bf16.msra.mxu0 0
        %2677 = vmatprep.subr.bf16.mxu0 0
        %2678 = vmatpush1.bf16.msra.mxu0 0
        %2679 = vmatprep.subr.bf16.mxu0 0
        %2680 = vmatpush1.bf16.msra.mxu0 0
        %2681 = vmatprep.subr.bf16.mxu0 0
        %2682 = vmatpush1.bf16.msra.mxu0 0
        %2683 = vmatprep.subr.bf16.mxu0 0
        %2684 = vmatpush1.bf16.msra.mxu0 0
        %2685 = vmatprep.mubr.bf16.mxu0 0
        %2686 = vmatmul.mubr.bf16.gmra.mrb[0].mxu0 %v2648
        %v2687 = vpop.f32.mrb[0].mxu0
        %v2688 = vadd.f32 0.0, %v2687
        %v2689 = vpop.f32.mrb[0].mxu0
        %v2690 = vpop.f32.mrb[0].mxu0
        %v2691 = vpop.f32.mrb[0].mxu0
        %2692 = vdwg.mxu0
        %v2693 = vadd.f32 %v2629, %v2688
        %v2694 = vpack.c.bf16 %v1665, %v1665
        %s2695 = scalar_lea.vmem %s5, 256
        %v2696 = vld [vmem:[%s2695] sm:$0xf]
        %v2697 = vld [vmem:[%s2695 + $0x4] sm:$0xf]
        %v2698 = vld [vmem:[%s2695 + $0x8] sm:$0xf]
        %v2699 = vld [vmem:[%s2695 + $0xc] sm:$0x3]
        %v2704 = vunpack.c.l.b16 %v2696
        %v2705 = vunpack.c.l.b16 %v2697
        %v2706 = vunpack.c.l.b16 %v2698
        %v2707 = vunpack.c.l.b16 %v2699
        %v2708 = vpack.c.b16 %v2705, %v2704
        %v2709 = vpack.c.b16 %v2707, %v2706
        %v2712 = vsel %vm1691, %v2694, 0
        %v2715 = vsel %vm1695, %v2709, 0
        %2717 = vmatprep.subr.bf16.mxu0 0
        %2718 = vmatpush1.bf16.msra.mxu0 %v2708
        %2719 = vmatprep.subr.bf16.mxu0 0
        %2720 = vmatpush1.bf16.msra.mxu0 %v2715
        %2721 = vmatprep.subr.bf16.mxu0 0
        %2722 = vmatpush1.bf16.msra.mxu0 0
        %2723 = vmatprep.subr.bf16.mxu0 0
        %2724 = vmatpush1.bf16.msra.mxu0 0
        %2725 = vmatprep.subr.bf16.mxu0 0
        %2726 = vmatpush1.bf16.msra.mxu0 0
        %2727 = vmatprep.subr.bf16.mxu0 0
        %2728 = vmatpush1.bf16.msra.mxu0 0
        %2729 = vmatprep.subr.bf16.mxu0 0
        %2730 = vmatpush1.bf16.msra.mxu0 0
        %2731 = vmatprep.subr.bf16.mxu0 0
        %2732 = vmatpush1.bf16.msra.mxu0 0
        %2733 = vmatprep.subr.bf16.mxu0 0
        %2734 = vmatpush1.bf16.msra.mxu0 0
        %2735 = vmatprep.subr.bf16.mxu0 0
        %2736 = vmatpush1.bf16.msra.mxu0 0
        %2737 = vmatprep.subr.bf16.mxu0 0
        %2738 = vmatpush1.bf16.msra.mxu0 0
        %2739 = vmatprep.subr.bf16.mxu0 0
        %2740 = vmatpush1.bf16.msra.mxu0 0
        %2741 = vmatprep.subr.bf16.mxu0 0
        %2742 = vmatpush1.bf16.msra.mxu0 0
        %2743 = vmatprep.subr.bf16.mxu0 0
        %2744 = vmatpush1.bf16.msra.mxu0 0
        %2745 = vmatprep.subr.bf16.mxu0 0
        %2746 = vmatpush1.bf16.msra.mxu0 0
        %2747 = vmatprep.subr.bf16.mxu0 0
        %2748 = vmatpush1.bf16.msra.mxu0 0
        %2749 = vmatprep.mubr.bf16.mxu0 0
        %2750 = vmatmul.mubr.bf16.gmra.mrb[0].mxu0 %v2712
        %v2751 = vpop.f32.mrb[0].mxu0
        %v2752 = vadd.f32 0.0, %v2751
        %v2753 = vpop.f32.mrb[0].mxu0
        %v2754 = vpop.f32.mrb[0].mxu0
        %v2755 = vpop.f32.mrb[0].mxu0
        %2756 = vdwg.mxu0
        %v2757 = vadd.f32 %v2693, %v2752
        %s2758 = scalar_lea.vmem %s5, 272
        %v2759 = vld [vmem:[%s2758] sm:$0xf]
        %v2760 = vld [vmem:[%s2758 + $0x4] sm:$0xf]
        %v2761 = vld [vmem:[%s2758 + $0x8] sm:$0xf]
        %v2762 = vld [vmem:[%s2758 + $0xc] sm:$0x3]
        %v2763 = vshrl.u32 %v2694, 16
        %v2769 = vunpack.c.l.b16 %v2759
        %v2770 = vunpack.c.l.b16 %v2760
        %v2771 = vunpack.c.l.b16 %v2761
        %v2772 = vunpack.c.l.b16 %v2762
        %v2773 = vpack.c.b16 %v2770, %v2769
        %v2774 = vpack.c.b16 %v2772, %v2771
        %v2777 = vsel %vm1691, %v2763, 0
        %v2780 = vsel %vm1695, %v2774, 0
        %2782 = vmatprep.subr.bf16.mxu0 0
        %2783 = vmatpush1.bf16.msra.mxu0 %v2773
        %2784 = vmatprep.subr.bf16.mxu0 0
        %2785 = vmatpush1.bf16.msra.mxu0 %v2780
        %2786 = vmatprep.subr.bf16.mxu0 0
        %2787 = vmatpush1.bf16.msra.mxu0 0
        %2788 = vmatprep.subr.bf16.mxu0 0
        %2789 = vmatpush1.bf16.msra.mxu0 0
        %2790 = vmatprep.subr.bf16.mxu0 0
        %2791 = vmatpush1.bf16.msra.mxu0 0
        %2792 = vmatprep.subr.bf16.mxu0 0
        %2793 = vmatpush1.bf16.msra.mxu0 0
        %2794 = vmatprep.subr.bf16.mxu0 0
        %2795 = vmatpush1.bf16.msra.mxu0 0
        %2796 = vmatprep.subr.bf16.mxu0 0
        %2797 = vmatpush1.bf16.msra.mxu0 0
        %2798 = vmatprep.subr.bf16.mxu0 0
        %2799 = vmatpush1.bf16.msra.mxu0 0
        %2800 = vmatprep.subr.bf16.mxu0 0
        %2801 = vmatpush1.bf16.msra.mxu0 0
        %2802 = vmatprep.subr.bf16.mxu0 0
        %2803 = vmatpush1.bf16.msra.mxu0 0
        %2804 = vmatprep.subr.bf16.mxu0 0
        %2805 = vmatpush1.bf16.msra.mxu0 0
        %2806 = vmatprep.subr.bf16.mxu0 0
        %2807 = vmatpush1.bf16.msra.mxu0 0
        %2808 = vmatprep.subr.bf16.mxu0 0
        %2809 = vmatpush1.bf16.msra.mxu0 0
        %2810 = vmatprep.subr.bf16.mxu0 0
        %2811 = vmatpush1.bf16.msra.mxu0 0
        %2812 = vmatprep.subr.bf16.mxu0 0
        %2813 = vmatpush1.bf16.msra.mxu0 0
        %2814 = vmatprep.mubr.bf16.mxu0 0
        %2815 = vmatmul.mubr.bf16.gmra.mrb[0].mxu0 %v2777
        %v2816 = vpop.f32.mrb[0].mxu0
        %v2817 = vadd.f32 0.0, %v2816
        %v2818 = vpop.f32.mrb[0].mxu0
        %v2819 = vpop.f32.mrb[0].mxu0
        %v2820 = vpop.f32.mrb[0].mxu0
        %2821 = vdwg.mxu0
        %v2822 = vadd.f32 %v2757, %v2817
        %s2823 = scalar_lea.vmem %s5, 288
        %v2824 = vld [vmem:[%s2823] sm:$0xf]
        %v2825 = vld [vmem:[%s2823 + $0x4] sm:$0xf]
        %v2826 = vld [vmem:[%s2823 + $0x8] sm:$0xf]
        %v2827 = vld [vmem:[%s2823 + $0xc] sm:$0x3]
        %v2829 = vrot.slane %v2694, 1
        %v2834 = vunpack.c.l.b16 %v2824
        %v2835 = vunpack.c.l.b16 %v2825
        %v2836 = vunpack.c.l.b16 %v2826
        %v2837 = vunpack.c.l.b16 %v2827
        %v2838 = vpack.c.b16 %v2835, %v2834
        %v2839 = vpack.c.b16 %v2837, %v2836
        %v2842 = vsel %vm1691, %v2829, 0
        %v2845 = vsel %vm1695, %v2839, 0
        %2847 = vmatprep.subr.bf16.mxu0 0
        %2848 = vmatpush1.bf16.msra.mxu0 %v2838
        %2849 = vmatprep.subr.bf16.mxu0 0
        %2850 = vmatpush1.bf16.msra.mxu0 %v2845
        %2851 = vmatprep.subr.bf16.mxu0 0
        %2852 = vmatpush1.bf16.msra.mxu0 0
        %2853 = vmatprep.subr.bf16.mxu0 0
        %2854 = vmatpush1.bf16.msra.mxu0 0
        %2855 = vmatprep.subr.bf16.mxu0 0
        %2856 = vmatpush1.bf16.msra.mxu0 0
        %2857 = vmatprep.subr.bf16.mxu0 0
        %2858 = vmatpush1.bf16.msra.mxu0 0
        %2859 = vmatprep.subr.bf16.mxu0 0
        %2860 = vmatpush1.bf16.msra.mxu0 0
        %2861 = vmatprep.subr.bf16.mxu0 0
        %2862 = vmatpush1.bf16.msra.mxu0 0
        %2863 = vmatprep.subr.bf16.mxu0 0
        %2864 = vmatpush1.bf16.msra.mxu0 0
        %2865 = vmatprep.subr.bf16.mxu0 0
        %2866 = vmatpush1.bf16.msra.mxu0 0
        %2867 = vmatprep.subr.bf16.mxu0 0
        %2868 = vmatpush1.bf16.msra.mxu0 0
        %2869 = vmatprep.subr.bf16.mxu0 0
        %2870 = vmatpush1.bf16.msra.mxu0 0
        %2871 = vmatprep.subr.bf16.mxu0 0
        %2872 = vmatpush1.bf16.msra.mxu0 0
        %2873 = vmatprep.subr.bf16.mxu0 0
        %2874 = vmatpush1.bf16.msra.mxu0 0
        %2875 = vmatprep.subr.bf16.mxu0 0
        %2876 = vmatpush1.bf16.msra.mxu0 0
        %2877 = vmatprep.subr.bf16.mxu0 0
        %2878 = vmatpush1.bf16.msra.mxu0 0
        %2879 = vmatprep.mubr.bf16.mxu0 0
        %2880 = vmatmul.mubr.bf16.gmra.mrb[0].mxu0 %v2842
        %v2881 = vpop.f32.mrb[0].mxu0
        %v2882 = vadd.f32 0.0, %v2881
        %v2883 = vpop.f32.mrb[0].mxu0
        %v2884 = vpop.f32.mrb[0].mxu0
        %v2885 = vpop.f32.mrb[0].mxu0
        %2886 = vdwg.mxu0
        %v2887 = vadd.f32 %v2822, %v2882
        %s2888 = scalar_lea.vmem %s5, 304
        %v2889 = vld [vmem:[%s2888] sm:$0xf]
        %v2890 = vld [vmem:[%s2888 + $0x4] sm:$0xf]
        %v2891 = vld [vmem:[%s2888 + $0x8] sm:$0xf]
        %v2892 = vld [vmem:[%s2888 + $0xc] sm:$0x3]
        %v2893 = vrot.slane %v2763, 1
        %v2898 = vunpack.c.l.b16 %v2889
        %v2899 = vunpack.c.l.b16 %v2890
        %v2900 = vunpack.c.l.b16 %v2891
        %v2901 = vunpack.c.l.b16 %v2892
        %v2902 = vpack.c.b16 %v2899, %v2898
        %v2903 = vpack.c.b16 %v2901, %v2900
        %v2906 = vsel %vm1691, %v2893, 0
        %v2909 = vsel %vm1695, %v2903, 0
        %2911 = vmatprep.subr.bf16.mxu0 0
        %2912 = vmatpush1.bf16.msra.mxu0 %v2902
        %2913 = vmatprep.subr.bf16.mxu0 0
        %2914 = vmatpush1.bf16.msra.mxu0 %v2909
        %2915 = vmatprep.subr.bf16.mxu0 0
        %2916 = vmatpush1.bf16.msra.mxu0 0
        %2917 = vmatprep.subr.bf16.mxu0 0
        %2918 = vmatpush1.bf16.msra.mxu0 0
        %2919 = vmatprep.subr.bf16.mxu0 0
        %2920 = vmatpush1.bf16.msra.mxu0 0
        %2921 = vmatprep.subr.bf16.mxu0 0
        %2922 = vmatpush1.bf16.msra.mxu0 0
        %2923 = vmatprep.subr.bf16.mxu0 0
        %2924 = vmatpush1.bf16.msra.mxu0 0
        %2925 = vmatprep.subr.bf16.mxu0 0
        %2926 = vmatpush1.bf16.msra.mxu0 0
        %2927 = vmatprep.subr.bf16.mxu0 0
        %2928 = vmatpush1.bf16.msra.mxu0 0
        %2929 = vmatprep.subr.bf16.mxu0 0
        %2930 = vmatpush1.bf16.msra.mxu0 0
        %2931 = vmatprep.subr.bf16.mxu0 0
        %2932 = vmatpush1.bf16.msra.mxu0 0
        %2933 = vmatprep.subr.bf16.mxu0 0
        %2934 = vmatpush1.bf16.msra.mxu0 0
        %2935 = vmatprep.subr.bf16.mxu0 0
        %2936 = vmatpush1.bf16.msra.mxu0 0
        %2937 = vmatprep.subr.bf16.mxu0 0
        %2938 = vmatpush1.bf16.msra.mxu0 0
        %2939 = vmatprep.subr.bf16.mxu0 0
        %2940 = vmatpush1.bf16.msra.mxu0 0
        %2941 = vmatprep.subr.bf16.mxu0 0
        %2942 = vmatpush1.bf16.msra.mxu0 0
        %2943 = vmatprep.mubr.bf16.mxu0 0
        %2944 = vmatmul.mubr.bf16.gmra.mrb[0].mxu0 %v2906
        %v2945 = vpop.f32.mrb[0].mxu0
        %v2946 = vadd.f32 0.0, %v2945
        %v2947 = vpop.f32.mrb[0].mxu0
        %v2948 = vpop.f32.mrb[0].mxu0
        %v2949 = vpop.f32.mrb[0].mxu0
        %2950 = vdwg.mxu0
        %v2951 = vadd.f32 %v2887, %v2946
        %s2952 = scalar_lea.vmem %s5, 320
        %v2953 = vld [vmem:[%s2952] sm:$0xf]
        %v2954 = vld [vmem:[%s2952 + $0x4] sm:$0xf]
        %v2955 = vld [vmem:[%s2952 + $0x8] sm:$0xf]
        %v2956 = vld [vmem:[%s2952 + $0xc] sm:$0x3]
        %v2957 = vrot.slane %v2694, 2
        %v2962 = vunpack.c.l.b16 %v2953
        %v2963 = vunpack.c.l.b16 %v2954
        %v2964 = vunpack.c.l.b16 %v2955
        %v2965 = vunpack.c.l.b16 %v2956
        %v2966 = vpack.c.b16 %v2963, %v2962
        %v2967 = vpack.c.b16 %v2965, %v2964
        %v2970 = vsel %vm1691, %v2957, 0
        %v2973 = vsel %vm1695, %v2967, 0
        %2975 = vmatprep.subr.bf16.mxu0 0
        %2976 = vmatpush1.bf16.msra.mxu0 %v2966
        %2977 = vmatprep.subr.bf16.mxu0 0
        %2978 = vmatpush1.bf16.msra.mxu0 %v2973
        %2979 = vmatprep.subr.bf16.mxu0 0
        %2980 = vmatpush1.bf16.msra.mxu0 0
        %2981 = vmatprep.subr.bf16.mxu0 0
        %2982 = vmatpush1.bf16.msra.mxu0 0
        %2983 = vmatprep.subr.bf16.mxu0 0
        %2984 = vmatpush1.bf16.msra.mxu0 0
        %2985 = vmatprep.subr.bf16.mxu0 0
        %2986 = vmatpush1.bf16.msra.mxu0 0
        %2987 = vmatprep.subr.bf16.mxu0 0
        %2988 = vmatpush1.bf16.msra.mxu0 0
        %2989 = vmatprep.subr.bf16.mxu0 0
        %2990 = vmatpush1.bf16.msra.mxu0 0
        %2991 = vmatprep.subr.bf16.mxu0 0
        %2992 = vmatpush1.bf16.msra.mxu0 0
        %2993 = vmatprep.subr.bf16.mxu0 0
        %2994 = vmatpush1.bf16.msra.mxu0 0
        %2995 = vmatprep.subr.bf16.mxu0 0
        %2996 = vmatpush1.bf16.msra.mxu0 0
        %2997 = vmatprep.subr.bf16.mxu0 0
        %2998 = vmatpush1.bf16.msra.mxu0 0
        %2999 = vmatprep.subr.bf16.mxu0 0
        %3000 = vmatpush1.bf16.msra.mxu0 0
        %3001 = vmatprep.subr.bf16.mxu0 0
        %3002 = vmatpush1.bf16.msra.mxu0 0
        %3003 = vmatprep.subr.bf16.mxu0 0
        %3004 = vmatpush1.bf16.msra.mxu0 0
        %3005 = vmatprep.subr.bf16.mxu0 0
        %3006 = vmatpush1.bf16.msra.mxu0 0
        %3007 = vmatprep.mubr.bf16.mxu0 0
        %3008 = vmatmul.mubr.bf16.gmra.mrb[0].mxu0 %v2970
        %v3009 = vpop.f32.mrb[0].mxu0
        %v3010 = vadd.f32 0.0, %v3009
        %v3011 = vpop.f32.mrb[0].mxu0
        %v3012 = vpop.f32.mrb[0].mxu0
        %v3013 = vpop.f32.mrb[0].mxu0
        %3014 = vdwg.mxu0
        %v3015 = vadd.f32 %v2951, %v3010
        %s3016 = scalar_lea.vmem %s5, 336
        %v3017 = vld [vmem:[%s3016] sm:$0xf]
        %v3018 = vld [vmem:[%s3016 + $0x4] sm:$0xf]
        %v3019 = vld [vmem:[%s3016 + $0x8] sm:$0xf]
        %v3020 = vld [vmem:[%s3016 + $0xc] sm:$0x3]
        %v3021 = vrot.slane %v2763, 2
        %v3026 = vunpack.c.l.b16 %v3017
        %v3027 = vunpack.c.l.b16 %v3018
        %v3028 = vunpack.c.l.b16 %v3019
        %v3029 = vunpack.c.l.b16 %v3020
        %v3030 = vpack.c.b16 %v3027, %v3026
        %v3031 = vpack.c.b16 %v3029, %v3028
        %v3034 = vsel %vm1691, %v3021, 0
        %v3037 = vsel %vm1695, %v3031, 0
        %3039 = vmatprep.subr.bf16.mxu0 0
        %3040 = vmatpush1.bf16.msra.mxu0 %v3030
        %3041 = vmatprep.subr.bf16.mxu0 0
        %3042 = vmatpush1.bf16.msra.mxu0 %v3037
        %3043 = vmatprep.subr.bf16.mxu0 0
        %3044 = vmatpush1.bf16.msra.mxu0 0
        %3045 = vmatprep.subr.bf16.mxu0 0
        %3046 = vmatpush1.bf16.msra.mxu0 0
        %3047 = vmatprep.subr.bf16.mxu0 0
        %3048 = vmatpush1.bf16.msra.mxu0 0
        %3049 = vmatprep.subr.bf16.mxu0 0
        %3050 = vmatpush1.bf16.msra.mxu0 0
        %3051 = vmatprep.subr.bf16.mxu0 0
        %3052 = vmatpush1.bf16.msra.mxu0 0
        %3053 = vmatprep.subr.bf16.mxu0 0
        %3054 = vmatpush1.bf16.msra.mxu0 0
        %3055 = vmatprep.subr.bf16.mxu0 0
        %3056 = vmatpush1.bf16.msra.mxu0 0
        %3057 = vmatprep.subr.bf16.mxu0 0
        %3058 = vmatpush1.bf16.msra.mxu0 0
        %3059 = vmatprep.subr.bf16.mxu0 0
        %3060 = vmatpush1.bf16.msra.mxu0 0
        %3061 = vmatprep.subr.bf16.mxu0 0
        %3062 = vmatpush1.bf16.msra.mxu0 0
        %3063 = vmatprep.subr.bf16.mxu0 0
        %3064 = vmatpush1.bf16.msra.mxu0 0
        %3065 = vmatprep.subr.bf16.mxu0 0
        %3066 = vmatpush1.bf16.msra.mxu0 0
        %3067 = vmatprep.subr.bf16.mxu0 0
        %3068 = vmatpush1.bf16.msra.mxu0 0
        %3069 = vmatprep.subr.bf16.mxu0 0
        %3070 = vmatpush1.bf16.msra.mxu0 0
        %3071 = vmatprep.mubr.bf16.mxu0 0
        %3072 = vmatmul.mubr.bf16.gmra.mrb[0].mxu0 %v3034
        %v3073 = vpop.f32.mrb[0].mxu0
        %v3074 = vadd.f32 0.0, %v3073
        %v3075 = vpop.f32.mrb[0].mxu0
        %v3076 = vpop.f32.mrb[0].mxu0
        %v3077 = vpop.f32.mrb[0].mxu0
        %3078 = vdwg.mxu0
        %v3079 = vadd.f32 %v3015, %v3074
        %s3080 = scalar_lea.vmem %s5, 352
        %v3081 = vld [vmem:[%s3080] sm:$0xf]
        %v3082 = vld [vmem:[%s3080 + $0x4] sm:$0xf]
        %v3083 = vld [vmem:[%s3080 + $0x8] sm:$0xf]
        %v3084 = vld [vmem:[%s3080 + $0xc] sm:$0x3]
        %v3085 = vrot.slane %v2694, 3
        %v3090 = vunpack.c.l.b16 %v3081
        %v3091 = vunpack.c.l.b16 %v3082
        %v3092 = vunpack.c.l.b16 %v3083
        %v3093 = vunpack.c.l.b16 %v3084
        %v3094 = vpack.c.b16 %v3091, %v3090
        %v3095 = vpack.c.b16 %v3093, %v3092
        %v3098 = vsel %vm1691, %v3085, 0
        %v3101 = vsel %vm1695, %v3095, 0
        %3103 = vmatprep.subr.bf16.mxu0 0
        %3104 = vmatpush1.bf16.msra.mxu0 %v3094
        %3105 = vmatprep.subr.bf16.mxu0 0
        %3106 = vmatpush1.bf16.msra.mxu0 %v3101
        %3107 = vmatprep.subr.bf16.mxu0 0
        %3108 = vmatpush1.bf16.msra.mxu0 0
        %3109 = vmatprep.subr.bf16.mxu0 0
        %3110 = vmatpush1.bf16.msra.mxu0 0
        %3111 = vmatprep.subr.bf16.mxu0 0
        %3112 = vmatpush1.bf16.msra.mxu0 0
        %3113 = vmatprep.subr.bf16.mxu0 0
        %3114 = vmatpush1.bf16.msra.mxu0 0
        %3115 = vmatprep.subr.bf16.mxu0 0
        %3116 = vmatpush1.bf16.msra.mxu0 0
        %3117 = vmatprep.subr.bf16.mxu0 0
        %3118 = vmatpush1.bf16.msra.mxu0 0
        %3119 = vmatprep.subr.bf16.mxu0 0
        %3120 = vmatpush1.bf16.msra.mxu0 0
        %3121 = vmatprep.subr.bf16.mxu0 0
        %3122 = vmatpush1.bf16.msra.mxu0 0
        %3123 = vmatprep.subr.bf16.mxu0 0
        %3124 = vmatpush1.bf16.msra.mxu0 0
        %3125 = vmatprep.subr.bf16.mxu0 0
        %3126 = vmatpush1.bf16.msra.mxu0 0
        %3127 = vmatprep.subr.bf16.mxu0 0
        %3128 = vmatpush1.bf16.msra.mxu0 0
        %3129 = vmatprep.subr.bf16.mxu0 0
        %3130 = vmatpush1.bf16.msra.mxu0 0
        %3131 = vmatprep.subr.bf16.mxu0 0
        %3132 = vmatpush1.bf16.msra.mxu0 0
        %3133 = vmatprep.subr.bf16.mxu0 0
        %3134 = vmatpush1.bf16.msra.mxu0 0
        %3135 = vmatprep.mubr.bf16.mxu0 0
        %3136 = vmatmul.mubr.bf16.gmra.mrb[0].mxu0 %v3098
        %v3137 = vpop.f32.mrb[0].mxu0
        %v3138 = vadd.f32 0.0, %v3137
        %v3139 = vpop.f32.mrb[0].mxu0
        %v3140 = vpop.f32.mrb[0].mxu0
        %v3141 = vpop.f32.mrb[0].mxu0
        %3142 = vdwg.mxu0
        %v3143 = vadd.f32 %v3079, %v3138
        %s3144 = scalar_lea.vmem %s5, 368
        %v3145 = vld [vmem:[%s3144] sm:$0xf]
        %v3146 = vld [vmem:[%s3144 + $0x4] sm:$0xf]
        %v3147 = vld [vmem:[%s3144 + $0x8] sm:$0xf]
        %v3148 = vld [vmem:[%s3144 + $0xc] sm:$0x3]
        %v3149 = vrot.slane %v2763, 3
        %v3154 = vunpack.c.l.b16 %v3145
        %v3155 = vunpack.c.l.b16 %v3146
        %v3156 = vunpack.c.l.b16 %v3147
        %v3157 = vunpack.c.l.b16 %v3148
        %v3158 = vpack.c.b16 %v3155, %v3154
        %v3159 = vpack.c.b16 %v3157, %v3156
        %v3162 = vsel %vm1691, %v3149, 0
        %v3165 = vsel %vm1695, %v3159, 0
        %3167 = vmatprep.subr.bf16.mxu0 0
        %3168 = vmatpush1.bf16.msra.mxu0 %v3158
        %3169 = vmatprep.subr.bf16.mxu0 0
        %3170 = vmatpush1.bf16.msra.mxu0 %v3165
        %3171 = vmatprep.subr.bf16.mxu0 0
        %3172 = vmatpush1.bf16.msra.mxu0 0
        %3173 = vmatprep.subr.bf16.mxu0 0
        %3174 = vmatpush1.bf16.msra.mxu0 0
        %3175 = vmatprep.subr.bf16.mxu0 0
        %3176 = vmatpush1.bf16.msra.mxu0 0
        %3177 = vmatprep.subr.bf16.mxu0 0
        %3178 = vmatpush1.bf16.msra.mxu0 0
        %3179 = vmatprep.subr.bf16.mxu0 0
        %3180 = vmatpush1.bf16.msra.mxu0 0
        %3181 = vmatprep.subr.bf16.mxu0 0
        %3182 = vmatpush1.bf16.msra.mxu0 0
        %3183 = vmatprep.subr.bf16.mxu0 0
        %3184 = vmatpush1.bf16.msra.mxu0 0
        %3185 = vmatprep.subr.bf16.mxu0 0
        %3186 = vmatpush1.bf16.msra.mxu0 0
        %3187 = vmatprep.subr.bf16.mxu0 0
        %3188 = vmatpush1.bf16.msra.mxu0 0
        %3189 = vmatprep.subr.bf16.mxu0 0
        %3190 = vmatpush1.bf16.msra.mxu0 0
        %3191 = vmatprep.subr.bf16.mxu0 0
        %3192 = vmatpush1.bf16.msra.mxu0 0
        %3193 = vmatprep.subr.bf16.mxu0 0
        %3194 = vmatpush1.bf16.msra.mxu0 0
        %3195 = vmatprep.subr.bf16.mxu0 0
        %3196 = vmatpush1.bf16.msra.mxu0 0
        %3197 = vmatprep.subr.bf16.mxu0 0
        %3198 = vmatpush1.bf16.msra.mxu0 0
        %3199 = vmatprep.mubr.bf16.mxu0 0
        %3200 = vmatmul.mubr.bf16.gmra.mrb[0].mxu0 %v3162
        %v3201 = vpop.f32.mrb[0].mxu0
        %v3202 = vadd.f32 0.0, %v3201
        %v3203 = vpop.f32.mrb[0].mxu0
        %v3204 = vpop.f32.mrb[0].mxu0
        %v3205 = vpop.f32.mrb[0].mxu0
        %3206 = vdwg.mxu0
        %v3207 = vadd.f32 %v3143, %v3202
        %v3208 = vpack.c.bf16 %v1666, %v1666
        %s3209 = scalar_lea.vmem %s5, 384
        %v3210 = vld [vmem:[%s3209] sm:$0xf]
        %v3211 = vld [vmem:[%s3209 + $0x4] sm:$0xf]
        %v3212 = vld [vmem:[%s3209 + $0x8] sm:$0xf]
        %v3213 = vld [vmem:[%s3209 + $0xc] sm:$0x3]
        %v3218 = vunpack.c.l.b16 %v3210
        %v3219 = vunpack.c.l.b16 %v3211
        %v3220 = vunpack.c.l.b16 %v3212
        %v3221 = vunpack.c.l.b16 %v3213
        %v3222 = vpack.c.b16 %v3219, %v3218
        %v3223 = vpack.c.b16 %v3221, %v3220
        %v3226 = vsel %vm1691, %v3208, 0
        %v3229 = vsel %vm1695, %v3223, 0
        %3231 = vmatprep.subr.bf16.mxu0 0
        %3232 = vmatpush1.bf16.msra.mxu0 %v3222
        %3233 = vmatprep.subr.bf16.mxu0 0
        %3234 = vmatpush1.bf16.msra.mxu0 %v3229
        %3235 = vmatprep.subr.bf16.mxu0 0
        %3236 = vmatpush1.bf16.msra.mxu0 0
        %3237 = vmatprep.subr.bf16.mxu0 0
        %3238 = vmatpush1.bf16.msra.mxu0 0
        %3239 = vmatprep.subr.bf16.mxu0 0
        %3240 = vmatpush1.bf16.msra.mxu0 0
        %3241 = vmatprep.subr.bf16.mxu0 0
        %3242 = vmatpush1.bf16.msra.mxu0 0
        %3243 = vmatprep.subr.bf16.mxu0 0
        %3244 = vmatpush1.bf16.msra.mxu0 0
        %3245 = vmatprep.subr.bf16.mxu0 0
        %3246 = vmatpush1.bf16.msra.mxu0 0
        %3247 = vmatprep.subr.bf16.mxu0 0
        %3248 = vmatpush1.bf16.msra.mxu0 0
        %3249 = vmatprep.subr.bf16.mxu0 0
        %3250 = vmatpush1.bf16.msra.mxu0 0
        %3251 = vmatprep.subr.bf16.mxu0 0
        %3252 = vmatpush1.bf16.msra.mxu0 0
        %3253 = vmatprep.subr.bf16.mxu0 0
        %3254 = vmatpush1.bf16.msra.mxu0 0
        %3255 = vmatprep.subr.bf16.mxu0 0
        %3256 = vmatpush1.bf16.msra.mxu0 0
        %3257 = vmatprep.subr.bf16.mxu0 0
        %3258 = vmatpush1.bf16.msra.mxu0 0
        %3259 = vmatprep.subr.bf16.mxu0 0
        %3260 = vmatpush1.bf16.msra.mxu0 0
        %3261 = vmatprep.subr.bf16.mxu0 0
        %3262 = vmatpush1.bf16.msra.mxu0 0
        %3263 = vmatprep.mubr.bf16.mxu0 0
        %3264 = vmatmul.mubr.bf16.gmra.mrb[0].mxu0 %v3226
        %v3265 = vpop.f32.mrb[0].mxu0
        %v3266 = vadd.f32 0.0, %v3265
        %v3267 = vpop.f32.mrb[0].mxu0
        %v3268 = vpop.f32.mrb[0].mxu0
        %v3269 = vpop.f32.mrb[0].mxu0
        %3270 = vdwg.mxu0
        %v3271 = vadd.f32 %v3207, %v3266
        %s3272 = scalar_lea.vmem %s5, 400
        %v3273 = vld [vmem:[%s3272] sm:$0xf]
        %v3274 = vld [vmem:[%s3272 + $0x4] sm:$0xf]
        %v3275 = vld [vmem:[%s3272 + $0x8] sm:$0xf]
        %v3276 = vld [vmem:[%s3272 + $0xc] sm:$0x3]
        %v3277 = vshrl.u32 %v3208, 16
        %v3283 = vunpack.c.l.b16 %v3273
        %v3284 = vunpack.c.l.b16 %v3274
        %v3285 = vunpack.c.l.b16 %v3275
        %v3286 = vunpack.c.l.b16 %v3276
        %v3287 = vpack.c.b16 %v3284, %v3283
        %v3288 = vpack.c.b16 %v3286, %v3285
        %v3291 = vsel %vm1691, %v3277, 0
        %v3294 = vsel %vm1695, %v3288, 0
        %3296 = vmatprep.subr.bf16.mxu0 0
        %3297 = vmatpush1.bf16.msra.mxu0 %v3287
        %3298 = vmatprep.subr.bf16.mxu0 0
        %3299 = vmatpush1.bf16.msra.mxu0 %v3294
        %3300 = vmatprep.subr.bf16.mxu0 0
        %3301 = vmatpush1.bf16.msra.mxu0 0
        %3302 = vmatprep.subr.bf16.mxu0 0
        %3303 = vmatpush1.bf16.msra.mxu0 0
        %3304 = vmatprep.subr.bf16.mxu0 0
        %3305 = vmatpush1.bf16.msra.mxu0 0
        %3306 = vmatprep.subr.bf16.mxu0 0
        %3307 = vmatpush1.bf16.msra.mxu0 0
        %3308 = vmatprep.subr.bf16.mxu0 0
        %3309 = vmatpush1.bf16.msra.mxu0 0
        %3310 = vmatprep.subr.bf16.mxu0 0
        %3311 = vmatpush1.bf16.msra.mxu0 0
        %3312 = vmatprep.subr.bf16.mxu0 0
        %3313 = vmatpush1.bf16.msra.mxu0 0
        %3314 = vmatprep.subr.bf16.mxu0 0
        %3315 = vmatpush1.bf16.msra.mxu0 0
        %3316 = vmatprep.subr.bf16.mxu0 0
        %3317 = vmatpush1.bf16.msra.mxu0 0
        %3318 = vmatprep.subr.bf16.mxu0 0
        %3319 = vmatpush1.bf16.msra.mxu0 0
        %3320 = vmatprep.subr.bf16.mxu0 0
        %3321 = vmatpush1.bf16.msra.mxu0 0
        %3322 = vmatprep.subr.bf16.mxu0 0
        %3323 = vmatpush1.bf16.msra.mxu0 0
        %3324 = vmatprep.subr.bf16.mxu0 0
        %3325 = vmatpush1.bf16.msra.mxu0 0
        %3326 = vmatprep.subr.bf16.mxu0 0
        %3327 = vmatpush1.bf16.msra.mxu0 0
        %3328 = vmatprep.mubr.bf16.mxu0 0
        %3329 = vmatmul.mubr.bf16.gmra.mrb[0].mxu0 %v3291
        %v3330 = vpop.f32.mrb[0].mxu0
        %v3331 = vadd.f32 0.0, %v3330
        %v3332 = vpop.f32.mrb[0].mxu0
        %v3333 = vpop.f32.mrb[0].mxu0
        %v3334 = vpop.f32.mrb[0].mxu0
        %3335 = vdwg.mxu0
        %v3336 = vadd.f32 %v3271, %v3331
        %s3337 = scalar_lea.vmem %s5, 416
        %v3338 = vld [vmem:[%s3337] sm:$0xf]
        %v3339 = vld [vmem:[%s3337 + $0x4] sm:$0xf]
        %v3340 = vld [vmem:[%s3337 + $0x8] sm:$0xf]
        %v3341 = vld [vmem:[%s3337 + $0xc] sm:$0x3]
        %v3343 = vrot.slane %v3208, 1
        %v3348 = vunpack.c.l.b16 %v3338
        %v3349 = vunpack.c.l.b16 %v3339
        %v3350 = vunpack.c.l.b16 %v3340
        %v3351 = vunpack.c.l.b16 %v3341
        %v3352 = vpack.c.b16 %v3349, %v3348
        %v3353 = vpack.c.b16 %v3351, %v3350
        %v3356 = vsel %vm1691, %v3343, 0
        %v3359 = vsel %vm1695, %v3353, 0
        %3361 = vmatprep.subr.bf16.mxu0 0
        %3362 = vmatpush1.bf16.msra.mxu0 %v3352
        %3363 = vmatprep.subr.bf16.mxu0 0
        %3364 = vmatpush1.bf16.msra.mxu0 %v3359
        %3365 = vmatprep.subr.bf16.mxu0 0
        %3366 = vmatpush1.bf16.msra.mxu0 0
        %3367 = vmatprep.subr.bf16.mxu0 0
        %3368 = vmatpush1.bf16.msra.mxu0 0
        %3369 = vmatprep.subr.bf16.mxu0 0
        %3370 = vmatpush1.bf16.msra.mxu0 0
        %3371 = vmatprep.subr.bf16.mxu0 0
        %3372 = vmatpush1.bf16.msra.mxu0 0
        %3373 = vmatprep.subr.bf16.mxu0 0
        %3374 = vmatpush1.bf16.msra.mxu0 0
        %3375 = vmatprep.subr.bf16.mxu0 0
        %3376 = vmatpush1.bf16.msra.mxu0 0
        %3377 = vmatprep.subr.bf16.mxu0 0
        %3378 = vmatpush1.bf16.msra.mxu0 0
        %3379 = vmatprep.subr.bf16.mxu0 0
        %3380 = vmatpush1.bf16.msra.mxu0 0
        %3381 = vmatprep.subr.bf16.mxu0 0
        %3382 = vmatpush1.bf16.msra.mxu0 0
        %3383 = vmatprep.subr.bf16.mxu0 0
        %3384 = vmatpush1.bf16.msra.mxu0 0
        %3385 = vmatprep.subr.bf16.mxu0 0
        %3386 = vmatpush1.bf16.msra.mxu0 0
        %3387 = vmatprep.subr.bf16.mxu0 0
        %3388 = vmatpush1.bf16.msra.mxu0 0
        %3389 = vmatprep.subr.bf16.mxu0 0
        %3390 = vmatpush1.bf16.msra.mxu0 0
        %3391 = vmatprep.subr.bf16.mxu0 0
        %3392 = vmatpush1.bf16.msra.mxu0 0
        %3393 = vmatprep.mubr.bf16.mxu0 0
        %3394 = vmatmul.mubr.bf16.gmra.mrb[0].mxu0 %v3356
        %v3395 = vpop.f32.mrb[0].mxu0
        %v3396 = vadd.f32 0.0, %v3395
        %v3397 = vpop.f32.mrb[0].mxu0
        %v3398 = vpop.f32.mrb[0].mxu0
        %v3399 = vpop.f32.mrb[0].mxu0
        %3400 = vdwg.mxu0
        %v3401 = vadd.f32 %v3336, %v3396
        %s3402 = scalar_lea.vmem %s5, 432
        %v3403 = vld [vmem:[%s3402] sm:$0xf]
        %v3404 = vld [vmem:[%s3402 + $0x4] sm:$0xf]
        %v3405 = vld [vmem:[%s3402 + $0x8] sm:$0xf]
        %v3406 = vld [vmem:[%s3402 + $0xc] sm:$0x3]
        %v3407 = vrot.slane %v3277, 1
        %v3412 = vunpack.c.l.b16 %v3403
        %v3413 = vunpack.c.l.b16 %v3404
        %v3414 = vunpack.c.l.b16 %v3405
        %v3415 = vunpack.c.l.b16 %v3406
        %v3416 = vpack.c.b16 %v3413, %v3412
        %v3417 = vpack.c.b16 %v3415, %v3414
        %v3420 = vsel %vm1691, %v3407, 0
        %v3423 = vsel %vm1695, %v3417, 0
        %3425 = vmatprep.subr.bf16.mxu0 0
        %3426 = vmatpush1.bf16.msra.mxu0 %v3416
        %3427 = vmatprep.subr.bf16.mxu0 0
        %3428 = vmatpush1.bf16.msra.mxu0 %v3423
        %3429 = vmatprep.subr.bf16.mxu0 0
        %3430 = vmatpush1.bf16.msra.mxu0 0
        %3431 = vmatprep.subr.bf16.mxu0 0
        %3432 = vmatpush1.bf16.msra.mxu0 0
        %3433 = vmatprep.subr.bf16.mxu0 0
        %3434 = vmatpush1.bf16.msra.mxu0 0
        %3435 = vmatprep.subr.bf16.mxu0 0
        %3436 = vmatpush1.bf16.msra.mxu0 0
        %3437 = vmatprep.subr.bf16.mxu0 0
        %3438 = vmatpush1.bf16.msra.mxu0 0
        %3439 = vmatprep.subr.bf16.mxu0 0
        %3440 = vmatpush1.bf16.msra.mxu0 0
        %3441 = vmatprep.subr.bf16.mxu0 0
        %3442 = vmatpush1.bf16.msra.mxu0 0
        %3443 = vmatprep.subr.bf16.mxu0 0
        %3444 = vmatpush1.bf16.msra.mxu0 0
        %3445 = vmatprep.subr.bf16.mxu0 0
        %3446 = vmatpush1.bf16.msra.mxu0 0
        %3447 = vmatprep.subr.bf16.mxu0 0
        %3448 = vmatpush1.bf16.msra.mxu0 0
        %3449 = vmatprep.subr.bf16.mxu0 0
        %3450 = vmatpush1.bf16.msra.mxu0 0
        %3451 = vmatprep.subr.bf16.mxu0 0
        %3452 = vmatpush1.bf16.msra.mxu0 0
        %3453 = vmatprep.subr.bf16.mxu0 0
        %3454 = vmatpush1.bf16.msra.mxu0 0
        %3455 = vmatprep.subr.bf16.mxu0 0
        %3456 = vmatpush1.bf16.msra.mxu0 0
        %3457 = vmatprep.mubr.bf16.mxu0 0
        %3458 = vmatmul.mubr.bf16.gmra.mrb[0].mxu0 %v3420
        %v3459 = vpop.f32.mrb[0].mxu0
        %v3460 = vadd.f32 0.0, %v3459
        %v3461 = vpop.f32.mrb[0].mxu0
        %v3462 = vpop.f32.mrb[0].mxu0
        %v3463 = vpop.f32.mrb[0].mxu0
        %3464 = vdwg.mxu0
        %v3465 = vadd.f32 %v3401, %v3460
        %v3466 = vld [vmem:[%s6] sm:$0x1]
        %v3467 = vadd.f32 %v3465, %v3466
        %v3468 = vmax.f32 %v3467, 0.0
        %v3469 = vpack.c.bf16 %v3468, %v3468
        %v3470 = vld [vmem:[%s7] sm:$0xf]
        %v3471 = vld [vmem:[%s7 + $0x4] sm:$0xf]
        %v3472 = vld [vmem:[%s7 + $0x8] sm:$0xf]
        %v3473 = vld [vmem:[%s7 + $0xc] sm:$0xf]
        %v3474 = vld [vmem:[%s7 + $0x10] sm:$0xf]
        %v3475 = vld [vmem:[%s7 + $0x14] sm:$0xf]
        %v3476 = vld [vmem:[%s7 + $0x18] sm:$0xf]
        %v3477 = vld [vmem:[%s7 + $0x1c] sm:$0xf]
        %v3478 = vld [vmem:[%s8] sm:$0x1]
        %v3487 = vunpack.c.l.b16 %v3470
        %v3488 = vunpack.c.l.b16 %v3471
        %v3489 = vunpack.c.l.b16 %v3472
        %v3490 = vunpack.c.l.b16 %v3473
        %v3491 = vunpack.c.l.b16 %v3474
        %v3492 = vunpack.c.l.b16 %v3475
        %v3493 = vunpack.c.l.b16 %v3476
        %v3494 = vunpack.c.l.b16 %v3477
        %v3495 = vpack.c.b16 %v3488, %v3487
        %v3496 = vpack.c.b16 %v3490, %v3489
        %v3497 = vpack.c.b16 %v3492, %v3491
        %v3498 = vpack.c.b16 %v3494, %v3493
        %vm3503 = vcmask 523264
        %v3505 = vsel %vm3503, %v3469, 0
        %3507 = vmatprep.subr.bf16.mxu0 0
        %3508 = vmatpush1.bf16.msra.mxu0 %v3495
        %3509 = vmatprep.subr.bf16.mxu0 0
        %3510 = vmatpush1.bf16.msra.mxu0 %v3496
        %3511 = vmatprep.subr.bf16.mxu0 0
        %3512 = vmatpush1.bf16.msra.mxu0 %v3497
        %3513 = vmatprep.subr.bf16.mxu0 0
        %3514 = vmatpush1.bf16.msra.mxu0 %v3498
        %3515 = vmatprep.subr.bf16.mxu0 0
        %3516 = vmatpush1.bf16.msra.mxu0 0
        %3517 = vmatprep.subr.bf16.mxu0 0
        %3518 = vmatpush1.bf16.msra.mxu0 0
        %3519 = vmatprep.subr.bf16.mxu0 0
        %3520 = vmatpush1.bf16.msra.mxu0 0
        %3521 = vmatprep.subr.bf16.mxu0 0
        %3522 = vmatpush1.bf16.msra.mxu0 0
        %3523 = vmatprep.subr.bf16.mxu0 0
        %3524 = vmatpush1.bf16.msra.mxu0 0
        %3525 = vmatprep.subr.bf16.mxu0 0
        %3526 = vmatpush1.bf16.msra.mxu0 0
        %3527 = vmatprep.subr.bf16.mxu0 0
        %3528 = vmatpush1.bf16.msra.mxu0 0
        %3529 = vmatprep.subr.bf16.mxu0 0
        %3530 = vmatpush1.bf16.msra.mxu0 0
        %3531 = vmatprep.subr.bf16.mxu0 0
        %3532 = vmatpush1.bf16.msra.mxu0 0
        %3533 = vmatprep.subr.bf16.mxu0 0
        %3534 = vmatpush1.bf16.msra.mxu0 0
        %3535 = vmatprep.subr.bf16.mxu0 0
        %3536 = vmatpush1.bf16.msra.mxu0 0
        %3537 = vmatprep.subr.bf16.mxu0 0
        %3538 = vmatpush1.bf16.msra.mxu0 0
        %3539 = vmatprep.mubr.bf16.mxu0 0
        %3540 = vmatmul.mubr.bf16.gmra.mrb[0].mxu0 %v3505
        %v3541 = vpop.f32.mrb[0].mxu0
        %v3542 = vadd.f32 %v3478, %v3541
        %v3543 = vpop.f32.mrb[0].mxu0
        %v3544 = vpop.f32.mrb[0].mxu0
        %v3545 = vpop.f32.mrb[0].mxu0
        %3546 = vdwg.mxu0
        %vm3547 = vcmask 73728
        %3548 = vst.msk [vmem:[%s325] sm:$0x1] %vm3547, %v3542
        %s3549 = sand.u32 %s226, 1
        %s3550 = scalar_lea.sflag [#allocation4], %s3549
        %s3551 = sand.u32 %s226, 1
        %s3552 = scalar_lea.vmem [#allocation3], %s3551
        // Predicated region
        $region57: #{cnn2_forward.1} parent=55 // pred_check
          %p3553 = pneg %p236
        $region58: #{cnn2_forward.1} parent=55 // pred_check_branch
          %3555 = sbr.rel (%p3553) target = $region60
        $region59: #{cnn2_forward.1} parent=55 // pred_region
          %s3557 = ssub.s32 16, 16
          %3558 = vsyncadd %s3550, %s3557
          %s3559 = smul.addr %s24, 16
          %s3560 = scalar_lea.hbm %s9, %s3559
          %s3562 = sshll.u32 %s3552, 4
          %s3563 = int_to_ptr.vmem [resolvable:$true] %s3562
          %3565 = dma.vmem_to_hbm [thread:$0]  %s3563, 16, %s3560, %s3550
        $region60: #{cnn2_forward.1} parent=55 // pred_fallthru
          _
      $region56: #{cnn2_forward.1} parent=5 // pred_fallthru
        _
      %p3566 = scmp.le.s32.totalorder 2, %s19
      // Predicated region
      $region61: #{cnn2_forward.1} parent=5 // pred_check
        %p3567 = pneg %p3566
      $region62: #{cnn2_forward.1} parent=5 // pred_check_branch
        %3569 = sbr.rel (%p3567) target = $region64
      $region63: #{cnn2_forward.1} parent=5 // pred_region
        %s3570 = ssub.s32 %s19, 2
        // Predicated region
        $region65: #{cnn2_forward.1} parent=63 // pred_check
          %p3571 = pneg %p242
        $region66: #{cnn2_forward.1} parent=63 // pred_check_branch
          %3573 = sbr.rel (%p3571) target = $region68
        $region67: #{cnn2_forward.1} parent=63 // pred_region
          %s3574 = sand.u32 %s227, 1
          %s3575 = scalar_lea.sflag [#allocation4], %s3574
          %s3576 = sand.u32 %s227, 1
          %s3577 = scalar_lea.vmem [#allocation3], %s3576
          %3578 = dma.done %s3575, 16
        $region68: #{cnn2_forward.1} parent=63 // pred_fallthru
          _
      $region64: #{cnn2_forward.1} parent=5 // pred_fallthru
        _
    $region6: #{cnn2_forward.1} parent=1 // loop_footer
      %s23 = sadd.s32 1, %s19
    $region7: #{cnn2_forward.1} parent=1 // loop_footer_branch
      %18 = sbr.rel target = $region3
    $region8: #{cnn2_forward.1} parent=1 // loop_exit
      _
    %3579 = vsyncpa [#allocation4], 1
    %s3580 = scalar_lea.sflag [#allocation4], 1
    %3581 = vsyncpa %s3580, 1

</llo_original>
